<compile_context>
chip_gen: v7x
topology: tpu7x:2x2x1
jax: 0.10.0
libtpu: 0.0.40
codegen_flags: <defaults>
</compile_context>

<pallas_src>
import jax
import jax.numpy as jnp
from jax.experimental import pallas as pl
from jax.experimental.pallas import tpu as pltpu

# ---- model config (args) ----
NUM_LAYERS   = 3
INPUT_CH     = 16      # args.input_channel
EMBED_DIM    = 32      # args.embed_dim
HIDDEN1      = 8       # args.hidden_channel1
HIDDEN2      = 8       # args.hidden_channel2
NUM_CLASSES  = 8       # args.mlp[-1]
HALF         = EMBED_DIM // 2
USE_RESIDUAL = True
DROPOUT_P    = 0.0     # F.dropout with p=0.0 is the identity

EPS = 1e-5
NEG_SLOPE = 0.01       # torch.nn.functional.leaky_relu default

# ---- flat weight-slab layout (bf16), one block of LYR_ROWS rows per layer ----
SLAB_W   = HIDDEN1 + HALF          # 24 lanes (also == HALF + NUM_CLASSES)
OFF_WCAT = 0                       # [x@W_red1 | x@W_gcn] fused weight, d_in rows
OFF_W2   = 32                      # reduction2 weight, H1 rows
OFF_WP   = 48                      # FOGConv proj weight (flattened), H1*H2 rows
OFF_WJK  = 112                     # per-layer SumJK('p') classifier, EMBED_DIM rows
LYR_ROWS = 144                     # 16-aligned stride (bf16 sublane tile)
BIAS_ROWS = 8                      # f32 sublane tile per layer in the bias slab


def _bn_train(h):
    # BatchNorm1d, training-mode batch stats, gamma=1, beta=0. One-pass moments:
    # the two axis-0 reductions are independent -> co-issue on the XLU units.
    m = jnp.mean(h, axis=0, keepdims=True)
    v = jnp.maximum(jnp.mean(h * h, axis=0, keepdims=True) - m * m, 0.0)
    return (h - m) * jax.lax.rsqrt(v + EPS)


def _leaky_relu(z):
    return jnp.where(z >= 0, z, NEG_SLOPE * z)


def make_fused_kernel(N, L, H1, H2, half, C):
    """Fused: 3x (FOGConv || GCNConv -> [BN+ReLU] -> residual) -> SumJK('p') -> log_softmax."""

    def kernel(x_ref, adjcat_ref, w_ref, b_ref, out_ref):
        adjcat = adjcat_ref[...]                  # (N, 2N) bf16 = [A | A_norm]
        xb     = x_ref[...]                       # (N, 16) bf16 layer-0 input
        prev   = None                             # f32 residual carry
        acc    = jnp.zeros((N, C), jnp.float32)   # SumJK('p') accumulator (vregs)

        # zero blocks of the block-diagonal adjacency RHS, built once, reused.
        ztop = jnp.zeros((N, half), jnp.bfloat16)
        zbot = jnp.zeros((N, H2), jnp.bfloat16)

        for l in range(L):                        # static unroll (L = 3)
            base = l * LYR_ROWS
            d_in = INPUT_CH if l == 0 else EMBED_DIM
            # static, 16-row-aligned slices of the flat weight slab (bf16)
            wcat = w_ref[base + OFF_WCAT: base + OFF_WCAT + d_in, :]        # (d_in, H1+half)
            w2   = w_ref[base + OFF_W2:   base + OFF_W2 + H1, :H2]          # (H1, H2)
            wp   = w_ref[base + OFF_WP:   base + OFF_WP + H1 * H2, :half]   # (H1*H2, half)
            wjk  = w_ref[base + OFF_WJK:  base + OFF_WJK + EMBED_DIM, :C]   # (D, C)
            brow = b_ref[l * BIAS_ROWS: l * BIAS_ROWS + 1, :]               # (1, half+C) f32
            bg, bjk = brow[:, :half], brow[:, half:]

            # --- fused input projection: one matmul gives [x@W_red1 | x@W_gcn] ---
            xp = jnp.dot(xb, wcat, preferred_element_type=jnp.float32)      # (N, H1+half)
            x_des   = _bn_train(_leaky_relu(xp[:, :H1]))                    # (N, H1) f32
            gcn_lin = xp[:, H1:]                                            # (N, half) f32

            x_src = _bn_train(_leaky_relu(
                jnp.dot(x_des.astype(jnp.bfloat16), w2,
                        preferred_element_type=jnp.float32)))               # (N, H2) f32

            # --- ONE K=2N adjacency matmul: [A|A_norm] @ [[x_src,0],[0,gcn_lin]] ---
            rhs = jnp.concatenate(
                [jnp.concatenate([x_src.astype(jnp.bfloat16), ztop], axis=1),
                 jnp.concatenate([zbot, gcn_lin.astype(jnp.bfloat16)], axis=1)],
                axis=0)                                                      # (2N, H2+half) bf16
            both = jnp.dot(adjcat, rhs, preferred_element_type=jnp.float32)  # (N, H2+half)
            agg     = both[:, :H2]                                           # A @ x_src
            gcn_out = both[:, H2:] + bg                                      # A_norm @ (xW) + b

            # --- outer(x_des, agg) flattened to (N, H1*H2) entirely in vregs ---
            kp = jnp.concatenate([x_des[:, a:a + 1] * agg for a in range(H1)],
                                 axis=1)                                     # (N, H1*H2) f32
            conv_out = jnp.dot(kp.astype(jnp.bfloat16), wp,
                               preferred_element_type=jnp.float32)           # (N, half)

            # --- layer output stays in vregs (32-lane concat, no VMEM slab) ---
            h = jnp.concatenate([conv_out, gcn_out], axis=1)                 # (N, D) f32
            if l < L - 1:
                h = jnp.maximum(_bn_train(h), 0.0)   # BN + ReLU; dropout(p=0) = identity
            if prev is not None:
                h = h + prev                          # residual
            # --- SumJK('p'): per-layer classifier accumulated in-kernel ---
            acc = acc + jnp.dot(h.astype(jnp.bfloat16), wjk,
                                preferred_element_type=jnp.float32) + bjk
            prev = h
            xb = h.astype(jnp.bfloat16)

        # --- log_softmax over classes (f32) ---
        m = jnp.max(acc, axis=-1, keepdims=True)
        s = acc - m
        out_ref[...] = s - jnp.log(jnp.sum(jnp.exp(s), axis=-1, keepdims=True))

    return kernel


def foggnn_forward(x, adj_cat, wslab, bslab):
    N = x.shape[0]
    vmem = pl.BlockSpec(memory_space=pltpu.MemorySpace.VMEM)
    kernel = make_fused_kernel(N, NUM_LAYERS, HIDDEN1, HIDDEN2, HALF, NUM_CLASSES)
    return pl.pallas_call(
        kernel,
        out_shape=jax.ShapeDtypeStruct((N, NUM_CLASSES), jnp.float32),
        in_specs=[vmem] * 4,
        out_specs=vmem,
    )(x.astype(jnp.bfloat16), adj_cat, wslab, bslab)


def init_params(key):
    params = {'layers': []}
    for i in range(NUM_LAYERS):
        d_in = INPUT_CH if i == 0 else EMBED_DIM
        key, *ks = jax.random.split(key, 6)
        params['layers'].append(dict(
            w1=0.2 * jax.random.normal(ks[0], (d_in, HIDDEN1), jnp.float32),
            w2=0.2 * jax.random.normal(ks[1], (HIDDEN1, HIDDEN2), jnp.float32),
            # FOGConv.proj weight reshaped (H1*H2, HALF) -> (H1, H2, HALF)
            wp3=0.2 * jax.random.normal(ks[2], (HIDDEN1, HIDDEN2, HALF), jnp.float32),
            wg=0.2 * jax.random.normal(ks[3], (d_in, HALF), jnp.float32),   # GCNConv weight
            bg=0.02 * jax.random.normal(ks[4], (1, HALF), jnp.float32),     # GCNConv bias
        ))
    key, k1, k2 = jax.random.split(key, 3)
    params['wjk'] = 0.2 * jax.random.normal(k1, (NUM_LAYERS, EMBED_DIM, NUM_CLASSES), jnp.float32)
    params['bjk'] = 0.02 * jax.random.normal(k2, (NUM_LAYERS, 1, NUM_CLASSES), jnp.float32)
    return params


def prepare_fused_params(params):
    """Host-side: pack ALL per-layer weights into ONE bf16 slab and all biases
    into ONE f32 slab (2 DMA inputs instead of 6)."""
    wslab = jnp.zeros((NUM_LAYERS * LYR_ROWS, SLAB_W), jnp.float32)
    bslab = jnp.zeros((NUM_LAYERS * BIAS_ROWS, SLAB_W), jnp.float32)
    for l, lp in enumerate(params['layers']):
        base = l * LYR_ROWS
        d_in = lp['w1'].shape[0]
        # fused [reduction1 | gcn-linear] weight
        wslab = wslab.at[base + OFF_WCAT: base + OFF_WCAT + d_in, :HIDDEN1].set(lp['w1'])
        wslab = wslab.at[base + OFF_WCAT: base + OFF_WCAT + d_in, HIDDEN1:].set(lp['wg'])
        wslab = wslab.at[base + OFF_W2: base + OFF_W2 + HIDDEN1, :HIDDEN2].set(lp['w2'])
        wslab = wslab.at[base + OFF_WP: base + OFF_WP + HIDDEN1 * HIDDEN2, :HALF].set(
            lp['wp3'].reshape(HIDDEN1 * HIDDEN2, HALF))
        wslab = wslab.at[base + OFF_WJK: base + OFF_WJK + EMBED_DIM, :NUM_CLASSES].set(
            params['wjk'][l])
        bslab = bslab.at[l * BIAS_ROWS, :HALF].set(lp['bg'][0])
        bslab = bslab.at[l * BIAS_ROWS, HALF:].set(params['bjk'][l, 0])
    return wslab.astype(jnp.bfloat16), bslab


def build_adjacency(edge_index, num_nodes):
    """Dense A[dst, src] (undirected) and GCN-normalized A; returned fused [A | A_norm]."""
    src, dst = edge_index[0], edge_index[1]
    adj = jnp.zeros((num_nodes, num_nodes), jnp.float32).at[dst, src].set(1.0)
    adj = jnp.maximum(adj, adj.T)                             # undirected graph
    adj_hat = adj + jnp.eye(num_nodes, dtype=jnp.float32)     # GCN self-loops
    deg = jnp.sum(adj_hat, axis=1)
    dinv = jax.lax.rsqrt(deg)
    adj_norm = dinv[:, None] * adj_hat * dinv[None, :]        # D^-1/2 (A+I) D^-1/2
    return jnp.concatenate([adj, adj_norm], axis=1).astype(jnp.bfloat16)   # (N, 2N)


if __name__ == "__main__":
    N, E = 64, 256
    key = jax.random.PRNGKey(0)
    kx, ke1, ke2, kp = jax.random.split(key, 4)
    x = jax.random.normal(kx, (N, INPUT_CH), jnp.float32)
    src = jax.random.randint(ke1, (E,), 0, N)
    dst = jax.random.randint(ke2, (E,), 0, N)
    edge_index = jnp.stack([src, dst], axis=0)                # (2, E)
    adj_cat = build_adjacency(edge_index, N)
    params = init_params(kp)
    wslab, bslab = prepare_fused_params(params)

    fwd = jax.jit(foggnn_forward)
    out = jax.block_until_ready(fwd(x, adj_cat, wslab, bslab))
    assert out.shape == (N, NUM_CLASSES)
    assert bool(jnp.all(jnp.isfinite(out)))
    print("KERNEL_OK")
</pallas_src>

<mosaic_0001>
module attributes {stable_mosaic.version = 11 : i64} {
  func.func @kernel(%arg0: memref<64x16xbf16, #tpu.memory_space<vmem>>, %arg1: memref<64x128xbf16, #tpu.memory_space<vmem>>, %arg2: memref<432x24xbf16, #tpu.memory_space<vmem>>, %arg3: memref<24x24xf32, #tpu.memory_space<vmem>>, %arg4: memref<64x8xf32, #tpu.memory_space<vmem>>) attributes {dimension_semantics = [], scalar_prefetch = 0 : i64, scratch_operands = 0 : i64, tpu.core_type = #tpu.core_type<tc>} {
    %c0 = arith.constant 0 : index
    %c0_0 = arith.constant 0 : index
    %0 = vector.load %arg1[%c0, %c0_0] : memref<64x128xbf16, #tpu.memory_space<vmem>>, vector<64x128xbf16>
    %c0_1 = arith.constant 0 : index
    %c0_2 = arith.constant 0 : index
    %1 = vector.load %arg0[%c0_1, %c0_2] : memref<64x16xbf16, #tpu.memory_space<vmem>>, vector<64x16xbf16>
    %cst = arith.constant 0.000000e+00 : f32
    %2 = vector.broadcast %cst : f32 to vector<64x8xf32>
    %cst_3 = arith.constant 0.000000e+00 : bf16
    %3 = vector.broadcast %cst_3 : bf16 to vector<64x16xbf16>
    %cst_4 = arith.constant 0.000000e+00 : bf16
    %4 = vector.broadcast %cst_4 : bf16 to vector<64x8xbf16>
    %c0_5 = arith.constant 0 : index
    %c0_6 = arith.constant 0 : index
    %5 = vector.load %arg2[%c0_5, %c0_6] : memref<432x24xbf16, #tpu.memory_space<vmem>>, vector<16x24xbf16>
    %c32 = arith.constant 32 : index
    %c0_7 = arith.constant 0 : index
    %6 = vector.load %arg2[%c32, %c0_7] : memref<432x24xbf16, #tpu.memory_space<vmem>>, vector<8x8xbf16>
    %c48 = arith.constant 48 : index
    %c0_8 = arith.constant 0 : index
    %7 = vector.load %arg2[%c48, %c0_8] : memref<432x24xbf16, #tpu.memory_space<vmem>>, vector<64x16xbf16>
    %c112 = arith.constant 112 : index
    %c0_9 = arith.constant 0 : index
    %8 = vector.load %arg2[%c112, %c0_9] : memref<432x24xbf16, #tpu.memory_space<vmem>>, vector<32x8xbf16>
    %c0_10 = arith.constant 0 : index
    %c0_11 = arith.constant 0 : index
    %9 = vector.load %arg3[%c0_10, %c0_11] : memref<24x24xf32, #tpu.memory_space<vmem>>, vector<1x24xf32>
    %10 = vector.extract_strided_slice %9 {offsets = [0, 0], sizes = [1, 16], strides = [1, 1]} : vector<1x24xf32> to vector<1x16xf32>
    %11 = vector.extract_strided_slice %9 {offsets = [0, 16], sizes = [1, 8], strides = [1, 1]} : vector<1x24xf32> to vector<1x8xf32>
    %cst_12 = arith.constant dense<0.000000e+00> : vector<64x24xf32>
    %12 = tpu.matmul %1, %5, %cst_12 {dimension_numbers = #tpu.dot_dimension_numbers<[1], [0], [0], [1], [0, 0, 1, 1], [], []>} : vector<64x16xbf16>, vector<16x24xbf16>, vector<64x24xf32> -> vector<64x24xf32>
    %13 = vector.extract_strided_slice %12 {offsets = [0, 0], sizes = [64, 8], strides = [1, 1]} : vector<64x24xf32> to vector<64x8xf32>
    %cst_13 = arith.constant 0.000000e+00 : f32
    %14 = vector.broadcast %cst_13 : f32 to vector<64x8xf32>
    %15 = arith.cmpf oge, %13, %14 : vector<64x8xf32>
    %cst_14 = arith.constant 0.00999999977 : f32
    %16 = vector.broadcast %cst_14 : f32 to vector<64x8xf32>
    %17 = arith.mulf %16, %13 : vector<64x8xf32>
    %18 = arith.select %15, %13, %17 : vector<64x8xi1>, vector<64x8xf32>
    %cst_15 = arith.constant dense<0.000000e+00> : vector<8xf32>
    %19 = vector.multi_reduction <add>, %18, %cst_15 [0] : vector<64x8xf32> to vector<8xf32>
    %20 = vector.shape_cast %19 : vector<8xf32> to vector<1x8xf32>
    %cst_16 = arith.constant 6.400000e+01 : f32
    %21 = vector.broadcast %cst_16 : f32 to vector<1x8xf32>
    %22 = arith.divf %20, %21 : vector<1x8xf32>
    %23 = arith.mulf %18, %18 : vector<64x8xf32>
    %cst_17 = arith.constant dense<0.000000e+00> : vector<8xf32>
    %24 = vector.multi_reduction <add>, %23, %cst_17 [0] : vector<64x8xf32> to vector<8xf32>
    %25 = vector.shape_cast %24 : vector<8xf32> to vector<1x8xf32>
    %cst_18 = arith.constant 6.400000e+01 : f32
    %26 = vector.broadcast %cst_18 : f32 to vector<1x8xf32>
    %27 = arith.divf %25, %26 : vector<1x8xf32>
    %28 = arith.mulf %22, %22 : vector<1x8xf32>
    %29 = arith.subf %27, %28 : vector<1x8xf32>
    %cst_19 = arith.constant 0.000000e+00 : f32
    %30 = vector.broadcast %cst_19 : f32 to vector<1x8xf32>
    %31 = arith.maximumf %29, %30 : vector<1x8xf32>
    %32 = vector.broadcast %22 : vector<1x8xf32> to vector<64x8xf32>
    %33 = arith.subf %18, %32 : vector<64x8xf32>
    %cst_20 = arith.constant 9.99999974E-6 : f32
    %34 = vector.broadcast %cst_20 : f32 to vector<1x8xf32>
    %35 = arith.addf %31, %34 : vector<1x8xf32>
    %36 = math.rsqrt %35 : vector<1x8xf32>
    %37 = vector.broadcast %36 : vector<1x8xf32> to vector<64x8xf32>
    %38 = arith.mulf %33, %37 : vector<64x8xf32>
    %39 = vector.extract_strided_slice %12 {offsets = [0, 8], sizes = [64, 16], strides = [1, 1]} : vector<64x24xf32> to vector<64x16xf32>
    %40 = arith.truncf %38 : vector<64x8xf32> to vector<64x8xbf16>
    %cst_21 = arith.constant dense<0.000000e+00> : vector<64x8xf32>
    %41 = tpu.matmul %40, %6, %cst_21 {dimension_numbers = #tpu.dot_dimension_numbers<[1], [0], [0], [1], [0, 0, 1, 1], [], []>} : vector<64x8xbf16>, vector<8x8xbf16>, vector<64x8xf32> -> vector<64x8xf32>
    %cst_22 = arith.constant 0.000000e+00 : f32
    %42 = vector.broadcast %cst_22 : f32 to vector<64x8xf32>
    %43 = arith.cmpf oge, %41, %42 : vector<64x8xf32>
    %cst_23 = arith.constant 0.00999999977 : f32
    %44 = vector.broadcast %cst_23 : f32 to vector<64x8xf32>
    %45 = arith.mulf %44, %41 : vector<64x8xf32>
    %46 = arith.select %43, %41, %45 : vector<64x8xi1>, vector<64x8xf32>
    %cst_24 = arith.constant dense<0.000000e+00> : vector<8xf32>
    %47 = vector.multi_reduction <add>, %46, %cst_24 [0] : vector<64x8xf32> to vector<8xf32>
    %48 = vector.shape_cast %47 : vector<8xf32> to vector<1x8xf32>
    %cst_25 = arith.constant 6.400000e+01 : f32
    %49 = vector.broadcast %cst_25 : f32 to vector<1x8xf32>
    %50 = arith.divf %48, %49 : vector<1x8xf32>
    %51 = arith.mulf %46, %46 : vector<64x8xf32>
    %cst_26 = arith.constant dense<0.000000e+00> : vector<8xf32>
    %52 = vector.multi_reduction <add>, %51, %cst_26 [0] : vector<64x8xf32> to vector<8xf32>
    %53 = vector.shape_cast %52 : vector<8xf32> to vector<1x8xf32>
    %cst_27 = arith.constant 6.400000e+01 : f32
    %54 = vector.broadcast %cst_27 : f32 to vector<1x8xf32>
    %55 = arith.divf %53, %54 : vector<1x8xf32>
    %56 = arith.mulf %50, %50 : vector<1x8xf32>
    %57 = arith.subf %55, %56 : vector<1x8xf32>
    %cst_28 = arith.constant 0.000000e+00 : f32
    %58 = vector.broadcast %cst_28 : f32 to vector<1x8xf32>
    %59 = arith.maximumf %57, %58 : vector<1x8xf32>
    %60 = vector.broadcast %50 : vector<1x8xf32> to vector<64x8xf32>
    %61 = arith.subf %46, %60 : vector<64x8xf32>
    %cst_29 = arith.constant 9.99999974E-6 : f32
    %62 = vector.broadcast %cst_29 : f32 to vector<1x8xf32>
    %63 = arith.addf %59, %62 : vector<1x8xf32>
    %64 = math.rsqrt %63 : vector<1x8xf32>
    %65 = vector.broadcast %64 : vector<1x8xf32> to vector<64x8xf32>
    %66 = arith.mulf %61, %65 : vector<64x8xf32>
    %67 = arith.truncf %66 : vector<64x8xf32> to vector<64x8xbf16>
    %68 = tpu.concatenate %67, %3 in 1 : vector<64x8xbf16>, vector<64x16xbf16> -> vector<64x24xbf16>
    %69 = arith.truncf %39 : vector<64x16xf32> to vector<64x16xbf16>
    %70 = tpu.concatenate %4, %69 in 1 : vector<64x8xbf16>, vector<64x16xbf16> -> vector<64x24xbf16>
    %71 = tpu.concatenate %68, %70 in 0 : vector<64x24xbf16>, vector<64x24xbf16> -> vector<128x24xbf16>
    %cst_30 = arith.constant dense<0.000000e+00> : vector<64x24xf32>
    %72 = tpu.matmul %0, %71, %cst_30 {dimension_numbers = #tpu.dot_dimension_numbers<[1], [0], [0], [1], [0, 0, 1, 1], [], []>} : vector<64x128xbf16>, vector<128x24xbf16>, vector<64x24xf32> -> vector<64x24xf32>
    %73 = vector.extract_strided_slice %72 {offsets = [0, 0], sizes = [64, 8], strides = [1, 1]} : vector<64x24xf32> to vector<64x8xf32>
    %74 = vector.extract_strided_slice %72 {offsets = [0, 8], sizes = [64, 16], strides = [1, 1]} : vector<64x24xf32> to vector<64x16xf32>
    %75 = vector.broadcast %10 : vector<1x16xf32> to vector<64x16xf32>
    %76 = arith.addf %74, %75 : vector<64x16xf32>
    %77 = vector.extract_strided_slice %38 {offsets = [0, 0], sizes = [64, 1], strides = [1, 1]} : vector<64x8xf32> to vector<64x1xf32>
    %78 = vector.broadcast %77 : vector<64x1xf32> to vector<64x8xf32>
    %79 = arith.mulf %78, %73 : vector<64x8xf32>
    %80 = vector.extract_strided_slice %38 {offsets = [0, 1], sizes = [64, 1], strides = [1, 1]} : vector<64x8xf32> to vector<64x1xf32>
    %81 = vector.broadcast %80 : vector<64x1xf32> to vector<64x8xf32>
    %82 = arith.mulf %81, %73 : vector<64x8xf32>
    %83 = vector.extract_strided_slice %38 {offsets = [0, 2], sizes = [64, 1], strides = [1, 1]} : vector<64x8xf32> to vector<64x1xf32>
    %84 = vector.broadcast %83 : vector<64x1xf32> to vector<64x8xf32>
    %85 = arith.mulf %84, %73 : vector<64x8xf32>
    %86 = vector.extract_strided_slice %38 {offsets = [0, 3], sizes = [64, 1], strides = [1, 1]} : vector<64x8xf32> to vector<64x1xf32>
    %87 = vector.broadcast %86 : vector<64x1xf32> to vector<64x8xf32>
    %88 = arith.mulf %87, %73 : vector<64x8xf32>
    %89 = vector.extract_strided_slice %38 {offsets = [0, 4], sizes = [64, 1], strides = [1, 1]} : vector<64x8xf32> to vector<64x1xf32>
    %90 = vector.broadcast %89 : vector<64x1xf32> to vector<64x8xf32>
    %91 = arith.mulf %90, %73 : vector<64x8xf32>
    %92 = vector.extract_strided_slice %38 {offsets = [0, 5], sizes = [64, 1], strides = [1, 1]} : vector<64x8xf32> to vector<64x1xf32>
    %93 = vector.broadcast %92 : vector<64x1xf32> to vector<64x8xf32>
    %94 = arith.mulf %93, %73 : vector<64x8xf32>
    %95 = vector.extract_strided_slice %38 {offsets = [0, 6], sizes = [64, 1], strides = [1, 1]} : vector<64x8xf32> to vector<64x1xf32>
    %96 = vector.broadcast %95 : vector<64x1xf32> to vector<64x8xf32>
    %97 = arith.mulf %96, %73 : vector<64x8xf32>
    %98 = vector.extract_strided_slice %38 {offsets = [0, 7], sizes = [64, 1], strides = [1, 1]} : vector<64x8xf32> to vector<64x1xf32>
    %99 = vector.broadcast %98 : vector<64x1xf32> to vector<64x8xf32>
    %100 = arith.mulf %99, %73 : vector<64x8xf32>
    %101 = tpu.concatenate %79, %82, %85, %88, %91, %94, %97, %100 in 1 : vector<64x8xf32>, vector<64x8xf32>, vector<64x8xf32>, vector<64x8xf32>, vector<64x8xf32>, vector<64x8xf32>, vector<64x8xf32>, vector<64x8xf32> -> vector<64x64xf32>
    %102 = arith.truncf %101 : vector<64x64xf32> to vector<64x64xbf16>
    %cst_31 = arith.constant dense<0.000000e+00> : vector<64x16xf32>
    %103 = tpu.matmul %102, %7, %cst_31 {dimension_numbers = #tpu.dot_dimension_numbers<[1], [0], [0], [1], [0, 0, 1, 1], [], []>} : vector<64x64xbf16>, vector<64x16xbf16>, vector<64x16xf32> -> vector<64x16xf32>
    %104 = tpu.concatenate %103, %76 in 1 : vector<64x16xf32>, vector<64x16xf32> -> vector<64x32xf32>
    %cst_32 = arith.constant dense<0.000000e+00> : vector<32xf32>
    %105 = vector.multi_reduction <add>, %104, %cst_32 [0] : vector<64x32xf32> to vector<32xf32>
    %106 = vector.shape_cast %105 : vector<32xf32> to vector<1x32xf32>
    %cst_33 = arith.constant 6.400000e+01 : f32
    %107 = vector.broadcast %cst_33 : f32 to vector<1x32xf32>
    %108 = arith.divf %106, %107 : vector<1x32xf32>
    %109 = arith.mulf %104, %104 : vector<64x32xf32>
    %cst_34 = arith.constant dense<0.000000e+00> : vector<32xf32>
    %110 = vector.multi_reduction <add>, %109, %cst_34 [0] : vector<64x32xf32> to vector<32xf32>
    %111 = vector.shape_cast %110 : vector<32xf32> to vector<1x32xf32>
    %cst_35 = arith.constant 6.400000e+01 : f32
    %112 = vector.broadcast %cst_35 : f32 to vector<1x32xf32>
    %113 = arith.divf %111, %112 : vector<1x32xf32>
    %114 = arith.mulf %108, %108 : vector<1x32xf32>
    %115 = arith.subf %113, %114 : vector<1x32xf32>
    %cst_36 = arith.constant 0.000000e+00 : f32
    %116 = vector.broadcast %cst_36 : f32 to vector<1x32xf32>
    %117 = arith.maximumf %115, %116 : vector<1x32xf32>
    %118 = vector.broadcast %108 : vector<1x32xf32> to vector<64x32xf32>
    %119 = arith.subf %104, %118 : vector<64x32xf32>
    %cst_37 = arith.constant 9.99999974E-6 : f32
    %120 = vector.broadcast %cst_37 : f32 to vector<1x32xf32>
    %121 = arith.addf %117, %120 : vector<1x32xf32>
    %122 = math.rsqrt %121 : vector<1x32xf32>
    %123 = vector.broadcast %122 : vector<1x32xf32> to vector<64x32xf32>
    %124 = arith.mulf %119, %123 : vector<64x32xf32>
    %cst_38 = arith.constant 0.000000e+00 : f32
    %125 = vector.broadcast %cst_38 : f32 to vector<64x32xf32>
    %126 = arith.maximumf %124, %125 : vector<64x32xf32>
    %127 = arith.truncf %126 : vector<64x32xf32> to vector<64x32xbf16>
    %cst_39 = arith.constant dense<0.000000e+00> : vector<64x8xf32>
    %128 = tpu.matmul %127, %8, %cst_39 {dimension_numbers = #tpu.dot_dimension_numbers<[1], [0], [0], [1], [0, 0, 1, 1], [], []>} : vector<64x32xbf16>, vector<32x8xbf16>, vector<64x8xf32> -> vector<64x8xf32>
    %129 = arith.addf %2, %128 : vector<64x8xf32>
    %130 = vector.broadcast %11 : vector<1x8xf32> to vector<64x8xf32>
    %131 = arith.addf %129, %130 : vector<64x8xf32>
    %132 = arith.truncf %126 : vector<64x32xf32> to vector<64x32xbf16>
    %c144 = arith.constant 144 : index
    %c0_40 = arith.constant 0 : index
    %133 = vector.load %arg2[%c144, %c0_40] : memref<432x24xbf16, #tpu.memory_space<vmem>>, vector<32x24xbf16>
    %c176 = arith.constant 176 : index
    %c0_41 = arith.constant 0 : index
    %134 = vector.load %arg2[%c176, %c0_41] : memref<432x24xbf16, #tpu.memory_space<vmem>>, vector<8x8xbf16>
    %c192 = arith.constant 192 : index
    %c0_42 = arith.constant 0 : index
    %135 = vector.load %arg2[%c192, %c0_42] : memref<432x24xbf16, #tpu.memory_space<vmem>>, vector<64x16xbf16>
    %c256 = arith.constant 256 : index
    %c0_43 = arith.constant 0 : index
    %136 = vector.load %arg2[%c256, %c0_43] : memref<432x24xbf16, #tpu.memory_space<vmem>>, vector<32x8xbf16>
    %c8 = arith.constant 8 : index
    %c0_44 = arith.constant 0 : index
    %137 = vector.load %arg3[%c8, %c0_44] : memref<24x24xf32, #tpu.memory_space<vmem>>, vector<1x24xf32>
    %138 = vector.extract_strided_slice %137 {offsets = [0, 0], sizes = [1, 16], strides = [1, 1]} : vector<1x24xf32> to vector<1x16xf32>
    %139 = vector.extract_strided_slice %137 {offsets = [0, 16], sizes = [1, 8], strides = [1, 1]} : vector<1x24xf32> to vector<1x8xf32>
    %cst_45 = arith.constant dense<0.000000e+00> : vector<64x24xf32>
    %140 = tpu.matmul %132, %133, %cst_45 {dimension_numbers = #tpu.dot_dimension_numbers<[1], [0], [0], [1], [0, 0, 1, 1], [], []>} : vector<64x32xbf16>, vector<32x24xbf16>, vector<64x24xf32> -> vector<64x24xf32>
    %141 = vector.extract_strided_slice %140 {offsets = [0, 0], sizes = [64, 8], strides = [1, 1]} : vector<64x24xf32> to vector<64x8xf32>
    %cst_46 = arith.constant 0.000000e+00 : f32
    %142 = vector.broadcast %cst_46 : f32 to vector<64x8xf32>
    %143 = arith.cmpf oge, %141, %142 : vector<64x8xf32>
    %cst_47 = arith.constant 0.00999999977 : f32
    %144 = vector.broadcast %cst_47 : f32 to vector<64x8xf32>
    %145 = arith.mulf %144, %141 : vector<64x8xf32>
    %146 = arith.select %143, %141, %145 : vector<64x8xi1>, vector<64x8xf32>
    %cst_48 = arith.constant dense<0.000000e+00> : vector<8xf32>
    %147 = vector.multi_reduction <add>, %146, %cst_48 [0] : vector<64x8xf32> to vector<8xf32>
    %148 = vector.shape_cast %147 : vector<8xf32> to vector<1x8xf32>
    %cst_49 = arith.constant 6.400000e+01 : f32
    %149 = vector.broadcast %cst_49 : f32 to vector<1x8xf32>
    %150 = arith.divf %148, %149 : vector<1x8xf32>
    %151 = arith.mulf %146, %146 : vector<64x8xf32>
    %cst_50 = arith.constant dense<0.000000e+00> : vector<8xf32>
    %152 = vector.multi_reduction <add>, %151, %cst_50 [0] : vector<64x8xf32> to vector<8xf32>
    %153 = vector.shape_cast %152 : vector<8xf32> to vector<1x8xf32>
    %cst_51 = arith.constant 6.400000e+01 : f32
    %154 = vector.broadcast %cst_51 : f32 to vector<1x8xf32>
    %155 = arith.divf %153, %154 : vector<1x8xf32>
    %156 = arith.mulf %150, %150 : vector<1x8xf32>
    %157 = arith.subf %155, %156 : vector<1x8xf32>
    %cst_52 = arith.constant 0.000000e+00 : f32
    %158 = vector.broadcast %cst_52 : f32 to vector<1x8xf32>
    %159 = arith.maximumf %157, %158 : vector<1x8xf32>
    %160 = vector.broadcast %150 : vector<1x8xf32> to vector<64x8xf32>
    %161 = arith.subf %146, %160 : vector<64x8xf32>
    %cst_53 = arith.constant 9.99999974E-6 : f32
    %162 = vector.broadcast %cst_53 : f32 to vector<1x8xf32>
    %163 = arith.addf %159, %162 : vector<1x8xf32>
    %164 = math.rsqrt %163 : vector<1x8xf32>
    %165 = vector.broadcast %164 : vector<1x8xf32> to vector<64x8xf32>
    %166 = arith.mulf %161, %165 : vector<64x8xf32>
    %167 = vector.extract_strided_slice %140 {offsets = [0, 8], sizes = [64, 16], strides = [1, 1]} : vector<64x24xf32> to vector<64x16xf32>
    %168 = arith.truncf %166 : vector<64x8xf32> to vector<64x8xbf16>
    %cst_54 = arith.constant dense<0.000000e+00> : vector<64x8xf32>
    %169 = tpu.matmul %168, %134, %cst_54 {dimension_numbers = #tpu.dot_dimension_numbers<[1], [0], [0], [1], [0, 0, 1, 1], [], []>} : vector<64x8xbf16>, vector<8x8xbf16>, vector<64x8xf32> -> vector<64x8xf32>
    %cst_55 = arith.constant 0.000000e+00 : f32
    %170 = vector.broadcast %cst_55 : f32 to vector<64x8xf32>
    %171 = arith.cmpf oge, %169, %170 : vector<64x8xf32>
    %cst_56 = arith.constant 0.00999999977 : f32
    %172 = vector.broadcast %cst_56 : f32 to vector<64x8xf32>
    %173 = arith.mulf %172, %169 : vector<64x8xf32>
    %174 = arith.select %171, %169, %173 : vector<64x8xi1>, vector<64x8xf32>
    %cst_57 = arith.constant dense<0.000000e+00> : vector<8xf32>
    %175 = vector.multi_reduction <add>, %174, %cst_57 [0] : vector<64x8xf32> to vector<8xf32>
    %176 = vector.shape_cast %175 : vector<8xf32> to vector<1x8xf32>
    %cst_58 = arith.constant 6.400000e+01 : f32
    %177 = vector.broadcast %cst_58 : f32 to vector<1x8xf32>
    %178 = arith.divf %176, %177 : vector<1x8xf32>
    %179 = arith.mulf %174, %174 : vector<64x8xf32>
    %cst_59 = arith.constant dense<0.000000e+00> : vector<8xf32>
    %180 = vector.multi_reduction <add>, %179, %cst_59 [0] : vector<64x8xf32> to vector<8xf32>
    %181 = vector.shape_cast %180 : vector<8xf32> to vector<1x8xf32>
    %cst_60 = arith.constant 6.400000e+01 : f32
    %182 = vector.broadcast %cst_60 : f32 to vector<1x8xf32>
    %183 = arith.divf %181, %182 : vector<1x8xf32>
    %184 = arith.mulf %178, %178 : vector<1x8xf32>
    %185 = arith.subf %183, %184 : vector<1x8xf32>
    %cst_61 = arith.constant 0.000000e+00 : f32
    %186 = vector.broadcast %cst_61 : f32 to vector<1x8xf32>
    %187 = arith.maximumf %185, %186 : vector<1x8xf32>
    %188 = vector.broadcast %178 : vector<1x8xf32> to vector<64x8xf32>
    %189 = arith.subf %174, %188 : vector<64x8xf32>
    %cst_62 = arith.constant 9.99999974E-6 : f32
    %190 = vector.broadcast %cst_62 : f32 to vector<1x8xf32>
    %191 = arith.addf %187, %190 : vector<1x8xf32>
    %192 = math.rsqrt %191 : vector<1x8xf32>
    %193 = vector.broadcast %192 : vector<1x8xf32> to vector<64x8xf32>
    %194 = arith.mulf %189, %193 : vector<64x8xf32>
    %195 = arith.truncf %194 : vector<64x8xf32> to vector<64x8xbf16>
    %196 = tpu.concatenate %195, %3 in 1 : vector<64x8xbf16>, vector<64x16xbf16> -> vector<64x24xbf16>
    %197 = arith.truncf %167 : vector<64x16xf32> to vector<64x16xbf16>
    %198 = tpu.concatenate %4, %197 in 1 : vector<64x8xbf16>, vector<64x16xbf16> -> vector<64x24xbf16>
    %199 = tpu.concatenate %196, %198 in 0 : vector<64x24xbf16>, vector<64x24xbf16> -> vector<128x24xbf16>
    %cst_63 = arith.constant dense<0.000000e+00> : vector<64x24xf32>
    %200 = tpu.matmul %0, %199, %cst_63 {dimension_numbers = #tpu.dot_dimension_numbers<[1], [0], [0], [1], [0, 0, 1, 1], [], []>} : vector<64x128xbf16>, vector<128x24xbf16>, vector<64x24xf32> -> vector<64x24xf32>
    %201 = vector.extract_strided_slice %200 {offsets = [0, 0], sizes = [64, 8], strides = [1, 1]} : vector<64x24xf32> to vector<64x8xf32>
    %202 = vector.extract_strided_slice %200 {offsets = [0, 8], sizes = [64, 16], strides = [1, 1]} : vector<64x24xf32> to vector<64x16xf32>
    %203 = vector.broadcast %138 : vector<1x16xf32> to vector<64x16xf32>
    %204 = arith.addf %202, %203 : vector<64x16xf32>
    %205 = vector.extract_strided_slice %166 {offsets = [0, 0], sizes = [64, 1], strides = [1, 1]} : vector<64x8xf32> to vector<64x1xf32>
    %206 = vector.broadcast %205 : vector<64x1xf32> to vector<64x8xf32>
    %207 = arith.mulf %206, %201 : vector<64x8xf32>
    %208 = vector.extract_strided_slice %166 {offsets = [0, 1], sizes = [64, 1], strides = [1, 1]} : vector<64x8xf32> to vector<64x1xf32>
    %209 = vector.broadcast %208 : vector<64x1xf32> to vector<64x8xf32>
    %210 = arith.mulf %209, %201 : vector<64x8xf32>
    %211 = vector.extract_strided_slice %166 {offsets = [0, 2], sizes = [64, 1], strides = [1, 1]} : vector<64x8xf32> to vector<64x1xf32>
    %212 = vector.broadcast %211 : vector<64x1xf32> to vector<64x8xf32>
    %213 = arith.mulf %212, %201 : vector<64x8xf32>
    %214 = vector.extract_strided_slice %166 {offsets = [0, 3], sizes = [64, 1], strides = [1, 1]} : vector<64x8xf32> to vector<64x1xf32>
    %215 = vector.broadcast %214 : vector<64x1xf32> to vector<64x8xf32>
    %216 = arith.mulf %215, %201 : vector<64x8xf32>
    %217 = vector.extract_strided_slice %166 {offsets = [0, 4], sizes = [64, 1], strides = [1, 1]} : vector<64x8xf32> to vector<64x1xf32>
    %218 = vector.broadcast %217 : vector<64x1xf32> to vector<64x8xf32>
    %219 = arith.mulf %218, %201 : vector<64x8xf32>
    %220 = vector.extract_strided_slice %166 {offsets = [0, 5], sizes = [64, 1], strides = [1, 1]} : vector<64x8xf32> to vector<64x1xf32>
    %221 = vector.broadcast %220 : vector<64x1xf32> to vector<64x8xf32>
    %222 = arith.mulf %221, %201 : vector<64x8xf32>
    %223 = vector.extract_strided_slice %166 {offsets = [0, 6], sizes = [64, 1], strides = [1, 1]} : vector<64x8xf32> to vector<64x1xf32>
    %224 = vector.broadcast %223 : vector<64x1xf32> to vector<64x8xf32>
    %225 = arith.mulf %224, %201 : vector<64x8xf32>
    %226 = vector.extract_strided_slice %166 {offsets = [0, 7], sizes = [64, 1], strides = [1, 1]} : vector<64x8xf32> to vector<64x1xf32>
    %227 = vector.broadcast %226 : vector<64x1xf32> to vector<64x8xf32>
    %228 = arith.mulf %227, %201 : vector<64x8xf32>
    %229 = tpu.concatenate %207, %210, %213, %216, %219, %222, %225, %228 in 1 : vector<64x8xf32>, vector<64x8xf32>, vector<64x8xf32>, vector<64x8xf32>, vector<64x8xf32>, vector<64x8xf32>, vector<64x8xf32>, vector<64x8xf32> -> vector<64x64xf32>
    %230 = arith.truncf %229 : vector<64x64xf32> to vector<64x64xbf16>
    %cst_64 = arith.constant dense<0.000000e+00> : vector<64x16xf32>
    %231 = tpu.matmul %230, %135, %cst_64 {dimension_numbers = #tpu.dot_dimension_numbers<[1], [0], [0], [1], [0, 0, 1, 1], [], []>} : vector<64x64xbf16>, vector<64x16xbf16>, vector<64x16xf32> -> vector<64x16xf32>
    %232 = tpu.concatenate %231, %204 in 1 : vector<64x16xf32>, vector<64x16xf32> -> vector<64x32xf32>
    %cst_65 = arith.constant dense<0.000000e+00> : vector<32xf32>
    %233 = vector.multi_reduction <add>, %232, %cst_65 [0] : vector<64x32xf32> to vector<32xf32>
    %234 = vector.shape_cast %233 : vector<32xf32> to vector<1x32xf32>
    %cst_66 = arith.constant 6.400000e+01 : f32
    %235 = vector.broadcast %cst_66 : f32 to vector<1x32xf32>
    %236 = arith.divf %234, %235 : vector<1x32xf32>
    %237 = arith.mulf %232, %232 : vector<64x32xf32>
    %cst_67 = arith.constant dense<0.000000e+00> : vector<32xf32>
    %238 = vector.multi_reduction <add>, %237, %cst_67 [0] : vector<64x32xf32> to vector<32xf32>
    %239 = vector.shape_cast %238 : vector<32xf32> to vector<1x32xf32>
    %cst_68 = arith.constant 6.400000e+01 : f32
    %240 = vector.broadcast %cst_68 : f32 to vector<1x32xf32>
    %241 = arith.divf %239, %240 : vector<1x32xf32>
    %242 = arith.mulf %236, %236 : vector<1x32xf32>
    %243 = arith.subf %241, %242 : vector<1x32xf32>
    %cst_69 = arith.constant 0.000000e+00 : f32
    %244 = vector.broadcast %cst_69 : f32 to vector<1x32xf32>
    %245 = arith.maximumf %243, %244 : vector<1x32xf32>
    %246 = vector.broadcast %236 : vector<1x32xf32> to vector<64x32xf32>
    %247 = arith.subf %232, %246 : vector<64x32xf32>
    %cst_70 = arith.constant 9.99999974E-6 : f32
    %248 = vector.broadcast %cst_70 : f32 to vector<1x32xf32>
    %249 = arith.addf %245, %248 : vector<1x32xf32>
    %250 = math.rsqrt %249 : vector<1x32xf32>
    %251 = vector.broadcast %250 : vector<1x32xf32> to vector<64x32xf32>
    %252 = arith.mulf %247, %251 : vector<64x32xf32>
    %cst_71 = arith.constant 0.000000e+00 : f32
    %253 = vector.broadcast %cst_71 : f32 to vector<64x32xf32>
    %254 = arith.maximumf %252, %253 : vector<64x32xf32>
    %255 = arith.addf %254, %126 : vector<64x32xf32>
    %256 = arith.truncf %255 : vector<64x32xf32> to vector<64x32xbf16>
    %cst_72 = arith.constant dense<0.000000e+00> : vector<64x8xf32>
    %257 = tpu.matmul %256, %136, %cst_72 {dimension_numbers = #tpu.dot_dimension_numbers<[1], [0], [0], [1], [0, 0, 1, 1], [], []>} : vector<64x32xbf16>, vector<32x8xbf16>, vector<64x8xf32> -> vector<64x8xf32>
    %258 = arith.addf %131, %257 : vector<64x8xf32>
    %259 = vector.broadcast %139 : vector<1x8xf32> to vector<64x8xf32>
    %260 = arith.addf %258, %259 : vector<64x8xf32>
    %261 = arith.truncf %255 : vector<64x32xf32> to vector<64x32xbf16>
    %c288 = arith.constant 288 : index
    %c0_73 = arith.constant 0 : index
    %262 = vector.load %arg2[%c288, %c0_73] : memref<432x24xbf16, #tpu.memory_space<vmem>>, vector<32x24xbf16>
    %c320 = arith.constant 320 : index
    %c0_74 = arith.constant 0 : index
    %263 = vector.load %arg2[%c320, %c0_74] : memref<432x24xbf16, #tpu.memory_space<vmem>>, vector<8x8xbf16>
    %c336 = arith.constant 336 : index
    %c0_75 = arith.constant 0 : index
    %264 = vector.load %arg2[%c336, %c0_75] : memref<432x24xbf16, #tpu.memory_space<vmem>>, vector<64x16xbf16>
    %c400 = arith.constant 400 : index
    %c0_76 = arith.constant 0 : index
    %265 = vector.load %arg2[%c400, %c0_76] : memref<432x24xbf16, #tpu.memory_space<vmem>>, vector<32x8xbf16>
    %c16 = arith.constant 16 : index
    %c0_77 = arith.constant 0 : index
    %266 = vector.load %arg3[%c16, %c0_77] : memref<24x24xf32, #tpu.memory_space<vmem>>, vector<1x24xf32>
    %267 = vector.extract_strided_slice %266 {offsets = [0, 0], sizes = [1, 16], strides = [1, 1]} : vector<1x24xf32> to vector<1x16xf32>
    %268 = vector.extract_strided_slice %266 {offsets = [0, 16], sizes = [1, 8], strides = [1, 1]} : vector<1x24xf32> to vector<1x8xf32>
    %cst_78 = arith.constant dense<0.000000e+00> : vector<64x24xf32>
    %269 = tpu.matmul %261, %262, %cst_78 {dimension_numbers = #tpu.dot_dimension_numbers<[1], [0], [0], [1], [0, 0, 1, 1], [], []>} : vector<64x32xbf16>, vector<32x24xbf16>, vector<64x24xf32> -> vector<64x24xf32>
    %270 = vector.extract_strided_slice %269 {offsets = [0, 0], sizes = [64, 8], strides = [1, 1]} : vector<64x24xf32> to vector<64x8xf32>
    %cst_79 = arith.constant 0.000000e+00 : f32
    %271 = vector.broadcast %cst_79 : f32 to vector<64x8xf32>
    %272 = arith.cmpf oge, %270, %271 : vector<64x8xf32>
    %cst_80 = arith.constant 0.00999999977 : f32
    %273 = vector.broadcast %cst_80 : f32 to vector<64x8xf32>
    %274 = arith.mulf %273, %270 : vector<64x8xf32>
    %275 = arith.select %272, %270, %274 : vector<64x8xi1>, vector<64x8xf32>
    %cst_81 = arith.constant dense<0.000000e+00> : vector<8xf32>
    %276 = vector.multi_reduction <add>, %275, %cst_81 [0] : vector<64x8xf32> to vector<8xf32>
    %277 = vector.shape_cast %276 : vector<8xf32> to vector<1x8xf32>
    %cst_82 = arith.constant 6.400000e+01 : f32
    %278 = vector.broadcast %cst_82 : f32 to vector<1x8xf32>
    %279 = arith.divf %277, %278 : vector<1x8xf32>
    %280 = arith.mulf %275, %275 : vector<64x8xf32>
    %cst_83 = arith.constant dense<0.000000e+00> : vector<8xf32>
    %281 = vector.multi_reduction <add>, %280, %cst_83 [0] : vector<64x8xf32> to vector<8xf32>
    %282 = vector.shape_cast %281 : vector<8xf32> to vector<1x8xf32>
    %cst_84 = arith.constant 6.400000e+01 : f32
    %283 = vector.broadcast %cst_84 : f32 to vector<1x8xf32>
    %284 = arith.divf %282, %283 : vector<1x8xf32>
    %285 = arith.mulf %279, %279 : vector<1x8xf32>
    %286 = arith.subf %284, %285 : vector<1x8xf32>
    %cst_85 = arith.constant 0.000000e+00 : f32
    %287 = vector.broadcast %cst_85 : f32 to vector<1x8xf32>
    %288 = arith.maximumf %286, %287 : vector<1x8xf32>
    %289 = vector.broadcast %279 : vector<1x8xf32> to vector<64x8xf32>
    %290 = arith.subf %275, %289 : vector<64x8xf32>
    %cst_86 = arith.constant 9.99999974E-6 : f32
    %291 = vector.broadcast %cst_86 : f32 to vector<1x8xf32>
    %292 = arith.addf %288, %291 : vector<1x8xf32>
    %293 = math.rsqrt %292 : vector<1x8xf32>
    %294 = vector.broadcast %293 : vector<1x8xf32> to vector<64x8xf32>
    %295 = arith.mulf %290, %294 : vector<64x8xf32>
    %296 = vector.extract_strided_slice %269 {offsets = [0, 8], sizes = [64, 16], strides = [1, 1]} : vector<64x24xf32> to vector<64x16xf32>
    %297 = arith.truncf %295 : vector<64x8xf32> to vector<64x8xbf16>
    %cst_87 = arith.constant dense<0.000000e+00> : vector<64x8xf32>
    %298 = tpu.matmul %297, %263, %cst_87 {dimension_numbers = #tpu.dot_dimension_numbers<[1], [0], [0], [1], [0, 0, 1, 1], [], []>} : vector<64x8xbf16>, vector<8x8xbf16>, vector<64x8xf32> -> vector<64x8xf32>
    %cst_88 = arith.constant 0.000000e+00 : f32
    %299 = vector.broadcast %cst_88 : f32 to vector<64x8xf32>
    %300 = arith.cmpf oge, %298, %299 : vector<64x8xf32>
    %cst_89 = arith.constant 0.00999999977 : f32
    %301 = vector.broadcast %cst_89 : f32 to vector<64x8xf32>
    %302 = arith.mulf %301, %298 : vector<64x8xf32>
    %303 = arith.select %300, %298, %302 : vector<64x8xi1>, vector<64x8xf32>
    %cst_90 = arith.constant dense<0.000000e+00> : vector<8xf32>
    %304 = vector.multi_reduction <add>, %303, %cst_90 [0] : vector<64x8xf32> to vector<8xf32>
    %305 = vector.shape_cast %304 : vector<8xf32> to vector<1x8xf32>
    %cst_91 = arith.constant 6.400000e+01 : f32
    %306 = vector.broadcast %cst_91 : f32 to vector<1x8xf32>
    %307 = arith.divf %305, %306 : vector<1x8xf32>
    %308 = arith.mulf %303, %303 : vector<64x8xf32>
    %cst_92 = arith.constant dense<0.000000e+00> : vector<8xf32>
    %309 = vector.multi_reduction <add>, %308, %cst_92 [0] : vector<64x8xf32> to vector<8xf32>
    %310 = vector.shape_cast %309 : vector<8xf32> to vector<1x8xf32>
    %cst_93 = arith.constant 6.400000e+01 : f32
    %311 = vector.broadcast %cst_93 : f32 to vector<1x8xf32>
    %312 = arith.divf %310, %311 : vector<1x8xf32>
    %313 = arith.mulf %307, %307 : vector<1x8xf32>
    %314 = arith.subf %312, %313 : vector<1x8xf32>
    %cst_94 = arith.constant 0.000000e+00 : f32
    %315 = vector.broadcast %cst_94 : f32 to vector<1x8xf32>
    %316 = arith.maximumf %314, %315 : vector<1x8xf32>
    %317 = vector.broadcast %307 : vector<1x8xf32> to vector<64x8xf32>
    %318 = arith.subf %303, %317 : vector<64x8xf32>
    %cst_95 = arith.constant 9.99999974E-6 : f32
    %319 = vector.broadcast %cst_95 : f32 to vector<1x8xf32>
    %320 = arith.addf %316, %319 : vector<1x8xf32>
    %321 = math.rsqrt %320 : vector<1x8xf32>
    %322 = vector.broadcast %321 : vector<1x8xf32> to vector<64x8xf32>
    %323 = arith.mulf %318, %322 : vector<64x8xf32>
    %324 = arith.truncf %323 : vector<64x8xf32> to vector<64x8xbf16>
    %325 = tpu.concatenate %324, %3 in 1 : vector<64x8xbf16>, vector<64x16xbf16> -> vector<64x24xbf16>
    %326 = arith.truncf %296 : vector<64x16xf32> to vector<64x16xbf16>
    %327 = tpu.concatenate %4, %326 in 1 : vector<64x8xbf16>, vector<64x16xbf16> -> vector<64x24xbf16>
    %328 = tpu.concatenate %325, %327 in 0 : vector<64x24xbf16>, vector<64x24xbf16> -> vector<128x24xbf16>
    %cst_96 = arith.constant dense<0.000000e+00> : vector<64x24xf32>
    %329 = tpu.matmul %0, %328, %cst_96 {dimension_numbers = #tpu.dot_dimension_numbers<[1], [0], [0], [1], [0, 0, 1, 1], [], []>} : vector<64x128xbf16>, vector<128x24xbf16>, vector<64x24xf32> -> vector<64x24xf32>
    %330 = vector.extract_strided_slice %329 {offsets = [0, 0], sizes = [64, 8], strides = [1, 1]} : vector<64x24xf32> to vector<64x8xf32>
    %331 = vector.extract_strided_slice %329 {offsets = [0, 8], sizes = [64, 16], strides = [1, 1]} : vector<64x24xf32> to vector<64x16xf32>
    %332 = vector.broadcast %267 : vector<1x16xf32> to vector<64x16xf32>
    %333 = arith.addf %331, %332 : vector<64x16xf32>
    %334 = vector.extract_strided_slice %295 {offsets = [0, 0], sizes = [64, 1], strides = [1, 1]} : vector<64x8xf32> to vector<64x1xf32>
    %335 = vector.broadcast %334 : vector<64x1xf32> to vector<64x8xf32>
    %336 = arith.mulf %335, %330 : vector<64x8xf32>
    %337 = vector.extract_strided_slice %295 {offsets = [0, 1], sizes = [64, 1], strides = [1, 1]} : vector<64x8xf32> to vector<64x1xf32>
    %338 = vector.broadcast %337 : vector<64x1xf32> to vector<64x8xf32>
    %339 = arith.mulf %338, %330 : vector<64x8xf32>
    %340 = vector.extract_strided_slice %295 {offsets = [0, 2], sizes = [64, 1], strides = [1, 1]} : vector<64x8xf32> to vector<64x1xf32>
    %341 = vector.broadcast %340 : vector<64x1xf32> to vector<64x8xf32>
    %342 = arith.mulf %341, %330 : vector<64x8xf32>
    %343 = vector.extract_strided_slice %295 {offsets = [0, 3], sizes = [64, 1], strides = [1, 1]} : vector<64x8xf32> to vector<64x1xf32>
    %344 = vector.broadcast %343 : vector<64x1xf32> to vector<64x8xf32>
    %345 = arith.mulf %344, %330 : vector<64x8xf32>
    %346 = vector.extract_strided_slice %295 {offsets = [0, 4], sizes = [64, 1], strides = [1, 1]} : vector<64x8xf32> to vector<64x1xf32>
    %347 = vector.broadcast %346 : vector<64x1xf32> to vector<64x8xf32>
    %348 = arith.mulf %347, %330 : vector<64x8xf32>
    %349 = vector.extract_strided_slice %295 {offsets = [0, 5], sizes = [64, 1], strides = [1, 1]} : vector<64x8xf32> to vector<64x1xf32>
    %350 = vector.broadcast %349 : vector<64x1xf32> to vector<64x8xf32>
    %351 = arith.mulf %350, %330 : vector<64x8xf32>
    %352 = vector.extract_strided_slice %295 {offsets = [0, 6], sizes = [64, 1], strides = [1, 1]} : vector<64x8xf32> to vector<64x1xf32>
    %353 = vector.broadcast %352 : vector<64x1xf32> to vector<64x8xf32>
    %354 = arith.mulf %353, %330 : vector<64x8xf32>
    %355 = vector.extract_strided_slice %295 {offsets = [0, 7], sizes = [64, 1], strides = [1, 1]} : vector<64x8xf32> to vector<64x1xf32>
    %356 = vector.broadcast %355 : vector<64x1xf32> to vector<64x8xf32>
    %357 = arith.mulf %356, %330 : vector<64x8xf32>
    %358 = tpu.concatenate %336, %339, %342, %345, %348, %351, %354, %357 in 1 : vector<64x8xf32>, vector<64x8xf32>, vector<64x8xf32>, vector<64x8xf32>, vector<64x8xf32>, vector<64x8xf32>, vector<64x8xf32>, vector<64x8xf32> -> vector<64x64xf32>
    %359 = arith.truncf %358 : vector<64x64xf32> to vector<64x64xbf16>
    %cst_97 = arith.constant dense<0.000000e+00> : vector<64x16xf32>
    %360 = tpu.matmul %359, %264, %cst_97 {dimension_numbers = #tpu.dot_dimension_numbers<[1], [0], [0], [1], [0, 0, 1, 1], [], []>} : vector<64x64xbf16>, vector<64x16xbf16>, vector<64x16xf32> -> vector<64x16xf32>
    %361 = tpu.concatenate %360, %333 in 1 : vector<64x16xf32>, vector<64x16xf32> -> vector<64x32xf32>
    %362 = arith.addf %361, %255 : vector<64x32xf32>
    %363 = arith.truncf %362 : vector<64x32xf32> to vector<64x32xbf16>
    %cst_98 = arith.constant dense<0.000000e+00> : vector<64x8xf32>
    %364 = tpu.matmul %363, %265, %cst_98 {dimension_numbers = #tpu.dot_dimension_numbers<[1], [0], [0], [1], [0, 0, 1, 1], [], []>} : vector<64x32xbf16>, vector<32x8xbf16>, vector<64x8xf32> -> vector<64x8xf32>
    %365 = arith.addf %260, %364 : vector<64x8xf32>
    %366 = vector.broadcast %268 : vector<1x8xf32> to vector<64x8xf32>
    %367 = arith.addf %365, %366 : vector<64x8xf32>
    %cst_99 = arith.constant dense<0xFF800000> : vector<64xf32>
    %368 = vector.multi_reduction <maximumf>, %367, %cst_99 [1] : vector<64x8xf32> to vector<64xf32>
    %369 = vector.shape_cast %368 : vector<64xf32> to vector<64x1xf32>
    %370 = vector.broadcast %369 : vector<64x1xf32> to vector<64x8xf32>
    %371 = arith.subf %367, %370 : vector<64x8xf32>
    %372 = math.exp %371 : vector<64x8xf32>
    %cst_100 = arith.constant dense<0.000000e+00> : vector<64xf32>
    %373 = vector.multi_reduction <add>, %372, %cst_100 [1] : vector<64x8xf32> to vector<64xf32>
    %374 = vector.shape_cast %373 : vector<64xf32> to vector<64x1xf32>
    %375 = math.log %374 : vector<64x1xf32>
    %376 = vector.broadcast %375 : vector<64x1xf32> to vector<64x8xf32>
    %377 = arith.subf %371, %376 : vector<64x8xf32>
    %c0_101 = arith.constant 0 : index
    %c0_102 = arith.constant 0 : index
    %378 = vector.load %arg4[%c0_101, %c0_102] : memref<64x8xf32, #tpu.memory_space<vmem>>, vector<64x8xf32>
    tpu.vector_store %arg4[%c0_101, %c0_102], %377 {strides = array<i32>} : memref<64x8xf32, #tpu.memory_space<vmem>>, vector<64x8xf32>,
    return
  }
}

</mosaic_0001>

<llo_original>
// kernel: foggnn_forward.1
$region0: #{foggnn_forward.1}
  #allocation0 [shape = 'u32[]', space=smem, size = 0x4, offset = 0x4, fixed_abs, tag = 'smem constant byte address 0x4 - core index']
  #allocation1 [shape = 'u32[144,128]{1,0:T(1,128)}', space=vmem, size = 0x12000, scoped, tag = 'internal scratch']
  %s0 = inlined_call_operand.vmem [shape: bf16[64,16], index: 0, kind: input, shape index: {}]
  %s1 = inlined_call_operand.vmem [shape: bf16[64,128], index: 1, kind: input, shape index: {}]
  %s2 = inlined_call_operand.vmem [shape: bf16[432,24], index: 2, kind: input, shape index: {}]
  %s3 = inlined_call_operand.vmem [shape: f32[24,24], index: 3, kind: input, shape index: {}]
  %s4 = inlined_call_operand.vmem [shape: f32[64,8], index: 4, kind: output, shape index: {}]
  %s5 = sld [smem:[#allocation0]]
  $region26: #{foggnn_forward.1} parent=0
    _
  %s7 = ssub.s32 1, %s5
  %s8 = scalar_select 0, %s7, %s5
  // Predicated region
  $region2: #{foggnn_forward.1} parent=0 // pred_check
    _
  $region3: #{foggnn_forward.1} parent=0 // pred_check_branch
    %10 = sbr.rel (0) target = $region5
  $region4: #{foggnn_forward.1} parent=0 // pred_region
    _
  $region5: #{foggnn_forward.1} parent=0 // pred_fallthru
    _
  // Predicated region
  $region6: #{foggnn_forward.1} parent=0 // pred_check
    _
  $region7: #{foggnn_forward.1} parent=0 // pred_check_branch
    %12 = sbr.rel (0) target = $region9
  $region8: #{foggnn_forward.1} parent=0 // pred_region
    _
  $region9: #{foggnn_forward.1} parent=0 // pred_fallthru
    _
  // Predicated region
  $region10: #{foggnn_forward.1} parent=0 // pred_check
    _
  $region11: #{foggnn_forward.1} parent=0 // pred_check_branch
    %14 = sbr.rel (0) target = $region13
  $region12: #{foggnn_forward.1} parent=0 // pred_region
    _
  $region13: #{foggnn_forward.1} parent=0 // pred_fallthru
    _
  // Predicated region
  $region14: #{foggnn_forward.1} parent=0 // pred_check
    _
  $region15: #{foggnn_forward.1} parent=0 // pred_check_branch
    %16 = sbr.rel (0) target = $region17
  $region16: #{foggnn_forward.1} parent=0 // pred_region
    _
  $region17: #{foggnn_forward.1} parent=0 // pred_fallthru
    _
  %v18 = vld [vmem:[%s1] sm:$0xf]
  %v19 = vld [vmem:[%s1 + $0x4] sm:$0xf]
  %v20 = vld [vmem:[%s1 + $0x8] sm:$0xf]
  %v21 = vld [vmem:[%s1 + $0xc] sm:$0xf]
  %v22 = vld [vmem:[%s1 + $0x10] sm:$0xf]
  %v23 = vld [vmem:[%s1 + $0x14] sm:$0xf]
  %v24 = vld [vmem:[%s1 + $0x18] sm:$0xf]
  %v25 = vld [vmem:[%s1 + $0x1c] sm:$0xf]
  %v26 = vld [vmem:[%s0] sm:$0xf]
  %v27 = vld [vmem:[%s0 + $0x4] sm:$0xf]
  %v28 = vld [vmem:[%s0 + $0x8] sm:$0xf]
  %v29 = vld [vmem:[%s0 + $0xc] sm:$0xf]
  %v30 = vld [vmem:[%s0 + $0x10] sm:$0xf]
  %v31 = vld [vmem:[%s0 + $0x14] sm:$0xf]
  %v32 = vld [vmem:[%s0 + $0x18] sm:$0xf]
  %v33 = vld [vmem:[%s0 + $0x1c] sm:$0xf]
  %v34 = vld [vmem:[%s2] sm:$0xf]
  %v35 = vld [vmem:[%s2 + $0x4] sm:$0xf]
  %v36 = vld [vmem:[%s2 + $0x10] sm:$0xf]
  %v37 = vld [vmem:[%s2 + $0x18] sm:$0xf]
  %v38 = vld [vmem:[%s2 + $0x1c] sm:$0xf]
  %v39 = vld [vmem:[%s2 + $0x20] sm:$0xf]
  %v40 = vld [vmem:[%s2 + $0x24] sm:$0xf]
  %v41 = vld [vmem:[%s2 + $0x28] sm:$0xf]
  %v42 = vld [vmem:[%s2 + $0x2c] sm:$0xf]
  %v43 = vld [vmem:[%s2 + $0x30] sm:$0xf]
  %v44 = vld [vmem:[%s2 + $0x34] sm:$0xf]
  %v45 = vld [vmem:[%s2 + $0x38] sm:$0xf]
  %v46 = vld [vmem:[%s2 + $0x3c] sm:$0xf]
  %v47 = vld [vmem:[%s2 + $0x40] sm:$0xf]
  %v48 = vld [vmem:[%s2 + $0x44] sm:$0xf]
  %v49 = vld [vmem:[%s3] sm:$0x1]
  %v58 = vunpack.c.l.b16 %v26
  %v59 = vunpack.c.l.b16 %v27
  %v60 = vunpack.c.l.b16 %v28
  %v61 = vunpack.c.l.b16 %v29
  %v62 = vunpack.c.l.b16 %v30
  %v63 = vunpack.c.l.b16 %v31
  %v64 = vunpack.c.l.b16 %v32
  %v65 = vunpack.c.l.b16 %v33
  %v66 = vpack.c.b16 %v59, %v58
  %v67 = vpack.c.b16 %v61, %v60
  %v68 = vpack.c.b16 %v63, %v62
  %v69 = vpack.c.b16 %v65, %v64
  %v72 = vunpack.c.l.b16 %v34
  %v73 = vunpack.c.l.b16 %v35
  %v74 = vpack.c.b16 %v73, %v72
  %vm76 = vcmask 130048
  %v78 = vsel %vm76, %v66, 0
  %v81 = vsel %vm76, %v67, 0
  %v84 = vsel %vm76, %v68, 0
  %v87 = vsel %vm76, %v69, 0
  %89 = vmatprep.subr.bf16.mxu0 0
  %90 = vmatpush1.bf16.msra.mxu0 %v74
  %91 = vmatprep.subr.bf16.mxu0 0
  %92 = vmatpush1.bf16.msra.mxu0 0
  %93 = vmatprep.subr.bf16.mxu0 0
  %94 = vmatpush1.bf16.msra.mxu0 0
  %95 = vmatprep.subr.bf16.mxu0 0
  %96 = vmatpush1.bf16.msra.mxu0 0
  %97 = vmatprep.subr.bf16.mxu0 0
  %98 = vmatpush1.bf16.msra.mxu0 0
  %99 = vmatprep.subr.bf16.mxu0 0
  %100 = vmatpush1.bf16.msra.mxu0 0
  %101 = vmatprep.subr.bf16.mxu0 0
  %102 = vmatpush1.bf16.msra.mxu0 0
  %103 = vmatprep.subr.bf16.mxu0 0
  %104 = vmatpush1.bf16.msra.mxu0 0
  %105 = vmatprep.subr.bf16.mxu0 0
  %106 = vmatpush1.bf16.msra.mxu0 0
  %107 = vmatprep.subr.bf16.mxu0 0
  %108 = vmatpush1.bf16.msra.mxu0 0
  %109 = vmatprep.subr.bf16.mxu0 0
  %110 = vmatpush1.bf16.msra.mxu0 0
  %111 = vmatprep.subr.bf16.mxu0 0
  %112 = vmatpush1.bf16.msra.mxu0 0
  %113 = vmatprep.subr.bf16.mxu0 0
  %114 = vmatpush1.bf16.msra.mxu0 0
  %115 = vmatprep.subr.bf16.mxu0 0
  %116 = vmatpush1.bf16.msra.mxu0 0
  %117 = vmatprep.subr.bf16.mxu0 0
  %118 = vmatpush1.bf16.msra.mxu0 0
  %119 = vmatprep.subr.bf16.mxu0 0
  %120 = vmatpush1.bf16.msra.mxu0 0
  %121 = vmatprep.mubr.bf16.mxu0 0
  %122 = vmatmul.mubr.bf16.gmra.mrb[0].mxu0 %v78
  %v123 = vpop.f32.mrb[0].mxu0
  %v124 = vadd.f32 0.0, %v123
  %v125 = vpop.f32.mrb[0].mxu0
  %v126 = vpop.f32.mrb[0].mxu0
  %v127 = vadd.f32 0.0, %v126
  %v128 = vpop.f32.mrb[0].mxu0
  %129 = vmatprep.mubr.bf16.mxu0 0
  %130 = vmatmul.mubr.bf16.gmra.mrb[0].mxu0 %v81
  %v131 = vpop.f32.mrb[0].mxu0
  %v132 = vadd.f32 0.0, %v131
  %v133 = vpop.f32.mrb[0].mxu0
  %v134 = vpop.f32.mrb[0].mxu0
  %v135 = vadd.f32 0.0, %v134
  %v136 = vpop.f32.mrb[0].mxu0
  %137 = vmatprep.mubr.bf16.mxu0 0
  %138 = vmatmul.mubr.bf16.gmra.mrb[0].mxu0 %v84
  %v139 = vpop.f32.mrb[0].mxu0
  %v140 = vadd.f32 0.0, %v139
  %v141 = vpop.f32.mrb[0].mxu0
  %v142 = vpop.f32.mrb[0].mxu0
  %v143 = vadd.f32 0.0, %v142
  %v144 = vpop.f32.mrb[0].mxu0
  %145 = vmatprep.mubr.bf16.mxu0 0
  %146 = vmatmul.mubr.bf16.gmra.mrb[0].mxu0 %v87
  %v147 = vpop.f32.mrb[0].mxu0
  %v148 = vadd.f32 0.0, %v147
  %v149 = vpop.f32.mrb[0].mxu0
  %v150 = vpop.f32.mrb[0].mxu0
  %v151 = vadd.f32 0.0, %v150
  %v152 = vpop.f32.mrb[0].mxu0
  %153 = vdwg.mxu0
  %vm154 = vcmp.ge.f32.partialorder %v124, 0.0
  %vm155 = vcmp.ge.f32.partialorder %v127, 0.0
  %vm156 = vcmp.ge.f32.partialorder %v132, 0.0
  %vm157 = vcmp.ge.f32.partialorder %v135, 0.0
  %vm158 = vcmp.ge.f32.partialorder %v140, 0.0
  %vm159 = vcmp.ge.f32.partialorder %v143, 0.0
  %vm160 = vcmp.ge.f32.partialorder %v148, 0.0
  %vm161 = vcmp.ge.f32.partialorder %v151, 0.0
  %v162 = vmul.f32 %v124, 0.01
  %v163 = vmul.f32 %v127, 0.01
  %v164 = vmul.f32 %v132, 0.01
  %v165 = vmul.f32 %v135, 0.01
  %v166 = vmul.f32 %v140, 0.01
  %v167 = vmul.f32 %v143, 0.01
  %v168 = vmul.f32 %v148, 0.01
  %v169 = vmul.f32 %v151, 0.01
  %v170 = vsel %vm154, %v124, %v162
  %v171 = vsel %vm155, %v127, %v163
  %v172 = vsel %vm156, %v132, %v164
  %v173 = vsel %vm157, %v135, %v165
  %v174 = vsel %vm158, %v140, %v166
  %v175 = vsel %vm159, %v143, %v167
  %v176 = vsel %vm160, %v148, %v168
  %v177 = vsel %vm161, %v151, %v169
  %vm178 = vcmask 64512
  %v179 = vsel %vm178, %v170, 0.0
  %v180 = vsel %vm178, %v171, 0.0
  %v181 = vadd.f32 %v179, %v180
  %v182 = vsel %vm178, %v172, 0.0
  %v183 = vadd.f32 %v181, %v182
  %v184 = vsel %vm178, %v173, 0.0
  %v185 = vadd.f32 %v183, %v184
  %v186 = vsel %vm178, %v174, 0.0
  %v187 = vadd.f32 %v185, %v186
  %v188 = vsel %vm178, %v175, 0.0
  %v189 = vadd.f32 %v187, %v188
  %v190 = vsel %vm178, %v176, 0.0
  %v191 = vadd.f32 %v189, %v190
  %v192 = vsel %vm178, %v177, 0.0
  %v193 = vadd.f32 %v191, %v192
  %v194 = vrot.slane %v193, 4
  %v195 = vadd.f32 %v193, %v194
  %v196 = vrot.slane %v195, 2
  %v197 = vadd.f32 %v195, %v196
  %v198 = vrot.slane %v197, 1
  %v199 = vadd.f32 %v197, %v198
  %v200 = vrcp.pop 64.0
  %v201 = vmul.f32 %v199, %v200
  %v202 = vmul.f32 %v170, %v170
  %v203 = vmul.f32 %v171, %v171
  %v204 = vmul.f32 %v172, %v172
  %v205 = vmul.f32 %v173, %v173
  %v206 = vmul.f32 %v174, %v174
  %v207 = vmul.f32 %v175, %v175
  %v208 = vmul.f32 %v176, %v176
  %v209 = vmul.f32 %v177, %v177
  %v210 = vsel %vm178, %v202, 0.0
  %v211 = vsel %vm178, %v203, 0.0
  %v212 = vadd.f32 %v210, %v211
  %v213 = vsel %vm178, %v204, 0.0
  %v214 = vadd.f32 %v212, %v213
  %v215 = vsel %vm178, %v205, 0.0
  %v216 = vadd.f32 %v214, %v215
  %v217 = vsel %vm178, %v206, 0.0
  %v218 = vadd.f32 %v216, %v217
  %v219 = vsel %vm178, %v207, 0.0
  %v220 = vadd.f32 %v218, %v219
  %v221 = vsel %vm178, %v208, 0.0
  %v222 = vadd.f32 %v220, %v221
  %v223 = vsel %vm178, %v209, 0.0
  %v224 = vadd.f32 %v222, %v223
  %v225 = vrot.slane %v224, 4
  %v226 = vadd.f32 %v224, %v225
  %v227 = vrot.slane %v226, 2
  %v228 = vadd.f32 %v226, %v227
  %v229 = vrot.slane %v228, 1
  %v230 = vadd.f32 %v228, %v229
  %v231 = vmul.f32 %v230, %v200
  %v232 = vmul.f32 %v201, %v201
  %v233 = vsub.f32 %v231, %v232
  %v234 = vmax.f32 %v233, 0.0
  %v235 = vsub.f32 %v170, %v201
  %v236 = vsub.f32 %v171, %v201
  %v237 = vsub.f32 %v172, %v201
  %v238 = vsub.f32 %v173, %v201
  %v239 = vsub.f32 %v174, %v201
  %v240 = vsub.f32 %v175, %v201
  %v241 = vsub.f32 %v176, %v201
  %v242 = vsub.f32 %v177, %v201
  %v243 = vadd.f32 %v234, 1e-05
  %v244 = vrsqrt.pop %v243
  %v245 = vmul.f32 %v235, %v244
  %v246 = vmul.f32 %v236, %v244
  %v247 = vmul.f32 %v237, %v244
  %v248 = vmul.f32 %v238, %v244
  %v249 = vmul.f32 %v239, %v244
  %v250 = vmul.f32 %v240, %v244
  %v251 = vmul.f32 %v241, %v244
  %v252 = vmul.f32 %v242, %v244
  %v253 = vpack.c.bf16 %v246, %v245
  %v254 = vpack.c.bf16 %v248, %v247
  %v255 = vpack.c.bf16 %v250, %v249
  %v256 = vpack.c.bf16 %v252, %v251
  %v258 = vsel %vm178, %v253, 0
  %v261 = vsel %vm178, %v254, 0
  %v264 = vsel %vm178, %v255, 0
  %v267 = vsel %vm178, %v256, 0
  %vm269 = vcmask 1043456
  %v271 = vsel %vm269, %v36, 0
  %273 = vmatprep.subr.bf16.mxu0 0
  %274 = vmatpush1.bf16.msra.mxu0 %v271
  %275 = vmatprep.subr.bf16.mxu0 0
  %276 = vmatpush1.bf16.msra.mxu0 0
  %277 = vmatprep.subr.bf16.mxu0 0
  %278 = vmatpush1.bf16.msra.mxu0 0
  %279 = vmatprep.subr.bf16.mxu0 0
  %280 = vmatpush1.bf16.msra.mxu0 0
  %281 = vmatprep.subr.bf16.mxu0 0
  %282 = vmatpush1.bf16.msra.mxu0 0
  %283 = vmatprep.subr.bf16.mxu0 0
  %284 = vmatpush1.bf16.msra.mxu0 0
  %285 = vmatprep.subr.bf16.mxu0 0
  %286 = vmatpush1.bf16.msra.mxu0 0
  %287 = vmatprep.subr.bf16.mxu0 0
  %288 = vmatpush1.bf16.msra.mxu0 0
  %289 = vmatprep.subr.bf16.mxu0 0
  %290 = vmatpush1.bf16.msra.mxu0 0
  %291 = vmatprep.subr.bf16.mxu0 0
  %292 = vmatpush1.bf16.msra.mxu0 0
  %293 = vmatprep.subr.bf16.mxu0 0
  %294 = vmatpush1.bf16.msra.mxu0 0
  %295 = vmatprep.subr.bf16.mxu0 0
  %296 = vmatpush1.bf16.msra.mxu0 0
  %297 = vmatprep.subr.bf16.mxu0 0
  %298 = vmatpush1.bf16.msra.mxu0 0
  %299 = vmatprep.subr.bf16.mxu0 0
  %300 = vmatpush1.bf16.msra.mxu0 0
  %301 = vmatprep.subr.bf16.mxu0 0
  %302 = vmatpush1.bf16.msra.mxu0 0
  %303 = vmatprep.subr.bf16.mxu0 0
  %304 = vmatpush1.bf16.msra.mxu0 0
  %305 = vmatprep.mubr.bf16.mxu0 0
  %306 = vmatmul.mubr.bf16.gmra.mrb[0].mxu0 %v258
  %v307 = vpop.f32.mrb[0].mxu0
  %v308 = vadd.f32 0.0, %v307
  %v309 = vpop.f32.mrb[0].mxu0
  %v310 = vpop.f32.mrb[0].mxu0
  %v311 = vadd.f32 0.0, %v310
  %v312 = vpop.f32.mrb[0].mxu0
  %313 = vmatprep.mubr.bf16.mxu0 0
  %314 = vmatmul.mubr.bf16.gmra.mrb[0].mxu0 %v261
  %v315 = vpop.f32.mrb[0].mxu0
  %v316 = vadd.f32 0.0, %v315
  %v317 = vpop.f32.mrb[0].mxu0
  %v318 = vpop.f32.mrb[0].mxu0
  %v319 = vadd.f32 0.0, %v318
  %v320 = vpop.f32.mrb[0].mxu0
  %321 = vmatprep.mubr.bf16.mxu0 0
  %322 = vmatmul.mubr.bf16.gmra.mrb[0].mxu0 %v264
  %v323 = vpop.f32.mrb[0].mxu0
  %v324 = vadd.f32 0.0, %v323
  %v325 = vpop.f32.mrb[0].mxu0
  %v326 = vpop.f32.mrb[0].mxu0
  %v327 = vadd.f32 0.0, %v326
  %v328 = vpop.f32.mrb[0].mxu0
  %329 = vmatprep.mubr.bf16.mxu0 0
  %330 = vmatmul.mubr.bf16.gmra.mrb[0].mxu0 %v267
  %v331 = vpop.f32.mrb[0].mxu0
  %v332 = vadd.f32 0.0, %v331
  %v333 = vpop.f32.mrb[0].mxu0
  %v334 = vpop.f32.mrb[0].mxu0
  %v335 = vadd.f32 0.0, %v334
  %v336 = vpop.f32.mrb[0].mxu0
  %337 = vdwg.mxu0
  %vm338 = vcmp.ge.f32.partialorder %v308, 0.0
  %vm339 = vcmp.ge.f32.partialorder %v311, 0.0
  %vm340 = vcmp.ge.f32.partialorder %v316, 0.0
  %vm341 = vcmp.ge.f32.partialorder %v319, 0.0
  %vm342 = vcmp.ge.f32.partialorder %v324, 0.0
  %vm343 = vcmp.ge.f32.partialorder %v327, 0.0
  %vm344 = vcmp.ge.f32.partialorder %v332, 0.0
  %vm345 = vcmp.ge.f32.partialorder %v335, 0.0
  %v346 = vmul.f32 %v308, 0.01
  %v347 = vmul.f32 %v311, 0.01
  %v348 = vmul.f32 %v316, 0.01
  %v349 = vmul.f32 %v319, 0.01
  %v350 = vmul.f32 %v324, 0.01
  %v351 = vmul.f32 %v327, 0.01
  %v352 = vmul.f32 %v332, 0.01
  %v353 = vmul.f32 %v335, 0.01
  %v354 = vsel %vm338, %v308, %v346
  %v355 = vsel %vm339, %v311, %v347
  %v356 = vsel %vm340, %v316, %v348
  %v357 = vsel %vm341, %v319, %v349
  %v358 = vsel %vm342, %v324, %v350
  %v359 = vsel %vm343, %v327, %v351
  %v360 = vsel %vm344, %v332, %v352
  %v361 = vsel %vm345, %v335, %v353
  %v362 = vsel %vm178, %v354, 0.0
  %v363 = vsel %vm178, %v355, 0.0
  %v364 = vadd.f32 %v362, %v363
  %v365 = vsel %vm178, %v356, 0.0
  %v366 = vadd.f32 %v364, %v365
  %v367 = vsel %vm178, %v357, 0.0
  %v368 = vadd.f32 %v366, %v367
  %v369 = vsel %vm178, %v358, 0.0
  %v370 = vadd.f32 %v368, %v369
  %v371 = vsel %vm178, %v359, 0.0
  %v372 = vadd.f32 %v370, %v371
  %v373 = vsel %vm178, %v360, 0.0
  %v374 = vadd.f32 %v372, %v373
  %v375 = vsel %vm178, %v361, 0.0
  %v376 = vadd.f32 %v374, %v375
  %v377 = vrot.slane %v376, 4
  %v378 = vadd.f32 %v376, %v377
  %v379 = vrot.slane %v378, 2
  %v380 = vadd.f32 %v378, %v379
  %v381 = vrot.slane %v380, 1
  %v382 = vadd.f32 %v380, %v381
  %v383 = vmul.f32 %v382, %v200
  %v384 = vmul.f32 %v354, %v354
  %v385 = vmul.f32 %v355, %v355
  %v386 = vmul.f32 %v356, %v356
  %v387 = vmul.f32 %v357, %v357
  %v388 = vmul.f32 %v358, %v358
  %v389 = vmul.f32 %v359, %v359
  %v390 = vmul.f32 %v360, %v360
  %v391 = vmul.f32 %v361, %v361
  %v392 = vsel %vm178, %v384, 0.0
  %v393 = vsel %vm178, %v385, 0.0
  %v394 = vadd.f32 %v392, %v393
  %v395 = vsel %vm178, %v386, 0.0
  %v396 = vadd.f32 %v394, %v395
  %v397 = vsel %vm178, %v387, 0.0
  %v398 = vadd.f32 %v396, %v397
  %v399 = vsel %vm178, %v388, 0.0
  %v400 = vadd.f32 %v398, %v399
  %v401 = vsel %vm178, %v389, 0.0
  %v402 = vadd.f32 %v400, %v401
  %v403 = vsel %vm178, %v390, 0.0
  %v404 = vadd.f32 %v402, %v403
  %v405 = vsel %vm178, %v391, 0.0
  %v406 = vadd.f32 %v404, %v405
  %v407 = vrot.slane %v406, 4
  %v408 = vadd.f32 %v406, %v407
  %v409 = vrot.slane %v408, 2
  %v410 = vadd.f32 %v408, %v409
  %v411 = vrot.slane %v410, 1
  %v412 = vadd.f32 %v410, %v411
  %v413 = vmul.f32 %v412, %v200
  %v414 = vmul.f32 %v383, %v383
  %v415 = vsub.f32 %v413, %v414
  %v416 = vmax.f32 %v415, 0.0
  %v417 = vsub.f32 %v354, %v383
  %v418 = vsub.f32 %v355, %v383
  %v419 = vsub.f32 %v356, %v383
  %v420 = vsub.f32 %v357, %v383
  %v421 = vsub.f32 %v358, %v383
  %v422 = vsub.f32 %v359, %v383
  %v423 = vsub.f32 %v360, %v383
  %v424 = vsub.f32 %v361, %v383
  %v425 = vadd.f32 %v416, 1e-05
  %v426 = vrsqrt.pop %v425
  %v427 = vmul.f32 %v417, %v426
  %v428 = vmul.f32 %v418, %v426
  %v429 = vmul.f32 %v419, %v426
  %v430 = vmul.f32 %v420, %v426
  %v431 = vmul.f32 %v421, %v426
  %v432 = vmul.f32 %v422, %v426
  %v433 = vmul.f32 %v423, %v426
  %v434 = vmul.f32 %v424, %v426
  %v435 = vpack.c.bf16 %v428, %v427
  %v436 = vpack.c.bf16 %v430, %v429
  %v437 = vpack.c.bf16 %v432, %v431
  %v438 = vpack.c.bf16 %v434, %v433
  %v441 = vsel %vm178, %v435, 0
  %v444 = vsel %vm178, %v436, 0
  %v447 = vsel %vm178, %v437, 0
  %v450 = vsel %vm178, %v438, 0
  %v452 = vpack.c.bf16 %v127, %v124
  %v453 = vpack.c.bf16 %v135, %v132
  %v454 = vpack.c.bf16 %v143, %v140
  %v455 = vpack.c.bf16 %v151, %v148
  %v457 = vsel %vm178, 0, %v452
  %v460 = vsel %vm178, 0, %v453
  %v463 = vsel %vm178, 0, %v454
  %v466 = vsel %vm178, 0, %v455
  %v476 = vunpack.c.l.b16 %v18
  %v477 = vunpack.c.l.b16 %v19
  %v478 = vunpack.c.l.b16 %v20
  %v479 = vunpack.c.l.b16 %v21
  %v480 = vunpack.c.l.b16 %v22
  %v481 = vunpack.c.l.b16 %v23
  %v482 = vunpack.c.l.b16 %v24
  %v483 = vunpack.c.l.b16 %v25
  %v484 = vpack.c.b16 %v477, %v476
  %v485 = vpack.c.b16 %v479, %v478
  %v486 = vpack.c.b16 %v481, %v480
  %v487 = vpack.c.b16 %v483, %v482
  %492 = vmatprep.subr.bf16.mxu0 0
  %493 = vmatpush1.bf16.msra.mxu0 %v441
  %494 = vmatprep.subr.bf16.mxu0 0
  %495 = vmatpush1.bf16.msra.mxu0 %v444
  %496 = vmatprep.subr.bf16.mxu0 0
  %497 = vmatpush1.bf16.msra.mxu0 %v447
  %498 = vmatprep.subr.bf16.mxu0 0
  %499 = vmatpush1.bf16.msra.mxu0 %v450
  %500 = vmatprep.subr.bf16.mxu0 0
  %501 = vmatpush1.bf16.msra.mxu0 %v457
  %502 = vmatprep.subr.bf16.mxu0 0
  %503 = vmatpush1.bf16.msra.mxu0 %v460
  %504 = vmatprep.subr.bf16.mxu0 0
  %505 = vmatpush1.bf16.msra.mxu0 %v463
  %506 = vmatprep.subr.bf16.mxu0 0
  %507 = vmatpush1.bf16.msra.mxu0 %v466
  %508 = vmatprep.subr.bf16.mxu0 0
  %509 = vmatpush1.bf16.msra.mxu0 0
  %510 = vmatprep.subr.bf16.mxu0 0
  %511 = vmatpush1.bf16.msra.mxu0 0
  %512 = vmatprep.subr.bf16.mxu0 0
  %513 = vmatpush1.bf16.msra.mxu0 0
  %514 = vmatprep.subr.bf16.mxu0 0
  %515 = vmatpush1.bf16.msra.mxu0 0
  %516 = vmatprep.subr.bf16.mxu0 0
  %517 = vmatpush1.bf16.msra.mxu0 0
  %518 = vmatprep.subr.bf16.mxu0 0
  %519 = vmatpush1.bf16.msra.mxu0 0
  %520 = vmatprep.subr.bf16.mxu0 0
  %521 = vmatpush1.bf16.msra.mxu0 0
  %522 = vmatprep.subr.bf16.mxu0 0
  %523 = vmatpush1.bf16.msra.mxu0 0
  %524 = vmatprep.mubr.bf16.mxu0 0
  %525 = vmatmul.mubr.bf16.gmra.mrb[0].mxu0 %v484
  %v526 = vpop.f32.mrb[0].mxu0
  %v527 = vadd.f32 0.0, %v526
  %v528 = vpop.f32.mrb[0].mxu0
  %v529 = vpop.f32.mrb[0].mxu0
  %v530 = vadd.f32 0.0, %v529
  %v531 = vpop.f32.mrb[0].mxu0
  %532 = vmatprep.mubr.bf16.mxu0 0
  %533 = vmatmul.mubr.bf16.gmra.mrb[0].mxu0 %v485
  %v534 = vpop.f32.mrb[0].mxu0
  %v535 = vadd.f32 0.0, %v534
  %v536 = vpop.f32.mrb[0].mxu0
  %v537 = vpop.f32.mrb[0].mxu0
  %v538 = vadd.f32 0.0, %v537
  %v539 = vpop.f32.mrb[0].mxu0
  %540 = vmatprep.mubr.bf16.mxu0 0
  %541 = vmatmul.mubr.bf16.gmra.mrb[0].mxu0 %v486
  %v542 = vpop.f32.mrb[0].mxu0
  %v543 = vadd.f32 0.0, %v542
  %v544 = vpop.f32.mrb[0].mxu0
  %v545 = vpop.f32.mrb[0].mxu0
  %v546 = vadd.f32 0.0, %v545
  %v547 = vpop.f32.mrb[0].mxu0
  %548 = vmatprep.mubr.bf16.mxu0 0
  %549 = vmatmul.mubr.bf16.gmra.mrb[0].mxu0 %v487
  %v550 = vpop.f32.mrb[0].mxu0
  %v551 = vadd.f32 0.0, %v550
  %v552 = vpop.f32.mrb[0].mxu0
  %v553 = vpop.f32.mrb[0].mxu0
  %v554 = vadd.f32 0.0, %v553
  %v555 = vpop.f32.mrb[0].mxu0
  %556 = vdwg.mxu0
  %v557 = vlaneseq
  %v558 = vshrl.u32 %v557, 7
  %v559 = vsub.s32 0, %v558
  %v560 = vrot.slane %v49, %v559
  %562 = vrot.lane.b32.xlu0 %v560, 8
  %v563 = vpop.permute.xlu0 %562
  %v565 = vadd.f32 %v527, %v563
  %v566 = vadd.f32 %v530, %v563
  %v567 = vadd.f32 %v535, %v563
  %v568 = vadd.f32 %v538, %v563
  %v569 = vadd.f32 %v543, %v563
  %v570 = vadd.f32 %v546, %v563
  %v571 = vadd.f32 %v551, %v563
  %v572 = vadd.f32 %v554, %v563
  %574 = vset.pattern.permute.xlu0 0
  %575 = vperm.xlu0 %574, %v245
  %v576 = vpop.permute.xlu0 %575
  %579 = vset.pattern.permute.xlu0 0
  %580 = vperm.xlu0 %579, %v246
  %v581 = vpop.permute.xlu0 %580
  %584 = vset.pattern.permute.xlu0 0
  %585 = vperm.xlu0 %584, %v247
  %v586 = vpop.permute.xlu0 %585
  %589 = vset.pattern.permute.xlu0 0
  %590 = vperm.xlu0 %589, %v248
  %v591 = vpop.permute.xlu0 %590
  %594 = vset.pattern.permute.xlu0 0
  %595 = vperm.xlu0 %594, %v249
  %v596 = vpop.permute.xlu0 %595
  %599 = vset.pattern.permute.xlu0 0
  %600 = vperm.xlu0 %599, %v250
  %v601 = vpop.permute.xlu0 %600
  %604 = vset.pattern.permute.xlu0 0
  %605 = vperm.xlu0 %604, %v251
  %v606 = vpop.permute.xlu0 %605
  %609 = vset.pattern.permute.xlu0 0
  %610 = vperm.xlu0 %609, %v252
  %v611 = vpop.permute.xlu0 %610
  %v613 = vmul.f32 %v576, %v527
  %v614 = vmul.f32 %v581, %v530
  %v615 = vmul.f32 %v586, %v535
  %v616 = vmul.f32 %v591, %v538
  %v617 = vmul.f32 %v596, %v543
  %v618 = vmul.f32 %v601, %v546
  %v619 = vmul.f32 %v606, %v551
  %v620 = vmul.f32 %v611, %v554
  %621 = vset.pattern.permute.xlu0 1
  %622 = vperm.xlu0 %621, %v245
  %v623 = vpop.permute.xlu0 %622
  %625 = vset.pattern.permute.xlu0 1
  %626 = vperm.xlu0 %625, %v246
  %v627 = vpop.permute.xlu0 %626
  %629 = vset.pattern.permute.xlu0 1
  %630 = vperm.xlu0 %629, %v247
  %v631 = vpop.permute.xlu0 %630
  %633 = vset.pattern.permute.xlu0 1
  %634 = vperm.xlu0 %633, %v248
  %v635 = vpop.permute.xlu0 %634
  %637 = vset.pattern.permute.xlu0 1
  %638 = vperm.xlu0 %637, %v249
  %v639 = vpop.permute.xlu0 %638
  %641 = vset.pattern.permute.xlu0 1
  %642 = vperm.xlu0 %641, %v250
  %v643 = vpop.permute.xlu0 %642
  %645 = vset.pattern.permute.xlu0 1
  %646 = vperm.xlu0 %645, %v251
  %v647 = vpop.permute.xlu0 %646
  %649 = vset.pattern.permute.xlu0 1
  %650 = vperm.xlu0 %649, %v252
  %v651 = vpop.permute.xlu0 %650
  %v653 = vmul.f32 %v623, %v527
  %v654 = vmul.f32 %v627, %v530
  %v655 = vmul.f32 %v631, %v535
  %v656 = vmul.f32 %v635, %v538
  %v657 = vmul.f32 %v639, %v543
  %v658 = vmul.f32 %v643, %v546
  %v659 = vmul.f32 %v647, %v551
  %v660 = vmul.f32 %v651, %v554
  %661 = vset.pattern.permute.xlu0 2
  %662 = vperm.xlu0 %661, %v245
  %v663 = vpop.permute.xlu0 %662
  %665 = vset.pattern.permute.xlu0 2
  %666 = vperm.xlu0 %665, %v246
  %v667 = vpop.permute.xlu0 %666
  %669 = vset.pattern.permute.xlu0 2
  %670 = vperm.xlu0 %669, %v247
  %v671 = vpop.permute.xlu0 %670
  %673 = vset.pattern.permute.xlu0 2
  %674 = vperm.xlu0 %673, %v248
  %v675 = vpop.permute.xlu0 %674
  %677 = vset.pattern.permute.xlu0 2
  %678 = vperm.xlu0 %677, %v249
  %v679 = vpop.permute.xlu0 %678
  %681 = vset.pattern.permute.xlu0 2
  %682 = vperm.xlu0 %681, %v250
  %v683 = vpop.permute.xlu0 %682
  %685 = vset.pattern.permute.xlu0 2
  %686 = vperm.xlu0 %685, %v251
  %v687 = vpop.permute.xlu0 %686
  %689 = vset.pattern.permute.xlu0 2
  %690 = vperm.xlu0 %689, %v252
  %v691 = vpop.permute.xlu0 %690
  %v693 = vmul.f32 %v663, %v527
  %v694 = vmul.f32 %v667, %v530
  %v695 = vmul.f32 %v671, %v535
  %v696 = vmul.f32 %v675, %v538
  %v697 = vmul.f32 %v679, %v543
  %v698 = vmul.f32 %v683, %v546
  %v699 = vmul.f32 %v687, %v551
  %v700 = vmul.f32 %v691, %v554
  %701 = vset.pattern.permute.xlu0 3
  %702 = vperm.xlu0 %701, %v245
  %v703 = vpop.permute.xlu0 %702
  %705 = vset.pattern.permute.xlu0 3
  %706 = vperm.xlu0 %705, %v246
  %v707 = vpop.permute.xlu0 %706
  %709 = vset.pattern.permute.xlu0 3
  %710 = vperm.xlu0 %709, %v247
  %v711 = vpop.permute.xlu0 %710
  %713 = vset.pattern.permute.xlu0 3
  %714 = vperm.xlu0 %713, %v248
  %v715 = vpop.permute.xlu0 %714
  %717 = vset.pattern.permute.xlu0 3
  %718 = vperm.xlu0 %717, %v249
  %v719 = vpop.permute.xlu0 %718
  %721 = vset.pattern.permute.xlu0 3
  %722 = vperm.xlu0 %721, %v250
  %v723 = vpop.permute.xlu0 %722
  %725 = vset.pattern.permute.xlu0 3
  %726 = vperm.xlu0 %725, %v251
  %v727 = vpop.permute.xlu0 %726
  %729 = vset.pattern.permute.xlu0 3
  %730 = vperm.xlu0 %729, %v252
  %v731 = vpop.permute.xlu0 %730
  %v733 = vmul.f32 %v703, %v527
  %v734 = vmul.f32 %v707, %v530
  %v735 = vmul.f32 %v711, %v535
  %v736 = vmul.f32 %v715, %v538
  %v737 = vmul.f32 %v719, %v543
  %v738 = vmul.f32 %v723, %v546
  %v739 = vmul.f32 %v727, %v551
  %v740 = vmul.f32 %v731, %v554
  %741 = vset.pattern.permute.xlu0 4
  %742 = vperm.xlu0 %741, %v245
  %v743 = vpop.permute.xlu0 %742
  %745 = vset.pattern.permute.xlu0 4
  %746 = vperm.xlu0 %745, %v246
  %v747 = vpop.permute.xlu0 %746
  %749 = vset.pattern.permute.xlu0 4
  %750 = vperm.xlu0 %749, %v247
  %v751 = vpop.permute.xlu0 %750
  %753 = vset.pattern.permute.xlu0 4
  %754 = vperm.xlu0 %753, %v248
  %v755 = vpop.permute.xlu0 %754
  %757 = vset.pattern.permute.xlu0 4
  %758 = vperm.xlu0 %757, %v249
  %v759 = vpop.permute.xlu0 %758
  %761 = vset.pattern.permute.xlu0 4
  %762 = vperm.xlu0 %761, %v250
  %v763 = vpop.permute.xlu0 %762
  %765 = vset.pattern.permute.xlu0 4
  %766 = vperm.xlu0 %765, %v251
  %v767 = vpop.permute.xlu0 %766
  %769 = vset.pattern.permute.xlu0 4
  %770 = vperm.xlu0 %769, %v252
  %v771 = vpop.permute.xlu0 %770
  %v773 = vmul.f32 %v743, %v527
  %v774 = vmul.f32 %v747, %v530
  %v775 = vmul.f32 %v751, %v535
  %v776 = vmul.f32 %v755, %v538
  %v777 = vmul.f32 %v759, %v543
  %v778 = vmul.f32 %v763, %v546
  %v779 = vmul.f32 %v767, %v551
  %v780 = vmul.f32 %v771, %v554
  %781 = vset.pattern.permute.xlu0 5
  %782 = vperm.xlu0 %781, %v245
  %v783 = vpop.permute.xlu0 %782
  %785 = vset.pattern.permute.xlu0 5
  %786 = vperm.xlu0 %785, %v246
  %v787 = vpop.permute.xlu0 %786
  %789 = vset.pattern.permute.xlu0 5
  %790 = vperm.xlu0 %789, %v247
  %v791 = vpop.permute.xlu0 %790
  %793 = vset.pattern.permute.xlu0 5
  %794 = vperm.xlu0 %793, %v248
  %v795 = vpop.permute.xlu0 %794
  %797 = vset.pattern.permute.xlu0 5
  %798 = vperm.xlu0 %797, %v249
  %v799 = vpop.permute.xlu0 %798
  %801 = vset.pattern.permute.xlu0 5
  %802 = vperm.xlu0 %801, %v250
  %v803 = vpop.permute.xlu0 %802
  %805 = vset.pattern.permute.xlu0 5
  %806 = vperm.xlu0 %805, %v251
  %v807 = vpop.permute.xlu0 %806
  %809 = vset.pattern.permute.xlu0 5
  %810 = vperm.xlu0 %809, %v252
  %v811 = vpop.permute.xlu0 %810
  %v813 = vmul.f32 %v783, %v527
  %v814 = vmul.f32 %v787, %v530
  %v815 = vmul.f32 %v791, %v535
  %v816 = vmul.f32 %v795, %v538
  %v817 = vmul.f32 %v799, %v543
  %v818 = vmul.f32 %v803, %v546
  %v819 = vmul.f32 %v807, %v551
  %v820 = vmul.f32 %v811, %v554
  %821 = vset.pattern.permute.xlu0 6
  %822 = vperm.xlu0 %821, %v245
  %v823 = vpop.permute.xlu0 %822
  %825 = vset.pattern.permute.xlu0 6
  %826 = vperm.xlu0 %825, %v246
  %v827 = vpop.permute.xlu0 %826
  %829 = vset.pattern.permute.xlu0 6
  %830 = vperm.xlu0 %829, %v247
  %v831 = vpop.permute.xlu0 %830
  %833 = vset.pattern.permute.xlu0 6
  %834 = vperm.xlu0 %833, %v248
  %v835 = vpop.permute.xlu0 %834
  %837 = vset.pattern.permute.xlu0 6
  %838 = vperm.xlu0 %837, %v249
  %v839 = vpop.permute.xlu0 %838
  %841 = vset.pattern.permute.xlu0 6
  %842 = vperm.xlu0 %841, %v250
  %v843 = vpop.permute.xlu0 %842
  %845 = vset.pattern.permute.xlu0 6
  %846 = vperm.xlu0 %845, %v251
  %v847 = vpop.permute.xlu0 %846
  %849 = vset.pattern.permute.xlu0 6
  %850 = vperm.xlu0 %849, %v252
  %v851 = vpop.permute.xlu0 %850
  %v853 = vmul.f32 %v823, %v527
  %v854 = vmul.f32 %v827, %v530
  %v855 = vmul.f32 %v831, %v535
  %v856 = vmul.f32 %v835, %v538
  %v857 = vmul.f32 %v839, %v543
  %v858 = vmul.f32 %v843, %v546
  %v859 = vmul.f32 %v847, %v551
  %v860 = vmul.f32 %v851, %v554
  %861 = vset.pattern.permute.xlu0 7
  %862 = vperm.xlu0 %861, %v245
  %v863 = vpop.permute.xlu0 %862
  %865 = vset.pattern.permute.xlu0 7
  %866 = vperm.xlu0 %865, %v246
  %v867 = vpop.permute.xlu0 %866
  %869 = vset.pattern.permute.xlu0 7
  %870 = vperm.xlu0 %869, %v247
  %v871 = vpop.permute.xlu0 %870
  %873 = vset.pattern.permute.xlu0 7
  %874 = vperm.xlu0 %873, %v248
  %v875 = vpop.permute.xlu0 %874
  %877 = vset.pattern.permute.xlu0 7
  %878 = vperm.xlu0 %877, %v249
  %v879 = vpop.permute.xlu0 %878
  %881 = vset.pattern.permute.xlu0 7
  %882 = vperm.xlu0 %881, %v250
  %v883 = vpop.permute.xlu0 %882
  %885 = vset.pattern.permute.xlu0 7
  %886 = vperm.xlu0 %885, %v251
  %v887 = vpop.permute.xlu0 %886
  %889 = vset.pattern.permute.xlu0 7
  %890 = vperm.xlu0 %889, %v252
  %v891 = vpop.permute.xlu0 %890
  %v893 = vmul.f32 %v863, %v527
  %v894 = vmul.f32 %v867, %v530
  %v895 = vmul.f32 %v871, %v535
  %v896 = vmul.f32 %v875, %v538
  %v897 = vmul.f32 %v879, %v543
  %v898 = vmul.f32 %v883, %v546
  %v899 = vmul.f32 %v887, %v551
  %v900 = vmul.f32 %v891, %v554
  %909 = vrot.lane.b32.xlu0 %v653, 8
  %v910 = vpop.permute.xlu0 %909
  %911 = vrot.lane.b32.xlu0 %v654, 8
  %v912 = vpop.permute.xlu0 %911
  %913 = vrot.lane.b32.xlu0 %v655, 8
  %v914 = vpop.permute.xlu0 %913
  %915 = vrot.lane.b32.xlu0 %v656, 8
  %v916 = vpop.permute.xlu0 %915
  %917 = vrot.lane.b32.xlu0 %v657, 8
  %v918 = vpop.permute.xlu0 %917
  %919 = vrot.lane.b32.xlu0 %v658, 8
  %v920 = vpop.permute.xlu0 %919
  %921 = vrot.lane.b32.xlu0 %v659, 8
  %v922 = vpop.permute.xlu0 %921
  %923 = vrot.lane.b32.xlu0 %v660, 8
  %v924 = vpop.permute.xlu0 %923
  %941 = vrot.lane.b32.xlu0 %v693, 16
  %v942 = vpop.permute.xlu0 %941
  %943 = vrot.lane.b32.xlu0 %v694, 16
  %v944 = vpop.permute.xlu0 %943
  %945 = vrot.lane.b32.xlu0 %v695, 16
  %v946 = vpop.permute.xlu0 %945
  %947 = vrot.lane.b32.xlu0 %v696, 16
  %v948 = vpop.permute.xlu0 %947
  %949 = vrot.lane.b32.xlu0 %v697, 16
  %v950 = vpop.permute.xlu0 %949
  %951 = vrot.lane.b32.xlu0 %v698, 16
  %v952 = vpop.permute.xlu0 %951
  %953 = vrot.lane.b32.xlu0 %v699, 16
  %v954 = vpop.permute.xlu0 %953
  %955 = vrot.lane.b32.xlu0 %v700, 16
  %v956 = vpop.permute.xlu0 %955
  %973 = vrot.lane.b32.xlu0 %v733, 24
  %v974 = vpop.permute.xlu0 %973
  %975 = vrot.lane.b32.xlu0 %v734, 24
  %v976 = vpop.permute.xlu0 %975
  %977 = vrot.lane.b32.xlu0 %v735, 24
  %v978 = vpop.permute.xlu0 %977
  %979 = vrot.lane.b32.xlu0 %v736, 24
  %v980 = vpop.permute.xlu0 %979
  %981 = vrot.lane.b32.xlu0 %v737, 24
  %v982 = vpop.permute.xlu0 %981
  %983 = vrot.lane.b32.xlu0 %v738, 24
  %v984 = vpop.permute.xlu0 %983
  %985 = vrot.lane.b32.xlu0 %v739, 24
  %v986 = vpop.permute.xlu0 %985
  %987 = vrot.lane.b32.xlu0 %v740, 24
  %v988 = vpop.permute.xlu0 %987
  %1005 = vrot.lane.b32.xlu0 %v773, 32
  %v1006 = vpop.permute.xlu0 %1005
  %1007 = vrot.lane.b32.xlu0 %v774, 32
  %v1008 = vpop.permute.xlu0 %1007
  %1009 = vrot.lane.b32.xlu0 %v775, 32
  %v1010 = vpop.permute.xlu0 %1009
  %1011 = vrot.lane.b32.xlu0 %v776, 32
  %v1012 = vpop.permute.xlu0 %1011
  %1013 = vrot.lane.b32.xlu0 %v777, 32
  %v1014 = vpop.permute.xlu0 %1013
  %1015 = vrot.lane.b32.xlu0 %v778, 32
  %v1016 = vpop.permute.xlu0 %1015
  %1017 = vrot.lane.b32.xlu0 %v779, 32
  %v1018 = vpop.permute.xlu0 %1017
  %1019 = vrot.lane.b32.xlu0 %v780, 32
  %v1020 = vpop.permute.xlu0 %1019
  %1037 = vrot.lane.b32.xlu0 %v813, 40
  %v1038 = vpop.permute.xlu0 %1037
  %1039 = vrot.lane.b32.xlu0 %v814, 40
  %v1040 = vpop.permute.xlu0 %1039
  %1041 = vrot.lane.b32.xlu0 %v815, 40
  %v1042 = vpop.permute.xlu0 %1041
  %1043 = vrot.lane.b32.xlu0 %v816, 40
  %v1044 = vpop.permute.xlu0 %1043
  %1045 = vrot.lane.b32.xlu0 %v817, 40
  %v1046 = vpop.permute.xlu0 %1045
  %1047 = vrot.lane.b32.xlu0 %v818, 40
  %v1048 = vpop.permute.xlu0 %1047
  %1049 = vrot.lane.b32.xlu0 %v819, 40
  %v1050 = vpop.permute.xlu0 %1049
  %1051 = vrot.lane.b32.xlu0 %v820, 40
  %v1052 = vpop.permute.xlu0 %1051
  %1069 = vrot.lane.b32.xlu0 %v853, 48
  %v1070 = vpop.permute.xlu0 %1069
  %1071 = vrot.lane.b32.xlu0 %v854, 48
  %v1072 = vpop.permute.xlu0 %1071
  %1073 = vrot.lane.b32.xlu0 %v855, 48
  %v1074 = vpop.permute.xlu0 %1073
  %1075 = vrot.lane.b32.xlu0 %v856, 48
  %v1076 = vpop.permute.xlu0 %1075
  %1077 = vrot.lane.b32.xlu0 %v857, 48
  %v1078 = vpop.permute.xlu0 %1077
  %1079 = vrot.lane.b32.xlu0 %v858, 48
  %v1080 = vpop.permute.xlu0 %1079
  %1081 = vrot.lane.b32.xlu0 %v859, 48
  %v1082 = vpop.permute.xlu0 %1081
  %1083 = vrot.lane.b32.xlu0 %v860, 48
  %v1084 = vpop.permute.xlu0 %1083
  %1101 = vrot.lane.b32.xlu0 %v893, 56
  %v1102 = vpop.permute.xlu0 %1101
  %1103 = vrot.lane.b32.xlu0 %v894, 56
  %v1104 = vpop.permute.xlu0 %1103
  %1105 = vrot.lane.b32.xlu0 %v895, 56
  %v1106 = vpop.permute.xlu0 %1105
  %1107 = vrot.lane.b32.xlu0 %v896, 56
  %v1108 = vpop.permute.xlu0 %1107
  %1109 = vrot.lane.b32.xlu0 %v897, 56
  %v1110 = vpop.permute.xlu0 %1109
  %1111 = vrot.lane.b32.xlu0 %v898, 56
  %v1112 = vpop.permute.xlu0 %1111
  %1113 = vrot.lane.b32.xlu0 %v899, 56
  %v1114 = vpop.permute.xlu0 %1113
  %1115 = vrot.lane.b32.xlu0 %v900, 56
  %v1116 = vpop.permute.xlu0 %1115
  %v1125 = vsel %vm178, %v613, %v910
  %v1126 = vsel %vm178, %v614, %v912
  %v1127 = vsel %vm178, %v615, %v914
  %v1128 = vsel %vm178, %v616, %v916
  %v1129 = vsel %vm178, %v617, %v918
  %v1130 = vsel %vm178, %v618, %v920
  %v1131 = vsel %vm178, %v619, %v922
  %v1132 = vsel %vm178, %v620, %v924
  %v1133 = vsel %vm76, %v1125, %v942
  %v1134 = vsel %vm76, %v1126, %v944
  %v1135 = vsel %vm76, %v1127, %v946
  %v1136 = vsel %vm76, %v1128, %v948
  %v1137 = vsel %vm76, %v1129, %v950
  %v1138 = vsel %vm76, %v1130, %v952
  %v1139 = vsel %vm76, %v1131, %v954
  %v1140 = vsel %vm76, %v1132, %v956
  %vm1141 = vcmask 195584
  %v1142 = vsel %vm1141, %v1133, %v974
  %v1143 = vsel %vm1141, %v1134, %v976
  %v1144 = vsel %vm1141, %v1135, %v978
  %v1145 = vsel %vm1141, %v1136, %v980
  %v1146 = vsel %vm1141, %v1137, %v982
  %v1147 = vsel %vm1141, %v1138, %v984
  %v1148 = vsel %vm1141, %v1139, %v986
  %v1149 = vsel %vm1141, %v1140, %v988
  %vm1150 = vcmask 261120
  %v1151 = vsel %vm1150, %v1142, %v1006
  %v1152 = vsel %vm1150, %v1143, %v1008
  %v1153 = vsel %vm1150, %v1144, %v1010
  %v1154 = vsel %vm1150, %v1145, %v1012
  %v1155 = vsel %vm1150, %v1146, %v1014
  %v1156 = vsel %vm1150, %v1147, %v1016
  %v1157 = vsel %vm1150, %v1148, %v1018
  %v1158 = vsel %vm1150, %v1149, %v1020
  %vm1159 = vcmask 326656
  %v1160 = vsel %vm1159, %v1151, %v1038
  %v1161 = vsel %vm1159, %v1152, %v1040
  %v1162 = vsel %vm1159, %v1153, %v1042
  %v1163 = vsel %vm1159, %v1154, %v1044
  %v1164 = vsel %vm1159, %v1155, %v1046
  %v1165 = vsel %vm1159, %v1156, %v1048
  %v1166 = vsel %vm1159, %v1157, %v1050
  %v1167 = vsel %vm1159, %v1158, %v1052
  %vm1168 = vcmask 392192
  %v1169 = vsel %vm1168, %v1160, %v1070
  %v1170 = vsel %vm1168, %v1161, %v1072
  %v1171 = vsel %vm1168, %v1162, %v1074
  %v1172 = vsel %vm1168, %v1163, %v1076
  %v1173 = vsel %vm1168, %v1164, %v1078
  %v1174 = vsel %vm1168, %v1165, %v1080
  %v1175 = vsel %vm1168, %v1166, %v1082
  %v1176 = vsel %vm1168, %v1167, %v1084
  %vm1177 = vcmask 457728
  %v1178 = vsel %vm1177, %v1169, %v1102
  %v1179 = vsel %vm1177, %v1170, %v1104
  %v1180 = vsel %vm1177, %v1171, %v1106
  %v1181 = vsel %vm1177, %v1172, %v1108
  %v1182 = vsel %vm1177, %v1173, %v1110
  %v1183 = vsel %vm1177, %v1174, %v1112
  %v1184 = vsel %vm1177, %v1175, %v1114
  %v1185 = vsel %vm1177, %v1176, %v1116
  %v1186 = vpack.c.bf16 %v1179, %v1178
  %v1187 = vpack.c.bf16 %v1181, %v1180
  %v1188 = vpack.c.bf16 %v1183, %v1182
  %v1189 = vpack.c.bf16 %v1185, %v1184
  %v1198 = vunpack.c.l.b16 %v37
  %v1199 = vunpack.c.l.b16 %v38
  %v1200 = vunpack.c.l.b16 %v39
  %v1201 = vunpack.c.l.b16 %v40
  %v1202 = vunpack.c.l.b16 %v41
  %v1203 = vunpack.c.l.b16 %v42
  %v1204 = vunpack.c.l.b16 %v43
  %v1205 = vunpack.c.l.b16 %v44
  %v1206 = vpack.c.b16 %v1199, %v1198
  %v1207 = vpack.c.b16 %v1201, %v1200
  %v1208 = vpack.c.b16 %v1203, %v1202
  %v1209 = vpack.c.b16 %v1205, %v1204
  %vm1214 = vcmask 523264
  %v1216 = vsel %vm1214, %v1186, 0
  %v1219 = vsel %vm1214, %v1187, 0
  %v1222 = vsel %vm1214, %v1188, 0
  %v1225 = vsel %vm1214, %v1189, 0
  %1227 = vmatprep.subr.bf16.mxu0 0
  %1228 = vmatpush1.bf16.msra.mxu0 %v1206
  %1229 = vmatprep.subr.bf16.mxu0 0
  %1230 = vmatpush1.bf16.msra.mxu0 %v1207
  %1231 = vmatprep.subr.bf16.mxu0 0
  %1232 = vmatpush1.bf16.msra.mxu0 %v1208
  %1233 = vmatprep.subr.bf16.mxu0 0
  %1234 = vmatpush1.bf16.msra.mxu0 %v1209
  %1235 = vmatprep.subr.bf16.mxu0 0
  %1236 = vmatpush1.bf16.msra.mxu0 0
  %1237 = vmatprep.subr.bf16.mxu0 0
  %1238 = vmatpush1.bf16.msra.mxu0 0
  %1239 = vmatprep.subr.bf16.mxu0 0
  %1240 = vmatpush1.bf16.msra.mxu0 0
  %1241 = vmatprep.subr.bf16.mxu0 0
  %1242 = vmatpush1.bf16.msra.mxu0 0
  %1243 = vmatprep.subr.bf16.mxu0 0
  %1244 = vmatpush1.bf16.msra.mxu0 0
  %1245 = vmatprep.subr.bf16.mxu0 0
  %1246 = vmatpush1.bf16.msra.mxu0 0
  %1247 = vmatprep.subr.bf16.mxu0 0
  %1248 = vmatpush1.bf16.msra.mxu0 0
  %1249 = vmatprep.subr.bf16.mxu0 0
  %1250 = vmatpush1.bf16.msra.mxu0 0
  %1251 = vmatprep.subr.bf16.mxu0 0
  %1252 = vmatpush1.bf16.msra.mxu0 0
  %1253 = vmatprep.subr.bf16.mxu0 0
  %1254 = vmatpush1.bf16.msra.mxu0 0
  %1255 = vmatprep.subr.bf16.mxu0 0
  %1256 = vmatpush1.bf16.msra.mxu0 0
  %1257 = vmatprep.subr.bf16.mxu0 0
  %1258 = vmatpush1.bf16.msra.mxu0 0
  %1259 = vmatprep.mubr.bf16.mxu0 0
  %1260 = vmatmul.mubr.bf16.gmra.mrb[0].mxu0 %v1216
  %v1261 = vpop.f32.mrb[0].mxu0
  %v1262 = vadd.f32 0.0, %v1261
  %v1263 = vpop.f32.mrb[0].mxu0
  %v1264 = vpop.f32.mrb[0].mxu0
  %v1265 = vadd.f32 0.0, %v1264
  %v1266 = vpop.f32.mrb[0].mxu0
  %1267 = vmatprep.mubr.bf16.mxu0 0
  %1268 = vmatmul.mubr.bf16.gmra.mrb[0].mxu0 %v1219
  %v1269 = vpop.f32.mrb[0].mxu0
  %v1270 = vadd.f32 0.0, %v1269
  %v1271 = vpop.f32.mrb[0].mxu0
  %v1272 = vpop.f32.mrb[0].mxu0
  %v1273 = vadd.f32 0.0, %v1272
  %v1274 = vpop.f32.mrb[0].mxu0
  %1275 = vmatprep.mubr.bf16.mxu0 0
  %1276 = vmatmul.mubr.bf16.gmra.mrb[0].mxu0 %v1222
  %v1277 = vpop.f32.mrb[0].mxu0
  %v1278 = vadd.f32 0.0, %v1277
  %v1279 = vpop.f32.mrb[0].mxu0
  %v1280 = vpop.f32.mrb[0].mxu0
  %v1281 = vadd.f32 0.0, %v1280
  %v1282 = vpop.f32.mrb[0].mxu0
  %1283 = vmatprep.mubr.bf16.mxu0 0
  %1284 = vmatmul.mubr.bf16.gmra.mrb[0].mxu0 %v1225
  %v1285 = vpop.f32.mrb[0].mxu0
  %v1286 = vadd.f32 0.0, %v1285
  %v1287 = vpop.f32.mrb[0].mxu0
  %v1288 = vpop.f32.mrb[0].mxu0
  %v1289 = vadd.f32 0.0, %v1288
  %v1290 = vpop.f32.mrb[0].mxu0
  %1291 = vdwg.mxu0
  %1300 = vrot.lane.b32.xlu0 %v565, 8
  %v1301 = vpop.permute.xlu0 %1300
  %1302 = vrot.lane.b32.xlu0 %v566, 8
  %v1303 = vpop.permute.xlu0 %1302
  %1304 = vrot.lane.b32.xlu0 %v567, 8
  %v1305 = vpop.permute.xlu0 %1304
  %1306 = vrot.lane.b32.xlu0 %v568, 8
  %v1307 = vpop.permute.xlu0 %1306
  %1308 = vrot.lane.b32.xlu0 %v569, 8
  %v1309 = vpop.permute.xlu0 %1308
  %1310 = vrot.lane.b32.xlu0 %v570, 8
  %v1311 = vpop.permute.xlu0 %1310
  %1312 = vrot.lane.b32.xlu0 %v571, 8
  %v1313 = vpop.permute.xlu0 %1312
  %1314 = vrot.lane.b32.xlu0 %v572, 8
  %v1315 = vpop.permute.xlu0 %1314
  %v1324 = vsel %vm76, %v1262, %v1301
  %v1325 = vsel %vm76, %v1265, %v1303
  %v1326 = vsel %vm76, %v1270, %v1305
  %v1327 = vsel %vm76, %v1273, %v1307
  %v1328 = vsel %vm76, %v1278, %v1309
  %v1329 = vsel %vm76, %v1281, %v1311
  %v1330 = vsel %vm76, %v1286, %v1313
  %v1331 = vsel %vm76, %v1289, %v1315
  %v1332 = vsel %vm1150, %v1324, 0.0
  %v1333 = vsel %vm1150, %v1325, 0.0
  %v1334 = vadd.f32 %v1332, %v1333
  %v1335 = vsel %vm1150, %v1326, 0.0
  %v1336 = vadd.f32 %v1334, %v1335
  %v1337 = vsel %vm1150, %v1327, 0.0
  %v1338 = vadd.f32 %v1336, %v1337
  %v1339 = vsel %vm1150, %v1328, 0.0
  %v1340 = vadd.f32 %v1338, %v1339
  %v1341 = vsel %vm1150, %v1329, 0.0
  %v1342 = vadd.f32 %v1340, %v1341
  %v1343 = vsel %vm1150, %v1330, 0.0
  %v1344 = vadd.f32 %v1342, %v1343
  %v1345 = vsel %vm1150, %v1331, 0.0
  %v1346 = vadd.f32 %v1344, %v1345
  %v1347 = vrot.slane %v1346, 4
  %v1348 = vadd.f32 %v1346, %v1347
  %v1349 = vrot.slane %v1348, 2
  %v1350 = vadd.f32 %v1348, %v1349
  %v1351 = vrot.slane %v1350, 1
  %v1352 = vadd.f32 %v1350, %v1351
  %v1353 = vmul.f32 %v1352, %v200
  %v1354 = vmul.f32 %v1324, %v1324
  %v1355 = vmul.f32 %v1325, %v1325
  %v1356 = vmul.f32 %v1326, %v1326
  %v1357 = vmul.f32 %v1327, %v1327
  %v1358 = vmul.f32 %v1328, %v1328
  %v1359 = vmul.f32 %v1329, %v1329
  %v1360 = vmul.f32 %v1330, %v1330
  %v1361 = vmul.f32 %v1331, %v1331
  %v1362 = vsel %vm1150, %v1354, 0.0
  %v1363 = vsel %vm1150, %v1355, 0.0
  %v1364 = vadd.f32 %v1362, %v1363
  %v1365 = vsel %vm1150, %v1356, 0.0
  %v1366 = vadd.f32 %v1364, %v1365
  %v1367 = vsel %vm1150, %v1357, 0.0
  %v1368 = vadd.f32 %v1366, %v1367
  %v1369 = vsel %vm1150, %v1358, 0.0
  %v1370 = vadd.f32 %v1368, %v1369
  %v1371 = vsel %vm1150, %v1359, 0.0
  %v1372 = vadd.f32 %v1370, %v1371
  %v1373 = vsel %vm1150, %v1360, 0.0
  %v1374 = vadd.f32 %v1372, %v1373
  %v1375 = vsel %vm1150, %v1361, 0.0
  %v1376 = vadd.f32 %v1374, %v1375
  %v1377 = vrot.slane %v1376, 4
  %v1378 = vadd.f32 %v1376, %v1377
  %v1379 = vrot.slane %v1378, 2
  %v1380 = vadd.f32 %v1378, %v1379
  %v1381 = vrot.slane %v1380, 1
  %v1382 = vadd.f32 %v1380, %v1381
  %v1383 = vmul.f32 %v1382, %v200
  %v1384 = vmul.f32 %v1353, %v1353
  %v1385 = vsub.f32 %v1383, %v1384
  %v1386 = vmax.f32 %v1385, 0.0
  %v1387 = vsub.f32 %v1324, %v1353
  %v1388 = vsub.f32 %v1325, %v1353
  %v1389 = vsub.f32 %v1326, %v1353
  %v1390 = vsub.f32 %v1327, %v1353
  %v1391 = vsub.f32 %v1328, %v1353
  %v1392 = vsub.f32 %v1329, %v1353
  %v1393 = vsub.f32 %v1330, %v1353
  %v1394 = vsub.f32 %v1331, %v1353
  %v1395 = vadd.f32 %v1386, 1e-05
  %v1396 = vrsqrt.pop %v1395
  %v1397 = vmul.f32 %v1387, %v1396
  %v1398 = vmul.f32 %v1388, %v1396
  %v1399 = vmul.f32 %v1389, %v1396
  %v1400 = vmul.f32 %v1390, %v1396
  %v1401 = vmul.f32 %v1391, %v1396
  %v1402 = vmul.f32 %v1392, %v1396
  %v1403 = vmul.f32 %v1393, %v1396
  %v1404 = vmul.f32 %v1394, %v1396
  %v1405 = vmax.f32 %v1397, 0.0
  %v1406 = vmax.f32 %v1398, 0.0
  %v1407 = vmax.f32 %v1399, 0.0
  %v1408 = vmax.f32 %v1400, 0.0
  %v1409 = vmax.f32 %v1401, 0.0
  %v1410 = vmax.f32 %v1402, 0.0
  %v1411 = vmax.f32 %v1403, 0.0
  %v1412 = vmax.f32 %v1404, 0.0
  %v1413 = vpack.c.bf16 %v1406, %v1405
  %v1414 = vpack.c.bf16 %v1408, %v1407
  %v1415 = vpack.c.bf16 %v1410, %v1409
  %v1416 = vpack.c.bf16 %v1412, %v1411
  %v1421 = vunpack.c.l.b16 %v45
  %v1422 = vunpack.c.l.b16 %v46
  %v1423 = vunpack.c.l.b16 %v47
  %v1424 = vunpack.c.l.b16 %v48
  %v1425 = vpack.c.b16 %v1422, %v1421
  %v1426 = vpack.c.b16 %v1424, %v1423
  %1429 = vrot.lane.b32.xlu0 %v560, 112
  %v1430 = vpop.permute.xlu0 %1429
  %v1433 = vsel %vm1150, %v1413, 0
  %v1436 = vsel %vm1150, %v1414, 0
  %v1439 = vsel %vm1150, %v1415, 0
  %v1442 = vsel %vm1150, %v1416, 0
  %1444 = vmatprep.subr.bf16.mxu0 0
  %1445 = vmatpush1.bf16.msra.mxu0 %v1425
  %1446 = vmatprep.subr.bf16.mxu0 0
  %1447 = vmatpush1.bf16.msra.mxu0 %v1426
  %1448 = vmatprep.subr.bf16.mxu0 0
  %1449 = vmatpush1.bf16.msra.mxu0 0
  %1450 = vmatprep.subr.bf16.mxu0 0
  %1451 = vmatpush1.bf16.msra.mxu0 0
  %1452 = vmatprep.subr.bf16.mxu0 0
  %1453 = vmatpush1.bf16.msra.mxu0 0
  %1454 = vmatprep.subr.bf16.mxu0 0
  %1455 = vmatpush1.bf16.msra.mxu0 0
  %1456 = vmatprep.subr.bf16.mxu0 0
  %1457 = vmatpush1.bf16.msra.mxu0 0
  %1458 = vmatprep.subr.bf16.mxu0 0
  %1459 = vmatpush1.bf16.msra.mxu0 0
  %1460 = vmatprep.subr.bf16.mxu0 0
  %1461 = vmatpush1.bf16.msra.mxu0 0
  %1462 = vmatprep.subr.bf16.mxu0 0
  %1463 = vmatpush1.bf16.msra.mxu0 0
  %1464 = vmatprep.subr.bf16.mxu0 0
  %1465 = vmatpush1.bf16.msra.mxu0 0
  %1466 = vmatprep.subr.bf16.mxu0 0
  %1467 = vmatpush1.bf16.msra.mxu0 0
  %1468 = vmatprep.subr.bf16.mxu0 0
  %1469 = vmatpush1.bf16.msra.mxu0 0
  %1470 = vmatprep.subr.bf16.mxu0 0
  %1471 = vmatpush1.bf16.msra.mxu0 0
  %1472 = vmatprep.subr.bf16.mxu0 0
  %1473 = vmatpush1.bf16.msra.mxu0 0
  %1474 = vmatprep.subr.bf16.mxu0 0
  %1475 = vmatpush1.bf16.msra.mxu0 0
  %1476 = vmatprep.mubr.bf16.mxu0 0
  %1477 = vmatmul.mubr.bf16.gmra.mrb[0].mxu0 %v1433
  %v1478 = vpop.f32.mrb[0].mxu0
  %v1479 = vadd.f32 %v1430, %v1478
  %v1480 = vpop.f32.mrb[0].mxu0
  %v1481 = vpop.f32.mrb[0].mxu0
  %v1482 = vadd.f32 %v1430, %v1481
  %v1483 = vpop.f32.mrb[0].mxu0
  %1484 = vmatprep.mubr.bf16.mxu0 0
  %1485 = vmatmul.mubr.bf16.gmra.mrb[0].mxu0 %v1436
  %v1486 = vpop.f32.mrb[0].mxu0
  %v1487 = vadd.f32 %v1430, %v1486
  %v1488 = vpop.f32.mrb[0].mxu0
  %v1489 = vpop.f32.mrb[0].mxu0
  %v1490 = vadd.f32 %v1430, %v1489
  %v1491 = vpop.f32.mrb[0].mxu0
  %1492 = vmatprep.mubr.bf16.mxu0 0
  %1493 = vmatmul.mubr.bf16.gmra.mrb[0].mxu0 %v1439
  %v1494 = vpop.f32.mrb[0].mxu0
  %v1495 = vadd.f32 %v1430, %v1494
  %v1496 = vpop.f32.mrb[0].mxu0
  %v1497 = vpop.f32.mrb[0].mxu0
  %v1498 = vadd.f32 %v1430, %v1497
  %v1499 = vpop.f32.mrb[0].mxu0
  %1500 = vmatprep.mubr.bf16.mxu0 0
  %1501 = vmatmul.mubr.bf16.gmra.mrb[0].mxu0 %v1442
  %v1502 = vpop.f32.mrb[0].mxu0
  %v1503 = vadd.f32 %v1430, %v1502
  %v1504 = vpop.f32.mrb[0].mxu0
  %v1505 = vpop.f32.mrb[0].mxu0
  %v1506 = vadd.f32 %v1430, %v1505
  %v1507 = vpop.f32.mrb[0].mxu0
  %1508 = vdwg.mxu0
  %v1509 = vld [vmem:[%s2 + $0x48] sm:$0xf]
  %v1510 = vld [vmem:[%s2 + $0x4c] sm:$0xf]
  %v1511 = vld [vmem:[%s2 + $0x50] sm:$0xf]
  %v1512 = vld [vmem:[%s2 + $0x54] sm:$0xf]
  %v1513 = vld [vmem:[%s2 + $0x58] sm:$0xf]
  %v1514 = vld [vmem:[%s2 + $0x60] sm:$0xf]
  %v1515 = vld [vmem:[%s2 + $0x64] sm:$0xf]
  %v1516 = vld [vmem:[%s2 + $0x68] sm:$0xf]
  %v1517 = vld [vmem:[%s2 + $0x6c] sm:$0xf]
  %v1518 = vld [vmem:[%s2 + $0x70] sm:$0xf]
  %v1519 = vld [vmem:[%s2 + $0x74] sm:$0xf]
  %v1520 = vld [vmem:[%s2 + $0x78] sm:$0xf]
  %v1521 = vld [vmem:[%s2 + $0x7c] sm:$0xf]
  %v1522 = vld [vmem:[%s2 + $0x80] sm:$0xf]
  %v1523 = vld [vmem:[%s2 + $0x84] sm:$0xf]
  %v1524 = vld [vmem:[%s2 + $0x88] sm:$0xf]
  %v1525 = vld [vmem:[%s2 + $0x8c] sm:$0xf]
  %v1526 = vld [vmem:[%s3 + $0x8] sm:$0x1]
  %v1531 = vunpack.c.l.b16 %v1509
  %v1532 = vunpack.c.l.b16 %v1510
  %v1533 = vunpack.c.l.b16 %v1511
  %v1534 = vunpack.c.l.b16 %v1512
  %v1535 = vpack.c.b16 %v1532, %v1531
  %v1536 = vpack.c.b16 %v1534, %v1533
  %1539 = vmatprep.subr.bf16.mxu0 0
  %1540 = vmatpush1.bf16.msra.mxu0 %v1535
  %1541 = vmatprep.subr.bf16.mxu0 0
  %1542 = vmatpush1.bf16.msra.mxu0 %v1536
  %1543 = vmatprep.subr.bf16.mxu0 0
  %1544 = vmatpush1.bf16.msra.mxu0 0
  %1545 = vmatprep.subr.bf16.mxu0 0
  %1546 = vmatpush1.bf16.msra.mxu0 0
  %1547 = vmatprep.subr.bf16.mxu0 0
  %1548 = vmatpush1.bf16.msra.mxu0 0
  %1549 = vmatprep.subr.bf16.mxu0 0
  %1550 = vmatpush1.bf16.msra.mxu0 0
  %1551 = vmatprep.subr.bf16.mxu0 0
  %1552 = vmatpush1.bf16.msra.mxu0 0
  %1553 = vmatprep.subr.bf16.mxu0 0
  %1554 = vmatpush1.bf16.msra.mxu0 0
  %1555 = vmatprep.subr.bf16.mxu0 0
  %1556 = vmatpush1.bf16.msra.mxu0 0
  %1557 = vmatprep.subr.bf16.mxu0 0
  %1558 = vmatpush1.bf16.msra.mxu0 0
  %1559 = vmatprep.subr.bf16.mxu0 0
  %1560 = vmatpush1.bf16.msra.mxu0 0
  %1561 = vmatprep.subr.bf16.mxu0 0
  %1562 = vmatpush1.bf16.msra.mxu0 0
  %1563 = vmatprep.subr.bf16.mxu0 0
  %1564 = vmatpush1.bf16.msra.mxu0 0
  %1565 = vmatprep.subr.bf16.mxu0 0
  %1566 = vmatpush1.bf16.msra.mxu0 0
  %1567 = vmatprep.subr.bf16.mxu0 0
  %1568 = vmatpush1.bf16.msra.mxu0 0
  %1569 = vmatprep.subr.bf16.mxu0 0
  %1570 = vmatpush1.bf16.msra.mxu0 0
  %1571 = vmatprep.mubr.bf16.mxu0 0
  %1572 = vmatmul.mubr.bf16.gmra.mrb[0].mxu0 %v1433
  %v1573 = vpop.f32.mrb[0].mxu0
  %v1574 = vadd.f32 0.0, %v1573
  %v1575 = vpop.f32.mrb[0].mxu0
  %v1576 = vpop.f32.mrb[0].mxu0
  %v1577 = vadd.f32 0.0, %v1576
  %v1578 = vpop.f32.mrb[0].mxu0
  %1579 = vmatprep.mubr.bf16.mxu0 0
  %1580 = vmatmul.mubr.bf16.gmra.mrb[0].mxu0 %v1436
  %v1581 = vpop.f32.mrb[0].mxu0
  %v1582 = vadd.f32 0.0, %v1581
  %v1583 = vpop.f32.mrb[0].mxu0
  %v1584 = vpop.f32.mrb[0].mxu0
  %v1585 = vadd.f32 0.0, %v1584
  %v1586 = vpop.f32.mrb[0].mxu0
  %1587 = vmatprep.mubr.bf16.mxu0 0
  %1588 = vmatmul.mubr.bf16.gmra.mrb[0].mxu0 %v1439
  %v1589 = vpop.f32.mrb[0].mxu0
  %v1590 = vadd.f32 0.0, %v1589
  %v1591 = vpop.f32.mrb[0].mxu0
  %v1592 = vpop.f32.mrb[0].mxu0
  %v1593 = vadd.f32 0.0, %v1592
  %v1594 = vpop.f32.mrb[0].mxu0
  %1595 = vmatprep.mubr.bf16.mxu0 0
  %1596 = vmatmul.mubr.bf16.gmra.mrb[0].mxu0 %v1442
  %v1597 = vpop.f32.mrb[0].mxu0
  %v1598 = vadd.f32 0.0, %v1597
  %v1599 = vpop.f32.mrb[0].mxu0
  %v1600 = vpop.f32.mrb[0].mxu0
  %v1601 = vadd.f32 0.0, %v1600
  %v1602 = vpop.f32.mrb[0].mxu0
  %1603 = vdwg.mxu0
  %vm1604 = vcmp.ge.f32.partialorder %v1574, 0.0
  %vm1605 = vcmp.ge.f32.partialorder %v1577, 0.0
  %vm1606 = vcmp.ge.f32.partialorder %v1582, 0.0
  %vm1607 = vcmp.ge.f32.partialorder %v1585, 0.0
  %vm1608 = vcmp.ge.f32.partialorder %v1590, 0.0
  %vm1609 = vcmp.ge.f32.partialorder %v1593, 0.0
  %vm1610 = vcmp.ge.f32.partialorder %v1598, 0.0
  %vm1611 = vcmp.ge.f32.partialorder %v1601, 0.0
  %v1612 = vmul.f32 %v1574, 0.01
  %v1613 = vmul.f32 %v1577, 0.01
  %v1614 = vmul.f32 %v1582, 0.01
  %v1615 = vmul.f32 %v1585, 0.01
  %v1616 = vmul.f32 %v1590, 0.01
  %v1617 = vmul.f32 %v1593, 0.01
  %v1618 = vmul.f32 %v1598, 0.01
  %v1619 = vmul.f32 %v1601, 0.01
  %v1620 = vsel %vm1604, %v1574, %v1612
  %v1621 = vsel %vm1605, %v1577, %v1613
  %v1622 = vsel %vm1606, %v1582, %v1614
  %v1623 = vsel %vm1607, %v1585, %v1615
  %v1624 = vsel %vm1608, %v1590, %v1616
  %v1625 = vsel %vm1609, %v1593, %v1617
  %v1626 = vsel %vm1610, %v1598, %v1618
  %v1627 = vsel %vm1611, %v1601, %v1619
  %v1628 = vsel %vm178, %v1620, 0.0
  %v1629 = vsel %vm178, %v1621, 0.0
  %v1630 = vadd.f32 %v1628, %v1629
  %v1631 = vsel %vm178, %v1622, 0.0
  %v1632 = vadd.f32 %v1630, %v1631
  %v1633 = vsel %vm178, %v1623, 0.0
  %v1634 = vadd.f32 %v1632, %v1633
  %v1635 = vsel %vm178, %v1624, 0.0
  %v1636 = vadd.f32 %v1634, %v1635
  %v1637 = vsel %vm178, %v1625, 0.0
  %v1638 = vadd.f32 %v1636, %v1637
  %v1639 = vsel %vm178, %v1626, 0.0
  %v1640 = vadd.f32 %v1638, %v1639
  %v1641 = vsel %vm178, %v1627, 0.0
  %v1642 = vadd.f32 %v1640, %v1641
  %v1643 = vrot.slane %v1642, 4
  %v1644 = vadd.f32 %v1642, %v1643
  %v1645 = vrot.slane %v1644, 2
  %v1646 = vadd.f32 %v1644, %v1645
  %v1647 = vrot.slane %v1646, 1
  %v1648 = vadd.f32 %v1646, %v1647
  %v1649 = vmul.f32 %v1648, %v200
  %v1650 = vmul.f32 %v1620, %v1620
  %v1651 = vmul.f32 %v1621, %v1621
  %v1652 = vmul.f32 %v1622, %v1622
  %v1653 = vmul.f32 %v1623, %v1623
  %v1654 = vmul.f32 %v1624, %v1624
  %v1655 = vmul.f32 %v1625, %v1625
  %v1656 = vmul.f32 %v1626, %v1626
  %v1657 = vmul.f32 %v1627, %v1627
  %v1658 = vsel %vm178, %v1650, 0.0
  %v1659 = vsel %vm178, %v1651, 0.0
  %v1660 = vadd.f32 %v1658, %v1659
  %v1661 = vsel %vm178, %v1652, 0.0
  %v1662 = vadd.f32 %v1660, %v1661
  %v1663 = vsel %vm178, %v1653, 0.0
  %v1664 = vadd.f32 %v1662, %v1663
  %v1665 = vsel %vm178, %v1654, 0.0
  %v1666 = vadd.f32 %v1664, %v1665
  %v1667 = vsel %vm178, %v1655, 0.0
  %v1668 = vadd.f32 %v1666, %v1667
  %v1669 = vsel %vm178, %v1656, 0.0
  %v1670 = vadd.f32 %v1668, %v1669
  %v1671 = vsel %vm178, %v1657, 0.0
  %v1672 = vadd.f32 %v1670, %v1671
  %v1673 = vrot.slane %v1672, 4
  %v1674 = vadd.f32 %v1672, %v1673
  %v1675 = vrot.slane %v1674, 2
  %v1676 = vadd.f32 %v1674, %v1675
  %v1677 = vrot.slane %v1676, 1
  %v1678 = vadd.f32 %v1676, %v1677
  %v1679 = vmul.f32 %v1678, %v200
  %v1680 = vmul.f32 %v1649, %v1649
  %v1681 = vsub.f32 %v1679, %v1680
  %v1682 = vmax.f32 %v1681, 0.0
  %v1683 = vsub.f32 %v1620, %v1649
  %v1684 = vsub.f32 %v1621, %v1649
  %v1685 = vsub.f32 %v1622, %v1649
  %v1686 = vsub.f32 %v1623, %v1649
  %v1687 = vsub.f32 %v1624, %v1649
  %v1688 = vsub.f32 %v1625, %v1649
  %v1689 = vsub.f32 %v1626, %v1649
  %v1690 = vsub.f32 %v1627, %v1649
  %v1691 = vadd.f32 %v1682, 1e-05
  %v1692 = vrsqrt.pop %v1691
  %v1693 = vmul.f32 %v1683, %v1692
  %v1694 = vmul.f32 %v1684, %v1692
  %v1695 = vmul.f32 %v1685, %v1692
  %v1696 = vmul.f32 %v1686, %v1692
  %v1697 = vmul.f32 %v1687, %v1692
  %v1698 = vmul.f32 %v1688, %v1692
  %v1699 = vmul.f32 %v1689, %v1692
  %v1700 = vmul.f32 %v1690, %v1692
  %v1701 = vpack.c.bf16 %v1694, %v1693
  %v1702 = vpack.c.bf16 %v1696, %v1695
  %v1703 = vpack.c.bf16 %v1698, %v1697
  %v1704 = vpack.c.bf16 %v1700, %v1699
  %v1706 = vsel %vm178, %v1701, 0
  %v1709 = vsel %vm178, %v1702, 0
  %v1712 = vsel %vm178, %v1703, 0
  %v1715 = vsel %vm178, %v1704, 0
  %v1718 = vsel %vm269, %v1513, 0
  %1720 = vmatprep.subr.bf16.mxu0 0
  %1721 = vmatpush1.bf16.msra.mxu0 %v1718
  %1722 = vmatprep.subr.bf16.mxu0 0
  %1723 = vmatpush1.bf16.msra.mxu0 0
  %1724 = vmatprep.subr.bf16.mxu0 0
  %1725 = vmatpush1.bf16.msra.mxu0 0
  %1726 = vmatprep.subr.bf16.mxu0 0
  %1727 = vmatpush1.bf16.msra.mxu0 0
  %1728 = vmatprep.subr.bf16.mxu0 0
  %1729 = vmatpush1.bf16.msra.mxu0 0
  %1730 = vmatprep.subr.bf16.mxu0 0
  %1731 = vmatpush1.bf16.msra.mxu0 0
  %1732 = vmatprep.subr.bf16.mxu0 0
  %1733 = vmatpush1.bf16.msra.mxu0 0
  %1734 = vmatprep.subr.bf16.mxu0 0
  %1735 = vmatpush1.bf16.msra.mxu0 0
  %1736 = vmatprep.subr.bf16.mxu0 0
  %1737 = vmatpush1.bf16.msra.mxu0 0
  %1738 = vmatprep.subr.bf16.mxu0 0
  %1739 = vmatpush1.bf16.msra.mxu0 0
  %1740 = vmatprep.subr.bf16.mxu0 0
  %1741 = vmatpush1.bf16.msra.mxu0 0
  %1742 = vmatprep.subr.bf16.mxu0 0
  %1743 = vmatpush1.bf16.msra.mxu0 0
  %1744 = vmatprep.subr.bf16.mxu0 0
  %1745 = vmatpush1.bf16.msra.mxu0 0
  %1746 = vmatprep.subr.bf16.mxu0 0
  %1747 = vmatpush1.bf16.msra.mxu0 0
  %1748 = vmatprep.subr.bf16.mxu0 0
  %1749 = vmatpush1.bf16.msra.mxu0 0
  %1750 = vmatprep.subr.bf16.mxu0 0
  %1751 = vmatpush1.bf16.msra.mxu0 0
  %1752 = vmatprep.mubr.bf16.mxu0 0
  %1753 = vmatmul.mubr.bf16.gmra.mrb[0].mxu0 %v1706
  %v1754 = vpop.f32.mrb[0].mxu0
  %v1755 = vadd.f32 0.0, %v1754
  %v1756 = vpop.f32.mrb[0].mxu0
  %v1757 = vpop.f32.mrb[0].mxu0
  %v1758 = vadd.f32 0.0, %v1757
  %v1759 = vpop.f32.mrb[0].mxu0
  %1760 = vmatprep.mubr.bf16.mxu0 0
  %1761 = vmatmul.mubr.bf16.gmra.mrb[0].mxu0 %v1709
  %v1762 = vpop.f32.mrb[0].mxu0
  %v1763 = vadd.f32 0.0, %v1762
  %v1764 = vpop.f32.mrb[0].mxu0
  %v1765 = vpop.f32.mrb[0].mxu0
  %v1766 = vadd.f32 0.0, %v1765
  %v1767 = vpop.f32.mrb[0].mxu0
  %1768 = vmatprep.mubr.bf16.mxu0 0
  %1769 = vmatmul.mubr.bf16.gmra.mrb[0].mxu0 %v1712
  %v1770 = vpop.f32.mrb[0].mxu0
  %v1771 = vadd.f32 0.0, %v1770
  %v1772 = vpop.f32.mrb[0].mxu0
  %v1773 = vpop.f32.mrb[0].mxu0
  %v1774 = vadd.f32 0.0, %v1773
  %v1775 = vpop.f32.mrb[0].mxu0
  %1776 = vmatprep.mubr.bf16.mxu0 0
  %1777 = vmatmul.mubr.bf16.gmra.mrb[0].mxu0 %v1715
  %v1778 = vpop.f32.mrb[0].mxu0
  %v1779 = vadd.f32 0.0, %v1778
  %v1780 = vpop.f32.mrb[0].mxu0
  %v1781 = vpop.f32.mrb[0].mxu0
  %v1782 = vadd.f32 0.0, %v1781
  %v1783 = vpop.f32.mrb[0].mxu0
  %1784 = vdwg.mxu0
  %vm1785 = vcmp.ge.f32.partialorder %v1755, 0.0
  %vm1786 = vcmp.ge.f32.partialorder %v1758, 0.0
  %vm1787 = vcmp.ge.f32.partialorder %v1763, 0.0
  %vm1788 = vcmp.ge.f32.partialorder %v1766, 0.0
  %vm1789 = vcmp.ge.f32.partialorder %v1771, 0.0
  %vm1790 = vcmp.ge.f32.partialorder %v1774, 0.0
  %vm1791 = vcmp.ge.f32.partialorder %v1779, 0.0
  %vm1792 = vcmp.ge.f32.partialorder %v1782, 0.0
  %v1793 = vmul.f32 %v1755, 0.01
  %v1794 = vmul.f32 %v1758, 0.01
  %v1795 = vmul.f32 %v1763, 0.01
  %v1796 = vmul.f32 %v1766, 0.01
  %v1797 = vmul.f32 %v1771, 0.01
  %v1798 = vmul.f32 %v1774, 0.01
  %v1799 = vmul.f32 %v1779, 0.01
  %v1800 = vmul.f32 %v1782, 0.01
  %v1801 = vsel %vm1785, %v1755, %v1793
  %v1802 = vsel %vm1786, %v1758, %v1794
  %v1803 = vsel %vm1787, %v1763, %v1795
  %v1804 = vsel %vm1788, %v1766, %v1796
  %v1805 = vsel %vm1789, %v1771, %v1797
  %v1806 = vsel %vm1790, %v1774, %v1798
  %v1807 = vsel %vm1791, %v1779, %v1799
  %v1808 = vsel %vm1792, %v1782, %v1800
  %v1809 = vsel %vm178, %v1801, 0.0
  %v1810 = vsel %vm178, %v1802, 0.0
  %v1811 = vadd.f32 %v1809, %v1810
  %v1812 = vsel %vm178, %v1803, 0.0
  %v1813 = vadd.f32 %v1811, %v1812
  %v1814 = vsel %vm178, %v1804, 0.0
  %v1815 = vadd.f32 %v1813, %v1814
  %v1816 = vsel %vm178, %v1805, 0.0
  %v1817 = vadd.f32 %v1815, %v1816
  %v1818 = vsel %vm178, %v1806, 0.0
  %v1819 = vadd.f32 %v1817, %v1818
  %v1820 = vsel %vm178, %v1807, 0.0
  %v1821 = vadd.f32 %v1819, %v1820
  %v1822 = vsel %vm178, %v1808, 0.0
  %v1823 = vadd.f32 %v1821, %v1822
  %v1824 = vrot.slane %v1823, 4
  %v1825 = vadd.f32 %v1823, %v1824
  %v1826 = vrot.slane %v1825, 2
  %v1827 = vadd.f32 %v1825, %v1826
  %v1828 = vrot.slane %v1827, 1
  %v1829 = vadd.f32 %v1827, %v1828
  %v1830 = vmul.f32 %v1829, %v200
  %v1831 = vmul.f32 %v1801, %v1801
  %v1832 = vmul.f32 %v1802, %v1802
  %v1833 = vmul.f32 %v1803, %v1803
  %v1834 = vmul.f32 %v1804, %v1804
  %v1835 = vmul.f32 %v1805, %v1805
  %v1836 = vmul.f32 %v1806, %v1806
  %v1837 = vmul.f32 %v1807, %v1807
  %v1838 = vmul.f32 %v1808, %v1808
  %v1839 = vsel %vm178, %v1831, 0.0
  %v1840 = vsel %vm178, %v1832, 0.0
  %v1841 = vadd.f32 %v1839, %v1840
  %v1842 = vsel %vm178, %v1833, 0.0
  %v1843 = vadd.f32 %v1841, %v1842
  %v1844 = vsel %vm178, %v1834, 0.0
  %v1845 = vadd.f32 %v1843, %v1844
  %v1846 = vsel %vm178, %v1835, 0.0
  %v1847 = vadd.f32 %v1845, %v1846
  %v1848 = vsel %vm178, %v1836, 0.0
  %v1849 = vadd.f32 %v1847, %v1848
  %v1850 = vsel %vm178, %v1837, 0.0
  %v1851 = vadd.f32 %v1849, %v1850
  %v1852 = vsel %vm178, %v1838, 0.0
  %v1853 = vadd.f32 %v1851, %v1852
  %v1854 = vrot.slane %v1853, 4
  %v1855 = vadd.f32 %v1853, %v1854
  %v1856 = vrot.slane %v1855, 2
  %v1857 = vadd.f32 %v1855, %v1856
  %v1858 = vrot.slane %v1857, 1
  %v1859 = vadd.f32 %v1857, %v1858
  %v1860 = vmul.f32 %v1859, %v200
  %v1861 = vmul.f32 %v1830, %v1830
  %v1862 = vsub.f32 %v1860, %v1861
  %v1863 = vmax.f32 %v1862, 0.0
  %v1864 = vsub.f32 %v1801, %v1830
  %v1865 = vsub.f32 %v1802, %v1830
  %v1866 = vsub.f32 %v1803, %v1830
  %v1867 = vsub.f32 %v1804, %v1830
  %v1868 = vsub.f32 %v1805, %v1830
  %v1869 = vsub.f32 %v1806, %v1830
  %v1870 = vsub.f32 %v1807, %v1830
  %v1871 = vsub.f32 %v1808, %v1830
  %v1872 = vadd.f32 %v1863, 1e-05
  %v1873 = vrsqrt.pop %v1872
  %v1874 = vmul.f32 %v1864, %v1873
  %v1875 = vmul.f32 %v1865, %v1873
  %v1876 = vmul.f32 %v1866, %v1873
  %v1877 = vmul.f32 %v1867, %v1873
  %v1878 = vmul.f32 %v1868, %v1873
  %v1879 = vmul.f32 %v1869, %v1873
  %v1880 = vmul.f32 %v1870, %v1873
  %v1881 = vmul.f32 %v1871, %v1873
  %v1882 = vpack.c.bf16 %v1875, %v1874
  %v1883 = vpack.c.bf16 %v1877, %v1876
  %v1884 = vpack.c.bf16 %v1879, %v1878
  %v1885 = vpack.c.bf16 %v1881, %v1880
  %v1887 = vsel %vm178, %v1882, 0
  %v1890 = vsel %vm178, %v1883, 0
  %v1893 = vsel %vm178, %v1884, 0
  %v1896 = vsel %vm178, %v1885, 0
  %v1898 = vpack.c.bf16 %v1577, %v1574
  %v1899 = vpack.c.bf16 %v1585, %v1582
  %v1900 = vpack.c.bf16 %v1593, %v1590
  %v1901 = vpack.c.bf16 %v1601, %v1598
  %v1903 = vsel %vm178, 0, %v1898
  %v1906 = vsel %vm178, 0, %v1899
  %v1909 = vsel %vm178, 0, %v1900
  %v1912 = vsel %vm178, 0, %v1901
  %1914 = vmatprep.subr.bf16.mxu0 0
  %1915 = vmatpush1.bf16.msra.mxu0 %v1887
  %1916 = vmatprep.subr.bf16.mxu0 0
  %1917 = vmatpush1.bf16.msra.mxu0 %v1890
  %1918 = vmatprep.subr.bf16.mxu0 0
  %1919 = vmatpush1.bf16.msra.mxu0 %v1893
  %1920 = vmatprep.subr.bf16.mxu0 0
  %1921 = vmatpush1.bf16.msra.mxu0 %v1896
  %1922 = vmatprep.subr.bf16.mxu0 0
  %1923 = vmatpush1.bf16.msra.mxu0 %v1903
  %1924 = vmatprep.subr.bf16.mxu0 0
  %1925 = vmatpush1.bf16.msra.mxu0 %v1906
  %1926 = vmatprep.subr.bf16.mxu0 0
  %1927 = vmatpush1.bf16.msra.mxu0 %v1909
  %1928 = vmatprep.subr.bf16.mxu0 0
  %1929 = vmatpush1.bf16.msra.mxu0 %v1912
  %1930 = vmatprep.subr.bf16.mxu0 0
  %1931 = vmatpush1.bf16.msra.mxu0 0
  %1932 = vmatprep.subr.bf16.mxu0 0
  %1933 = vmatpush1.bf16.msra.mxu0 0
  %1934 = vmatprep.subr.bf16.mxu0 0
  %1935 = vmatpush1.bf16.msra.mxu0 0
  %1936 = vmatprep.subr.bf16.mxu0 0
  %1937 = vmatpush1.bf16.msra.mxu0 0
  %1938 = vmatprep.subr.bf16.mxu0 0
  %1939 = vmatpush1.bf16.msra.mxu0 0
  %1940 = vmatprep.subr.bf16.mxu0 0
  %1941 = vmatpush1.bf16.msra.mxu0 0
  %1942 = vmatprep.subr.bf16.mxu0 0
  %1943 = vmatpush1.bf16.msra.mxu0 0
  %1944 = vmatprep.subr.bf16.mxu0 0
  %1945 = vmatpush1.bf16.msra.mxu0 0
  %1946 = vmatprep.mubr.bf16.mxu0 0
  %1947 = vmatmul.mubr.bf16.gmra.mrb[0].mxu0 %v484
  %v1948 = vpop.f32.mrb[0].mxu0
  %v1949 = vadd.f32 0.0, %v1948
  %v1950 = vpop.f32.mrb[0].mxu0
  %v1951 = vpop.f32.mrb[0].mxu0
  %v1952 = vadd.f32 0.0, %v1951
  %v1953 = vpop.f32.mrb[0].mxu0
  %1954 = vmatprep.mubr.bf16.mxu0 0
  %1955 = vmatmul.mubr.bf16.gmra.mrb[0].mxu0 %v485
  %v1956 = vpop.f32.mrb[0].mxu0
  %v1957 = vadd.f32 0.0, %v1956
  %v1958 = vpop.f32.mrb[0].mxu0
  %v1959 = vpop.f32.mrb[0].mxu0
  %v1960 = vadd.f32 0.0, %v1959
  %v1961 = vpop.f32.mrb[0].mxu0
  %1962 = vmatprep.mubr.bf16.mxu0 0
  %1963 = vmatmul.mubr.bf16.gmra.mrb[0].mxu0 %v486
  %v1964 = vpop.f32.mrb[0].mxu0
  %v1965 = vadd.f32 0.0, %v1964
  %v1966 = vpop.f32.mrb[0].mxu0
  %v1967 = vpop.f32.mrb[0].mxu0
  %v1968 = vadd.f32 0.0, %v1967
  %v1969 = vpop.f32.mrb[0].mxu0
  %1970 = vmatprep.mubr.bf16.mxu0 0
  %1971 = vmatmul.mubr.bf16.gmra.mrb[0].mxu0 %v487
  %v1972 = vpop.f32.mrb[0].mxu0
  %v1973 = vadd.f32 0.0, %v1972
  %v1974 = vpop.f32.mrb[0].mxu0
  %v1975 = vpop.f32.mrb[0].mxu0
  %v1976 = vadd.f32 0.0, %v1975
  %v1977 = vpop.f32.mrb[0].mxu0
  %1978 = vdwg.mxu0
  %v1979 = vlaneseq
  %v1980 = vshrl.u32 %v1979, 7
  %v1981 = vsub.s32 0, %v1980
  %v1982 = vrot.slane %v1526, %v1981
  %1984 = vrot.lane.b32.xlu0 %v1982, 8
  %v1985 = vpop.permute.xlu0 %1984
  %v1987 = vadd.f32 %v1949, %v1985
  %v1988 = vadd.f32 %v1952, %v1985
  %v1989 = vadd.f32 %v1957, %v1985
  %v1990 = vadd.f32 %v1960, %v1985
  %v1991 = vadd.f32 %v1965, %v1985
  %v1992 = vadd.f32 %v1968, %v1985
  %v1993 = vadd.f32 %v1973, %v1985
  %v1994 = vadd.f32 %v1976, %v1985
  %1996 = vset.pattern.permute.xlu0 0
  %1997 = vperm.xlu0 %1996, %v1693
  %v1998 = vpop.permute.xlu0 %1997
  %2001 = vset.pattern.permute.xlu0 0
  %2002 = vperm.xlu0 %2001, %v1694
  %v2003 = vpop.permute.xlu0 %2002
  %2006 = vset.pattern.permute.xlu0 0
  %2007 = vperm.xlu0 %2006, %v1695
  %v2008 = vpop.permute.xlu0 %2007
  %2011 = vset.pattern.permute.xlu0 0
  %2012 = vperm.xlu0 %2011, %v1696
  %v2013 = vpop.permute.xlu0 %2012
  %2016 = vset.pattern.permute.xlu0 0
  %2017 = vperm.xlu0 %2016, %v1697
  %v2018 = vpop.permute.xlu0 %2017
  %2021 = vset.pattern.permute.xlu0 0
  %2022 = vperm.xlu0 %2021, %v1698
  %v2023 = vpop.permute.xlu0 %2022
  %2026 = vset.pattern.permute.xlu0 0
  %2027 = vperm.xlu0 %2026, %v1699
  %v2028 = vpop.permute.xlu0 %2027
  %2031 = vset.pattern.permute.xlu0 0
  %2032 = vperm.xlu0 %2031, %v1700
  %v2033 = vpop.permute.xlu0 %2032
  %v2035 = vmul.f32 %v1998, %v1949
  %v2036 = vmul.f32 %v2003, %v1952
  %v2037 = vmul.f32 %v2008, %v1957
  %v2038 = vmul.f32 %v2013, %v1960
  %v2039 = vmul.f32 %v2018, %v1965
  %v2040 = vmul.f32 %v2023, %v1968
  %v2041 = vmul.f32 %v2028, %v1973
  %v2042 = vmul.f32 %v2033, %v1976
  %2043 = vset.pattern.permute.xlu0 1
  %2044 = vperm.xlu0 %2043, %v1693
  %v2045 = vpop.permute.xlu0 %2044
  %2047 = vset.pattern.permute.xlu0 1
  %2048 = vperm.xlu0 %2047, %v1694
  %v2049 = vpop.permute.xlu0 %2048
  %2051 = vset.pattern.permute.xlu0 1
  %2052 = vperm.xlu0 %2051, %v1695
  %v2053 = vpop.permute.xlu0 %2052
  %2055 = vset.pattern.permute.xlu0 1
  %2056 = vperm.xlu0 %2055, %v1696
  %v2057 = vpop.permute.xlu0 %2056
  %2059 = vset.pattern.permute.xlu0 1
  %2060 = vperm.xlu0 %2059, %v1697
  %v2061 = vpop.permute.xlu0 %2060
  %2063 = vset.pattern.permute.xlu0 1
  %2064 = vperm.xlu0 %2063, %v1698
  %v2065 = vpop.permute.xlu0 %2064
  %2067 = vset.pattern.permute.xlu0 1
  %2068 = vperm.xlu0 %2067, %v1699
  %v2069 = vpop.permute.xlu0 %2068
  %2071 = vset.pattern.permute.xlu0 1
  %2072 = vperm.xlu0 %2071, %v1700
  %v2073 = vpop.permute.xlu0 %2072
  %v2075 = vmul.f32 %v2045, %v1949
  %v2076 = vmul.f32 %v2049, %v1952
  %v2077 = vmul.f32 %v2053, %v1957
  %v2078 = vmul.f32 %v2057, %v1960
  %v2079 = vmul.f32 %v2061, %v1965
  %v2080 = vmul.f32 %v2065, %v1968
  %v2081 = vmul.f32 %v2069, %v1973
  %v2082 = vmul.f32 %v2073, %v1976
  %2083 = vset.pattern.permute.xlu0 2
  %2084 = vperm.xlu0 %2083, %v1693
  %v2085 = vpop.permute.xlu0 %2084
  %2087 = vset.pattern.permute.xlu0 2
  %2088 = vperm.xlu0 %2087, %v1694
  %v2089 = vpop.permute.xlu0 %2088
  %2091 = vset.pattern.permute.xlu0 2
  %2092 = vperm.xlu0 %2091, %v1695
  %v2093 = vpop.permute.xlu0 %2092
  %2095 = vset.pattern.permute.xlu0 2
  %2096 = vperm.xlu0 %2095, %v1696
  %v2097 = vpop.permute.xlu0 %2096
  %2099 = vset.pattern.permute.xlu0 2
  %2100 = vperm.xlu0 %2099, %v1697
  %v2101 = vpop.permute.xlu0 %2100
  %2103 = vset.pattern.permute.xlu0 2
  %2104 = vperm.xlu0 %2103, %v1698
  %v2105 = vpop.permute.xlu0 %2104
  %2107 = vset.pattern.permute.xlu0 2
  %2108 = vperm.xlu0 %2107, %v1699
  %v2109 = vpop.permute.xlu0 %2108
  %2111 = vset.pattern.permute.xlu0 2
  %2112 = vperm.xlu0 %2111, %v1700
  %v2113 = vpop.permute.xlu0 %2112
  %v2115 = vmul.f32 %v2085, %v1949
  %v2116 = vmul.f32 %v2089, %v1952
  %v2117 = vmul.f32 %v2093, %v1957
  %v2118 = vmul.f32 %v2097, %v1960
  %v2119 = vmul.f32 %v2101, %v1965
  %v2120 = vmul.f32 %v2105, %v1968
  %v2121 = vmul.f32 %v2109, %v1973
  %v2122 = vmul.f32 %v2113, %v1976
  %2123 = vset.pattern.permute.xlu0 3
  %2124 = vperm.xlu0 %2123, %v1693
  %v2125 = vpop.permute.xlu0 %2124
  %2127 = vset.pattern.permute.xlu0 3
  %2128 = vperm.xlu0 %2127, %v1694
  %v2129 = vpop.permute.xlu0 %2128
  %2131 = vset.pattern.permute.xlu0 3
  %2132 = vperm.xlu0 %2131, %v1695
  %v2133 = vpop.permute.xlu0 %2132
  %2135 = vset.pattern.permute.xlu0 3
  %2136 = vperm.xlu0 %2135, %v1696
  %v2137 = vpop.permute.xlu0 %2136
  %2139 = vset.pattern.permute.xlu0 3
  %2140 = vperm.xlu0 %2139, %v1697
  %v2141 = vpop.permute.xlu0 %2140
  %2143 = vset.pattern.permute.xlu0 3
  %2144 = vperm.xlu0 %2143, %v1698
  %v2145 = vpop.permute.xlu0 %2144
  %2147 = vset.pattern.permute.xlu0 3
  %2148 = vperm.xlu0 %2147, %v1699
  %v2149 = vpop.permute.xlu0 %2148
  %2151 = vset.pattern.permute.xlu0 3
  %2152 = vperm.xlu0 %2151, %v1700
  %v2153 = vpop.permute.xlu0 %2152
  %v2155 = vmul.f32 %v2125, %v1949
  %v2156 = vmul.f32 %v2129, %v1952
  %v2157 = vmul.f32 %v2133, %v1957
  %v2158 = vmul.f32 %v2137, %v1960
  %v2159 = vmul.f32 %v2141, %v1965
  %v2160 = vmul.f32 %v2145, %v1968
  %v2161 = vmul.f32 %v2149, %v1973
  %v2162 = vmul.f32 %v2153, %v1976
  %2163 = vset.pattern.permute.xlu0 4
  %2164 = vperm.xlu0 %2163, %v1693
  %v2165 = vpop.permute.xlu0 %2164
  %2167 = vset.pattern.permute.xlu0 4
  %2168 = vperm.xlu0 %2167, %v1694
  %v2169 = vpop.permute.xlu0 %2168
  %2171 = vset.pattern.permute.xlu0 4
  %2172 = vperm.xlu0 %2171, %v1695
  %v2173 = vpop.permute.xlu0 %2172
  %2175 = vset.pattern.permute.xlu0 4
  %2176 = vperm.xlu0 %2175, %v1696
  %v2177 = vpop.permute.xlu0 %2176
  %2179 = vset.pattern.permute.xlu0 4
  %2180 = vperm.xlu0 %2179, %v1697
  %v2181 = vpop.permute.xlu0 %2180
  %2183 = vset.pattern.permute.xlu0 4
  %2184 = vperm.xlu0 %2183, %v1698
  %v2185 = vpop.permute.xlu0 %2184
  %2187 = vset.pattern.permute.xlu0 4
  %2188 = vperm.xlu0 %2187, %v1699
  %v2189 = vpop.permute.xlu0 %2188
  %2191 = vset.pattern.permute.xlu0 4
  %2192 = vperm.xlu0 %2191, %v1700
  %v2193 = vpop.permute.xlu0 %2192
  %v2195 = vmul.f32 %v2165, %v1949
  %v2196 = vmul.f32 %v2169, %v1952
  %v2197 = vmul.f32 %v2173, %v1957
  %v2198 = vmul.f32 %v2177, %v1960
  %v2199 = vmul.f32 %v2181, %v1965
  %v2200 = vmul.f32 %v2185, %v1968
  %v2201 = vmul.f32 %v2189, %v1973
  %v2202 = vmul.f32 %v2193, %v1976
  %2203 = vset.pattern.permute.xlu0 5
  %2204 = vperm.xlu0 %2203, %v1693
  %v2205 = vpop.permute.xlu0 %2204
  %2207 = vset.pattern.permute.xlu0 5
  %2208 = vperm.xlu0 %2207, %v1694
  %v2209 = vpop.permute.xlu0 %2208
  %2211 = vset.pattern.permute.xlu0 5
  %2212 = vperm.xlu0 %2211, %v1695
  %v2213 = vpop.permute.xlu0 %2212
  %2215 = vset.pattern.permute.xlu0 5
  %2216 = vperm.xlu0 %2215, %v1696
  %v2217 = vpop.permute.xlu0 %2216
  %2219 = vset.pattern.permute.xlu0 5
  %2220 = vperm.xlu0 %2219, %v1697
  %v2221 = vpop.permute.xlu0 %2220
  %2223 = vset.pattern.permute.xlu0 5
  %2224 = vperm.xlu0 %2223, %v1698
  %v2225 = vpop.permute.xlu0 %2224
  %2227 = vset.pattern.permute.xlu0 5
  %2228 = vperm.xlu0 %2227, %v1699
  %v2229 = vpop.permute.xlu0 %2228
  %2231 = vset.pattern.permute.xlu0 5
  %2232 = vperm.xlu0 %2231, %v1700
  %v2233 = vpop.permute.xlu0 %2232
  %v2235 = vmul.f32 %v2205, %v1949
  %v2236 = vmul.f32 %v2209, %v1952
  %v2237 = vmul.f32 %v2213, %v1957
  %v2238 = vmul.f32 %v2217, %v1960
  %v2239 = vmul.f32 %v2221, %v1965
  %v2240 = vmul.f32 %v2225, %v1968
  %v2241 = vmul.f32 %v2229, %v1973
  %v2242 = vmul.f32 %v2233, %v1976
  %2243 = vset.pattern.permute.xlu0 6
  %2244 = vperm.xlu0 %2243, %v1693
  %v2245 = vpop.permute.xlu0 %2244
  %2247 = vset.pattern.permute.xlu0 6
  %2248 = vperm.xlu0 %2247, %v1694
  %v2249 = vpop.permute.xlu0 %2248
  %2251 = vset.pattern.permute.xlu0 6
  %2252 = vperm.xlu0 %2251, %v1695
  %v2253 = vpop.permute.xlu0 %2252
  %2255 = vset.pattern.permute.xlu0 6
  %2256 = vperm.xlu0 %2255, %v1696
  %v2257 = vpop.permute.xlu0 %2256
  %2259 = vset.pattern.permute.xlu0 6
  %2260 = vperm.xlu0 %2259, %v1697
  %v2261 = vpop.permute.xlu0 %2260
  %2263 = vset.pattern.permute.xlu0 6
  %2264 = vperm.xlu0 %2263, %v1698
  %v2265 = vpop.permute.xlu0 %2264
  %2267 = vset.pattern.permute.xlu0 6
  %2268 = vperm.xlu0 %2267, %v1699
  %v2269 = vpop.permute.xlu0 %2268
  %2271 = vset.pattern.permute.xlu0 6
  %2272 = vperm.xlu0 %2271, %v1700
  %v2273 = vpop.permute.xlu0 %2272
  %v2275 = vmul.f32 %v2245, %v1949
  %v2276 = vmul.f32 %v2249, %v1952
  %v2277 = vmul.f32 %v2253, %v1957
  %v2278 = vmul.f32 %v2257, %v1960
  %v2279 = vmul.f32 %v2261, %v1965
  %v2280 = vmul.f32 %v2265, %v1968
  %v2281 = vmul.f32 %v2269, %v1973
  %v2282 = vmul.f32 %v2273, %v1976
  %2283 = vset.pattern.permute.xlu0 7
  %2284 = vperm.xlu0 %2283, %v1693
  %v2285 = vpop.permute.xlu0 %2284
  %2287 = vset.pattern.permute.xlu0 7
  %2288 = vperm.xlu0 %2287, %v1694
  %v2289 = vpop.permute.xlu0 %2288
  %2291 = vset.pattern.permute.xlu0 7
  %2292 = vperm.xlu0 %2291, %v1695
  %v2293 = vpop.permute.xlu0 %2292
  %2295 = vset.pattern.permute.xlu0 7
  %2296 = vperm.xlu0 %2295, %v1696
  %v2297 = vpop.permute.xlu0 %2296
  %2299 = vset.pattern.permute.xlu0 7
  %2300 = vperm.xlu0 %2299, %v1697
  %v2301 = vpop.permute.xlu0 %2300
  %2303 = vset.pattern.permute.xlu0 7
  %2304 = vperm.xlu0 %2303, %v1698
  %v2305 = vpop.permute.xlu0 %2304
  %2307 = vset.pattern.permute.xlu0 7
  %2308 = vperm.xlu0 %2307, %v1699
  %v2309 = vpop.permute.xlu0 %2308
  %2311 = vset.pattern.permute.xlu0 7
  %2312 = vperm.xlu0 %2311, %v1700
  %v2313 = vpop.permute.xlu0 %2312
  %v2315 = vmul.f32 %v2285, %v1949
  %v2316 = vmul.f32 %v2289, %v1952
  %v2317 = vmul.f32 %v2293, %v1957
  %v2318 = vmul.f32 %v2297, %v1960
  %v2319 = vmul.f32 %v2301, %v1965
  %v2320 = vmul.f32 %v2305, %v1968
  %v2321 = vmul.f32 %v2309, %v1973
  %v2322 = vmul.f32 %v2313, %v1976
  %2331 = vrot.lane.b32.xlu0 %v2075, 8
  %v2332 = vpop.permute.xlu0 %2331
  %2333 = vrot.lane.b32.xlu0 %v2076, 8
  %v2334 = vpop.permute.xlu0 %2333
  %2335 = vrot.lane.b32.xlu0 %v2077, 8
  %v2336 = vpop.permute.xlu0 %2335
  %2337 = vrot.lane.b32.xlu0 %v2078, 8
  %v2338 = vpop.permute.xlu0 %2337
  %2339 = vrot.lane.b32.xlu0 %v2079, 8
  %v2340 = vpop.permute.xlu0 %2339
  %2341 = vrot.lane.b32.xlu0 %v2080, 8
  %v2342 = vpop.permute.xlu0 %2341
  %2343 = vrot.lane.b32.xlu0 %v2081, 8
  %v2344 = vpop.permute.xlu0 %2343
  %2345 = vrot.lane.b32.xlu0 %v2082, 8
  %v2346 = vpop.permute.xlu0 %2345
  %2363 = vrot.lane.b32.xlu0 %v2115, 16
  %v2364 = vpop.permute.xlu0 %2363
  %2365 = vrot.lane.b32.xlu0 %v2116, 16
  %v2366 = vpop.permute.xlu0 %2365
  %2367 = vrot.lane.b32.xlu0 %v2117, 16
  %v2368 = vpop.permute.xlu0 %2367
  %2369 = vrot.lane.b32.xlu0 %v2118, 16
  %v2370 = vpop.permute.xlu0 %2369
  %2371 = vrot.lane.b32.xlu0 %v2119, 16
  %v2372 = vpop.permute.xlu0 %2371
  %2373 = vrot.lane.b32.xlu0 %v2120, 16
  %v2374 = vpop.permute.xlu0 %2373
  %2375 = vrot.lane.b32.xlu0 %v2121, 16
  %v2376 = vpop.permute.xlu0 %2375
  %2377 = vrot.lane.b32.xlu0 %v2122, 16
  %v2378 = vpop.permute.xlu0 %2377
  %2395 = vrot.lane.b32.xlu0 %v2155, 24
  %v2396 = vpop.permute.xlu0 %2395
  %2397 = vrot.lane.b32.xlu0 %v2156, 24
  %v2398 = vpop.permute.xlu0 %2397
  %2399 = vrot.lane.b32.xlu0 %v2157, 24
  %v2400 = vpop.permute.xlu0 %2399
  %2401 = vrot.lane.b32.xlu0 %v2158, 24
  %v2402 = vpop.permute.xlu0 %2401
  %2403 = vrot.lane.b32.xlu0 %v2159, 24
  %v2404 = vpop.permute.xlu0 %2403
  %2405 = vrot.lane.b32.xlu0 %v2160, 24
  %v2406 = vpop.permute.xlu0 %2405
  %2407 = vrot.lane.b32.xlu0 %v2161, 24
  %v2408 = vpop.permute.xlu0 %2407
  %2409 = vrot.lane.b32.xlu0 %v2162, 24
  %v2410 = vpop.permute.xlu0 %2409
  %2427 = vrot.lane.b32.xlu0 %v2195, 32
  %v2428 = vpop.permute.xlu0 %2427
  %2429 = vrot.lane.b32.xlu0 %v2196, 32
  %v2430 = vpop.permute.xlu0 %2429
  %2431 = vrot.lane.b32.xlu0 %v2197, 32
  %v2432 = vpop.permute.xlu0 %2431
  %2433 = vrot.lane.b32.xlu0 %v2198, 32
  %v2434 = vpop.permute.xlu0 %2433
  %2435 = vrot.lane.b32.xlu0 %v2199, 32
  %v2436 = vpop.permute.xlu0 %2435
  %2437 = vrot.lane.b32.xlu0 %v2200, 32
  %v2438 = vpop.permute.xlu0 %2437
  %2439 = vrot.lane.b32.xlu0 %v2201, 32
  %v2440 = vpop.permute.xlu0 %2439
  %2441 = vrot.lane.b32.xlu0 %v2202, 32
  %v2442 = vpop.permute.xlu0 %2441
  %2459 = vrot.lane.b32.xlu0 %v2235, 40
  %v2460 = vpop.permute.xlu0 %2459
  %2461 = vrot.lane.b32.xlu0 %v2236, 40
  %v2462 = vpop.permute.xlu0 %2461
  %2463 = vrot.lane.b32.xlu0 %v2237, 40
  %v2464 = vpop.permute.xlu0 %2463
  %2465 = vrot.lane.b32.xlu0 %v2238, 40
  %v2466 = vpop.permute.xlu0 %2465
  %2467 = vrot.lane.b32.xlu0 %v2239, 40
  %v2468 = vpop.permute.xlu0 %2467
  %2469 = vrot.lane.b32.xlu0 %v2240, 40
  %v2470 = vpop.permute.xlu0 %2469
  %2471 = vrot.lane.b32.xlu0 %v2241, 40
  %v2472 = vpop.permute.xlu0 %2471
  %2473 = vrot.lane.b32.xlu0 %v2242, 40
  %v2474 = vpop.permute.xlu0 %2473
  %2491 = vrot.lane.b32.xlu0 %v2275, 48
  %v2492 = vpop.permute.xlu0 %2491
  %2493 = vrot.lane.b32.xlu0 %v2276, 48
  %v2494 = vpop.permute.xlu0 %2493
  %2495 = vrot.lane.b32.xlu0 %v2277, 48
  %v2496 = vpop.permute.xlu0 %2495
  %2497 = vrot.lane.b32.xlu0 %v2278, 48
  %v2498 = vpop.permute.xlu0 %2497
  %2499 = vrot.lane.b32.xlu0 %v2279, 48
  %v2500 = vpop.permute.xlu0 %2499
  %2501 = vrot.lane.b32.xlu0 %v2280, 48
  %v2502 = vpop.permute.xlu0 %2501
  %2503 = vrot.lane.b32.xlu0 %v2281, 48
  %v2504 = vpop.permute.xlu0 %2503
  %2505 = vrot.lane.b32.xlu0 %v2282, 48
  %v2506 = vpop.permute.xlu0 %2505
  %2523 = vrot.lane.b32.xlu0 %v2315, 56
  %v2524 = vpop.permute.xlu0 %2523
  %2525 = vrot.lane.b32.xlu0 %v2316, 56
  %v2526 = vpop.permute.xlu0 %2525
  %2527 = vrot.lane.b32.xlu0 %v2317, 56
  %v2528 = vpop.permute.xlu0 %2527
  %2529 = vrot.lane.b32.xlu0 %v2318, 56
  %v2530 = vpop.permute.xlu0 %2529
  %2531 = vrot.lane.b32.xlu0 %v2319, 56
  %v2532 = vpop.permute.xlu0 %2531
  %2533 = vrot.lane.b32.xlu0 %v2320, 56
  %v2534 = vpop.permute.xlu0 %2533
  %2535 = vrot.lane.b32.xlu0 %v2321, 56
  %v2536 = vpop.permute.xlu0 %2535
  %2537 = vrot.lane.b32.xlu0 %v2322, 56
  %v2538 = vpop.permute.xlu0 %2537
  %v2547 = vsel %vm178, %v2035, %v2332
  %v2548 = vsel %vm178, %v2036, %v2334
  %v2549 = vsel %vm178, %v2037, %v2336
  %v2550 = vsel %vm178, %v2038, %v2338
  %v2551 = vsel %vm178, %v2039, %v2340
  %v2552 = vsel %vm178, %v2040, %v2342
  %v2553 = vsel %vm178, %v2041, %v2344
  %v2554 = vsel %vm178, %v2042, %v2346
  %v2555 = vsel %vm76, %v2547, %v2364
  %v2556 = vsel %vm76, %v2548, %v2366
  %v2557 = vsel %vm76, %v2549, %v2368
  %v2558 = vsel %vm76, %v2550, %v2370
  %v2559 = vsel %vm76, %v2551, %v2372
  %v2560 = vsel %vm76, %v2552, %v2374
  %v2561 = vsel %vm76, %v2553, %v2376
  %v2562 = vsel %vm76, %v2554, %v2378
  %v2563 = vsel %vm1141, %v2555, %v2396
  %v2564 = vsel %vm1141, %v2556, %v2398
  %v2565 = vsel %vm1141, %v2557, %v2400
  %v2566 = vsel %vm1141, %v2558, %v2402
  %v2567 = vsel %vm1141, %v2559, %v2404
  %v2568 = vsel %vm1141, %v2560, %v2406
  %v2569 = vsel %vm1141, %v2561, %v2408
  %v2570 = vsel %vm1141, %v2562, %v2410
  %v2571 = vsel %vm1150, %v2563, %v2428
  %v2572 = vsel %vm1150, %v2564, %v2430
  %v2573 = vsel %vm1150, %v2565, %v2432
  %v2574 = vsel %vm1150, %v2566, %v2434
  %v2575 = vsel %vm1150, %v2567, %v2436
  %v2576 = vsel %vm1150, %v2568, %v2438
  %v2577 = vsel %vm1150, %v2569, %v2440
  %v2578 = vsel %vm1150, %v2570, %v2442
  %v2579 = vsel %vm1159, %v2571, %v2460
  %v2580 = vsel %vm1159, %v2572, %v2462
  %v2581 = vsel %vm1159, %v2573, %v2464
  %v2582 = vsel %vm1159, %v2574, %v2466
  %v2583 = vsel %vm1159, %v2575, %v2468
  %v2584 = vsel %vm1159, %v2576, %v2470
  %v2585 = vsel %vm1159, %v2577, %v2472
  %v2586 = vsel %vm1159, %v2578, %v2474
  %v2587 = vsel %vm1168, %v2579, %v2492
  %v2588 = vsel %vm1168, %v2580, %v2494
  %v2589 = vsel %vm1168, %v2581, %v2496
  %v2590 = vsel %vm1168, %v2582, %v2498
  %v2591 = vsel %vm1168, %v2583, %v2500
  %v2592 = vsel %vm1168, %v2584, %v2502
  %v2593 = vsel %vm1168, %v2585, %v2504
  %v2594 = vsel %vm1168, %v2586, %v2506
  %v2595 = vsel %vm1177, %v2587, %v2524
  %v2596 = vsel %vm1177, %v2588, %v2526
  %v2597 = vsel %vm1177, %v2589, %v2528
  %v2598 = vsel %vm1177, %v2590, %v2530
  %v2599 = vsel %vm1177, %v2591, %v2532
  %v2600 = vsel %vm1177, %v2592, %v2534
  %v2601 = vsel %vm1177, %v2593, %v2536
  %v2602 = vsel %vm1177, %v2594, %v2538
  %v2603 = vpack.c.bf16 %v2596, %v2595
  %v2604 = vpack.c.bf16 %v2598, %v2597
  %v2605 = vpack.c.bf16 %v2600, %v2599
  %v2606 = vpack.c.bf16 %v2602, %v2601
  %v2615 = vunpack.c.l.b16 %v1514
  %v2616 = vunpack.c.l.b16 %v1515
  %v2617 = vunpack.c.l.b16 %v1516
  %v2618 = vunpack.c.l.b16 %v1517
  %v2619 = vunpack.c.l.b16 %v1518
  %v2620 = vunpack.c.l.b16 %v1519
  %v2621 = vunpack.c.l.b16 %v1520
  %v2622 = vunpack.c.l.b16 %v1521
  %v2623 = vpack.c.b16 %v2616, %v2615
  %v2624 = vpack.c.b16 %v2618, %v2617
  %v2625 = vpack.c.b16 %v2620, %v2619
  %v2626 = vpack.c.b16 %v2622, %v2621
  %v2632 = vsel %vm1214, %v2603, 0
  %v2635 = vsel %vm1214, %v2604, 0
  %v2638 = vsel %vm1214, %v2605, 0
  %v2641 = vsel %vm1214, %v2606, 0
  %2643 = vmatprep.subr.bf16.mxu0 0
  %2644 = vmatpush1.bf16.msra.mxu0 %v2623
  %2645 = vmatprep.subr.bf16.mxu0 0
  %2646 = vmatpush1.bf16.msra.mxu0 %v2624
  %2647 = vmatprep.subr.bf16.mxu0 0
  %2648 = vmatpush1.bf16.msra.mxu0 %v2625
  %2649 = vmatprep.subr.bf16.mxu0 0
  %2650 = vmatpush1.bf16.msra.mxu0 %v2626
  %2651 = vmatprep.subr.bf16.mxu0 0
  %2652 = vmatpush1.bf16.msra.mxu0 0
  %2653 = vmatprep.subr.bf16.mxu0 0
  %2654 = vmatpush1.bf16.msra.mxu0 0
  %2655 = vmatprep.subr.bf16.mxu0 0
  %2656 = vmatpush1.bf16.msra.mxu0 0
  %2657 = vmatprep.subr.bf16.mxu0 0
  %2658 = vmatpush1.bf16.msra.mxu0 0
  %2659 = vmatprep.subr.bf16.mxu0 0
  %2660 = vmatpush1.bf16.msra.mxu0 0
  %2661 = vmatprep.subr.bf16.mxu0 0
  %2662 = vmatpush1.bf16.msra.mxu0 0
  %2663 = vmatprep.subr.bf16.mxu0 0
  %2664 = vmatpush1.bf16.msra.mxu0 0
  %2665 = vmatprep.subr.bf16.mxu0 0
  %2666 = vmatpush1.bf16.msra.mxu0 0
  %2667 = vmatprep.subr.bf16.mxu0 0
  %2668 = vmatpush1.bf16.msra.mxu0 0
  %2669 = vmatprep.subr.bf16.mxu0 0
  %2670 = vmatpush1.bf16.msra.mxu0 0
  %2671 = vmatprep.subr.bf16.mxu0 0
  %2672 = vmatpush1.bf16.msra.mxu0 0
  %2673 = vmatprep.subr.bf16.mxu0 0
  %2674 = vmatpush1.bf16.msra.mxu0 0
  %2675 = vmatprep.mubr.bf16.mxu0 0
  %2676 = vmatmul.mubr.bf16.gmra.mrb[0].mxu0 %v2632
  %v2677 = vpop.f32.mrb[0].mxu0
  %v2678 = vadd.f32 0.0, %v2677
  %v2679 = vpop.f32.mrb[0].mxu0
  %v2680 = vpop.f32.mrb[0].mxu0
  %v2681 = vadd.f32 0.0, %v2680
  %v2682 = vpop.f32.mrb[0].mxu0
  %2683 = vmatprep.mubr.bf16.mxu0 0
  %2684 = vmatmul.mubr.bf16.gmra.mrb[0].mxu0 %v2635
  %v2685 = vpop.f32.mrb[0].mxu0
  %v2686 = vadd.f32 0.0, %v2685
  %v2687 = vpop.f32.mrb[0].mxu0
  %v2688 = vpop.f32.mrb[0].mxu0
  %v2689 = vadd.f32 0.0, %v2688
  %v2690 = vpop.f32.mrb[0].mxu0
  %2691 = vmatprep.mubr.bf16.mxu0 0
  %2692 = vmatmul.mubr.bf16.gmra.mrb[0].mxu0 %v2638
  %v2693 = vpop.f32.mrb[0].mxu0
  %v2694 = vadd.f32 0.0, %v2693
  %v2695 = vpop.f32.mrb[0].mxu0
  %v2696 = vpop.f32.mrb[0].mxu0
  %v2697 = vadd.f32 0.0, %v2696
  %v2698 = vpop.f32.mrb[0].mxu0
  %2699 = vmatprep.mubr.bf16.mxu0 0
  %2700 = vmatmul.mubr.bf16.gmra.mrb[0].mxu0 %v2641
  %v2701 = vpop.f32.mrb[0].mxu0
  %v2702 = vadd.f32 0.0, %v2701
  %v2703 = vpop.f32.mrb[0].mxu0
  %v2704 = vpop.f32.mrb[0].mxu0
  %v2705 = vadd.f32 0.0, %v2704
  %v2706 = vpop.f32.mrb[0].mxu0
  %2707 = vdwg.mxu0
  %2716 = vrot.lane.b32.xlu0 %v1987, 8
  %v2717 = vpop.permute.xlu0 %2716
  %2718 = vrot.lane.b32.xlu0 %v1988, 8
  %v2719 = vpop.permute.xlu0 %2718
  %2720 = vrot.lane.b32.xlu0 %v1989, 8
  %v2721 = vpop.permute.xlu0 %2720
  %2722 = vrot.lane.b32.xlu0 %v1990, 8
  %v2723 = vpop.permute.xlu0 %2722
  %2724 = vrot.lane.b32.xlu0 %v1991, 8
  %v2725 = vpop.permute.xlu0 %2724
  %2726 = vrot.lane.b32.xlu0 %v1992, 8
  %v2727 = vpop.permute.xlu0 %2726
  %2728 = vrot.lane.b32.xlu0 %v1993, 8
  %v2729 = vpop.permute.xlu0 %2728
  %2730 = vrot.lane.b32.xlu0 %v1994, 8
  %v2731 = vpop.permute.xlu0 %2730
  %v2740 = vsel %vm76, %v2678, %v2717
  %v2741 = vsel %vm76, %v2681, %v2719
  %v2742 = vsel %vm76, %v2686, %v2721
  %v2743 = vsel %vm76, %v2689, %v2723
  %v2744 = vsel %vm76, %v2694, %v2725
  %v2745 = vsel %vm76, %v2697, %v2727
  %v2746 = vsel %vm76, %v2702, %v2729
  %v2747 = vsel %vm76, %v2705, %v2731
  %v2748 = vsel %vm1150, %v2740, 0.0
  %v2749 = vsel %vm1150, %v2741, 0.0
  %v2750 = vadd.f32 %v2748, %v2749
  %v2751 = vsel %vm1150, %v2742, 0.0
  %v2752 = vadd.f32 %v2750, %v2751
  %v2753 = vsel %vm1150, %v2743, 0.0
  %v2754 = vadd.f32 %v2752, %v2753
  %v2755 = vsel %vm1150, %v2744, 0.0
  %v2756 = vadd.f32 %v2754, %v2755
  %v2757 = vsel %vm1150, %v2745, 0.0
  %v2758 = vadd.f32 %v2756, %v2757
  %v2759 = vsel %vm1150, %v2746, 0.0
  %v2760 = vadd.f32 %v2758, %v2759
  %v2761 = vsel %vm1150, %v2747, 0.0
  %v2762 = vadd.f32 %v2760, %v2761
  %v2763 = vrot.slane %v2762, 4
  %v2764 = vadd.f32 %v2762, %v2763
  %v2765 = vrot.slane %v2764, 2
  %v2766 = vadd.f32 %v2764, %v2765
  %v2767 = vrot.slane %v2766, 1
  %v2768 = vadd.f32 %v2766, %v2767
  %v2769 = vmul.f32 %v2768, %v200
  %v2770 = vmul.f32 %v2740, %v2740
  %v2771 = vmul.f32 %v2741, %v2741
  %v2772 = vmul.f32 %v2742, %v2742
  %v2773 = vmul.f32 %v2743, %v2743
  %v2774 = vmul.f32 %v2744, %v2744
  %v2775 = vmul.f32 %v2745, %v2745
  %v2776 = vmul.f32 %v2746, %v2746
  %v2777 = vmul.f32 %v2747, %v2747
  %v2778 = vsel %vm1150, %v2770, 0.0
  %v2779 = vsel %vm1150, %v2771, 0.0
  %v2780 = vadd.f32 %v2778, %v2779
  %v2781 = vsel %vm1150, %v2772, 0.0
  %v2782 = vadd.f32 %v2780, %v2781
  %v2783 = vsel %vm1150, %v2773, 0.0
  %v2784 = vadd.f32 %v2782, %v2783
  %v2785 = vsel %vm1150, %v2774, 0.0
  %v2786 = vadd.f32 %v2784, %v2785
  %v2787 = vsel %vm1150, %v2775, 0.0
  %v2788 = vadd.f32 %v2786, %v2787
  %v2789 = vsel %vm1150, %v2776, 0.0
  %v2790 = vadd.f32 %v2788, %v2789
  %v2791 = vsel %vm1150, %v2777, 0.0
  %v2792 = vadd.f32 %v2790, %v2791
  %v2793 = vrot.slane %v2792, 4
  %v2794 = vadd.f32 %v2792, %v2793
  %v2795 = vrot.slane %v2794, 2
  %v2796 = vadd.f32 %v2794, %v2795
  %v2797 = vrot.slane %v2796, 1
  %v2798 = vadd.f32 %v2796, %v2797
  %v2799 = vmul.f32 %v2798, %v200
  %v2800 = vmul.f32 %v2769, %v2769
  %v2801 = vsub.f32 %v2799, %v2800
  %v2802 = vmax.f32 %v2801, 0.0
  %v2803 = vsub.f32 %v2740, %v2769
  %v2804 = vsub.f32 %v2741, %v2769
  %v2805 = vsub.f32 %v2742, %v2769
  %v2806 = vsub.f32 %v2743, %v2769
  %v2807 = vsub.f32 %v2744, %v2769
  %v2808 = vsub.f32 %v2745, %v2769
  %v2809 = vsub.f32 %v2746, %v2769
  %v2810 = vsub.f32 %v2747, %v2769
  %v2811 = vadd.f32 %v2802, 1e-05
  %v2812 = vrsqrt.pop %v2811
  %v2813 = vmul.f32 %v2803, %v2812
  %v2814 = vmul.f32 %v2804, %v2812
  %v2815 = vmul.f32 %v2805, %v2812
  %v2816 = vmul.f32 %v2806, %v2812
  %v2817 = vmul.f32 %v2807, %v2812
  %v2818 = vmul.f32 %v2808, %v2812
  %v2819 = vmul.f32 %v2809, %v2812
  %v2820 = vmul.f32 %v2810, %v2812
  %v2821 = vmax.f32 %v2813, 0.0
  %v2822 = vmax.f32 %v2814, 0.0
  %v2823 = vmax.f32 %v2815, 0.0
  %v2824 = vmax.f32 %v2816, 0.0
  %v2825 = vmax.f32 %v2817, 0.0
  %v2826 = vmax.f32 %v2818, 0.0
  %v2827 = vmax.f32 %v2819, 0.0
  %v2828 = vmax.f32 %v2820, 0.0
  %v2829 = vadd.f32 %v2821, %v1405
  %v2830 = vadd.f32 %v2822, %v1406
  %v2831 = vadd.f32 %v2823, %v1407
  %v2832 = vadd.f32 %v2824, %v1408
  %v2833 = vadd.f32 %v2825, %v1409
  %v2834 = vadd.f32 %v2826, %v1410
  %v2835 = vadd.f32 %v2827, %v1411
  %v2836 = vadd.f32 %v2828, %v1412
  %v2837 = vpack.c.bf16 %v2830, %v2829
  %v2838 = vpack.c.bf16 %v2832, %v2831
  %v2839 = vpack.c.bf16 %v2834, %v2833
  %v2840 = vpack.c.bf16 %v2836, %v2835
  %v2845 = vunpack.c.l.b16 %v1522
  %v2846 = vunpack.c.l.b16 %v1523
  %v2847 = vunpack.c.l.b16 %v1524
  %v2848 = vunpack.c.l.b16 %v1525
  %v2849 = vpack.c.b16 %v2846, %v2845
  %v2850 = vpack.c.b16 %v2848, %v2847
  %v2854 = vsel %vm1150, %v2837, 0
  %v2857 = vsel %vm1150, %v2838, 0
  %v2860 = vsel %vm1150, %v2839, 0
  %v2863 = vsel %vm1150, %v2840, 0
  %2865 = vmatprep.subr.bf16.mxu0 0
  %2866 = vmatpush1.bf16.msra.mxu0 %v2849
  %2867 = vmatprep.subr.bf16.mxu0 0
  %2868 = vmatpush1.bf16.msra.mxu0 %v2850
  %2869 = vmatprep.subr.bf16.mxu0 0
  %2870 = vmatpush1.bf16.msra.mxu0 0
  %2871 = vmatprep.subr.bf16.mxu0 0
  %2872 = vmatpush1.bf16.msra.mxu0 0
  %2873 = vmatprep.subr.bf16.mxu0 0
  %2874 = vmatpush1.bf16.msra.mxu0 0
  %2875 = vmatprep.subr.bf16.mxu0 0
  %2876 = vmatpush1.bf16.msra.mxu0 0
  %2877 = vmatprep.subr.bf16.mxu0 0
  %2878 = vmatpush1.bf16.msra.mxu0 0
  %2879 = vmatprep.subr.bf16.mxu0 0
  %2880 = vmatpush1.bf16.msra.mxu0 0
  %2881 = vmatprep.subr.bf16.mxu0 0
  %2882 = vmatpush1.bf16.msra.mxu0 0
  %2883 = vmatprep.subr.bf16.mxu0 0
  %2884 = vmatpush1.bf16.msra.mxu0 0
  %2885 = vmatprep.subr.bf16.mxu0 0
  %2886 = vmatpush1.bf16.msra.mxu0 0
  %2887 = vmatprep.subr.bf16.mxu0 0
  %2888 = vmatpush1.bf16.msra.mxu0 0
  %2889 = vmatprep.subr.bf16.mxu0 0
  %2890 = vmatpush1.bf16.msra.mxu0 0
  %2891 = vmatprep.subr.bf16.mxu0 0
  %2892 = vmatpush1.bf16.msra.mxu0 0
  %2893 = vmatprep.subr.bf16.mxu0 0
  %2894 = vmatpush1.bf16.msra.mxu0 0
  %2895 = vmatprep.subr.bf16.mxu0 0
  %2896 = vmatpush1.bf16.msra.mxu0 0
  %2897 = vmatprep.mubr.bf16.mxu0 0
  %2898 = vmatmul.mubr.bf16.gmra.mrb[0].mxu0 %v2854
  %v2899 = vpop.f32.mrb[0].mxu0
  %v2900 = vadd.f32 0.0, %v2899
  %v2901 = vpop.f32.mrb[0].mxu0
  %v2902 = vpop.f32.mrb[0].mxu0
  %v2903 = vadd.f32 0.0, %v2902
  %v2904 = vpop.f32.mrb[0].mxu0
  %2905 = vmatprep.mubr.bf16.mxu0 0
  %2906 = vmatmul.mubr.bf16.gmra.mrb[0].mxu0 %v2857
  %v2907 = vpop.f32.mrb[0].mxu0
  %v2908 = vadd.f32 0.0, %v2907
  %v2909 = vpop.f32.mrb[0].mxu0
  %v2910 = vpop.f32.mrb[0].mxu0
  %v2911 = vadd.f32 0.0, %v2910
  %v2912 = vpop.f32.mrb[0].mxu0
  %2913 = vmatprep.mubr.bf16.mxu0 0
  %2914 = vmatmul.mubr.bf16.gmra.mrb[0].mxu0 %v2860
  %v2915 = vpop.f32.mrb[0].mxu0
  %v2916 = vadd.f32 0.0, %v2915
  %v2917 = vpop.f32.mrb[0].mxu0
  %v2918 = vpop.f32.mrb[0].mxu0
  %v2919 = vadd.f32 0.0, %v2918
  %v2920 = vpop.f32.mrb[0].mxu0
  %2921 = vmatprep.mubr.bf16.mxu0 0
  %2922 = vmatmul.mubr.bf16.gmra.mrb[0].mxu0 %v2863
  %v2923 = vpop.f32.mrb[0].mxu0
  %v2924 = vadd.f32 0.0, %v2923
  %v2925 = vpop.f32.mrb[0].mxu0
  %v2926 = vpop.f32.mrb[0].mxu0
  %v2927 = vadd.f32 0.0, %v2926
  %v2928 = vpop.f32.mrb[0].mxu0
  %2929 = vdwg.mxu0
  %v2930 = vadd.f32 %v1479, %v2900
  %v2931 = vadd.f32 %v1482, %v2903
  %v2932 = vadd.f32 %v1487, %v2908
  %v2933 = vadd.f32 %v1490, %v2911
  %v2934 = vadd.f32 %v1495, %v2916
  %v2935 = vadd.f32 %v1498, %v2919
  %v2936 = vadd.f32 %v1503, %v2924
  %v2937 = vadd.f32 %v1506, %v2927
  %2938 = vrot.lane.b32.xlu0 %v1982, 112
  %v2939 = vpop.permute.xlu0 %2938
  %v2941 = vadd.f32 %v2930, %v2939
  %v2942 = vadd.f32 %v2931, %v2939
  %v2943 = vadd.f32 %v2932, %v2939
  %v2944 = vadd.f32 %v2933, %v2939
  %v2945 = vadd.f32 %v2934, %v2939
  %v2946 = vadd.f32 %v2935, %v2939
  %v2947 = vadd.f32 %v2936, %v2939
  %v2948 = vadd.f32 %v2937, %v2939
  %v2949 = vld [vmem:[%s2 + $0x90] sm:$0xf]
  %v2950 = vld [vmem:[%s2 + $0x94] sm:$0xf]
  %v2951 = vld [vmem:[%s2 + $0x98] sm:$0xf]
  %v2952 = vld [vmem:[%s2 + $0x9c] sm:$0xf]
  %v2953 = vld [vmem:[%s2 + $0xa0] sm:$0xf]
  %v2954 = vld [vmem:[%s2 + $0xa8] sm:$0xf]
  %v2955 = vld [vmem:[%s2 + $0xac] sm:$0xf]
  %v2956 = vld [vmem:[%s2 + $0xb0] sm:$0xf]
  %v2957 = vld [vmem:[%s2 + $0xb4] sm:$0xf]
  %v2958 = vld [vmem:[%s2 + $0xb8] sm:$0xf]
  %v2959 = vld [vmem:[%s2 + $0xbc] sm:$0xf]
  %v2960 = vld [vmem:[%s2 + $0xc0] sm:$0xf]
  %v2961 = vld [vmem:[%s2 + $0xc4] sm:$0xf]
  %v2962 = vld [vmem:[%s2 + $0xc8] sm:$0xf]
  %v2963 = vld [vmem:[%s2 + $0xcc] sm:$0xf]
  %v2964 = vld [vmem:[%s2 + $0xd0] sm:$0xf]
  %v2965 = vld [vmem:[%s2 + $0xd4] sm:$0xf]
  %v2966 = vld [vmem:[%s3 + $0x10] sm:$0x1]
  %v2971 = vunpack.c.l.b16 %v2949
  %v2972 = vunpack.c.l.b16 %v2950
  %v2973 = vunpack.c.l.b16 %v2951
  %v2974 = vunpack.c.l.b16 %v2952
  %v2975 = vpack.c.b16 %v2972, %v2971
  %v2976 = vpack.c.b16 %v2974, %v2973
  %2979 = vmatprep.subr.bf16.mxu0 0
  %2980 = vmatpush1.bf16.msra.mxu0 %v2975
  %2981 = vmatprep.subr.bf16.mxu0 0
  %2982 = vmatpush1.bf16.msra.mxu0 %v2976
  %2983 = vmatprep.subr.bf16.mxu0 0
  %2984 = vmatpush1.bf16.msra.mxu0 0
  %2985 = vmatprep.subr.bf16.mxu0 0
  %2986 = vmatpush1.bf16.msra.mxu0 0
  %2987 = vmatprep.subr.bf16.mxu0 0
  %2988 = vmatpush1.bf16.msra.mxu0 0
  %2989 = vmatprep.subr.bf16.mxu0 0
  %2990 = vmatpush1.bf16.msra.mxu0 0
  %2991 = vmatprep.subr.bf16.mxu0 0
  %2992 = vmatpush1.bf16.msra.mxu0 0
  %2993 = vmatprep.subr.bf16.mxu0 0
  %2994 = vmatpush1.bf16.msra.mxu0 0
  %2995 = vmatprep.subr.bf16.mxu0 0
  %2996 = vmatpush1.bf16.msra.mxu0 0
  %2997 = vmatprep.subr.bf16.mxu0 0
  %2998 = vmatpush1.bf16.msra.mxu0 0
  %2999 = vmatprep.subr.bf16.mxu0 0
  %3000 = vmatpush1.bf16.msra.mxu0 0
  %3001 = vmatprep.subr.bf16.mxu0 0
  %3002 = vmatpush1.bf16.msra.mxu0 0
  %3003 = vmatprep.subr.bf16.mxu0 0
  %3004 = vmatpush1.bf16.msra.mxu0 0
  %3005 = vmatprep.subr.bf16.mxu0 0
  %3006 = vmatpush1.bf16.msra.mxu0 0
  %3007 = vmatprep.subr.bf16.mxu0 0
  %3008 = vmatpush1.bf16.msra.mxu0 0
  %3009 = vmatprep.subr.bf16.mxu0 0
  %3010 = vmatpush1.bf16.msra.mxu0 0
  %3011 = vmatprep.mubr.bf16.mxu0 0
  %3012 = vmatmul.mubr.bf16.gmra.mrb[0].mxu0 %v2854
  %v3013 = vpop.f32.mrb[0].mxu0
  %v3014 = vadd.f32 0.0, %v3013
  %v3015 = vpop.f32.mrb[0].mxu0
  %v3016 = vpop.f32.mrb[0].mxu0
  %v3017 = vadd.f32 0.0, %v3016
  %v3018 = vpop.f32.mrb[0].mxu0
  %3019 = vmatprep.mubr.bf16.mxu0 0
  %3020 = vmatmul.mubr.bf16.gmra.mrb[0].mxu0 %v2857
  %v3021 = vpop.f32.mrb[0].mxu0
  %v3022 = vadd.f32 0.0, %v3021
  %v3023 = vpop.f32.mrb[0].mxu0
  %v3024 = vpop.f32.mrb[0].mxu0
  %v3025 = vadd.f32 0.0, %v3024
  %v3026 = vpop.f32.mrb[0].mxu0
  %3027 = vmatprep.mubr.bf16.mxu0 0
  %3028 = vmatmul.mubr.bf16.gmra.mrb[0].mxu0 %v2860
  %v3029 = vpop.f32.mrb[0].mxu0
  %v3030 = vadd.f32 0.0, %v3029
  %v3031 = vpop.f32.mrb[0].mxu0
  %v3032 = vpop.f32.mrb[0].mxu0
  %v3033 = vadd.f32 0.0, %v3032
  %v3034 = vpop.f32.mrb[0].mxu0
  %3035 = vmatprep.mubr.bf16.mxu0 0
  %3036 = vmatmul.mubr.bf16.gmra.mrb[0].mxu0 %v2863
  %v3037 = vpop.f32.mrb[0].mxu0
  %v3038 = vadd.f32 0.0, %v3037
  %v3039 = vpop.f32.mrb[0].mxu0
  %v3040 = vpop.f32.mrb[0].mxu0
  %v3041 = vadd.f32 0.0, %v3040
  %v3042 = vpop.f32.mrb[0].mxu0
  %3043 = vdwg.mxu0
  %vm3044 = vcmp.ge.f32.partialorder %v3014, 0.0
  %vm3045 = vcmp.ge.f32.partialorder %v3017, 0.0
  %vm3046 = vcmp.ge.f32.partialorder %v3022, 0.0
  %vm3047 = vcmp.ge.f32.partialorder %v3025, 0.0
  %vm3048 = vcmp.ge.f32.partialorder %v3030, 0.0
  %vm3049 = vcmp.ge.f32.partialorder %v3033, 0.0
  %vm3050 = vcmp.ge.f32.partialorder %v3038, 0.0
  %vm3051 = vcmp.ge.f32.partialorder %v3041, 0.0
  %v3052 = vmul.f32 %v3014, 0.01
  %v3053 = vmul.f32 %v3017, 0.01
  %v3054 = vmul.f32 %v3022, 0.01
  %v3055 = vmul.f32 %v3025, 0.01
  %v3056 = vmul.f32 %v3030, 0.01
  %v3057 = vmul.f32 %v3033, 0.01
  %v3058 = vmul.f32 %v3038, 0.01
  %v3059 = vmul.f32 %v3041, 0.01
  %v3060 = vsel %vm3044, %v3014, %v3052
  %v3061 = vsel %vm3045, %v3017, %v3053
  %v3062 = vsel %vm3046, %v3022, %v3054
  %v3063 = vsel %vm3047, %v3025, %v3055
  %v3064 = vsel %vm3048, %v3030, %v3056
  %v3065 = vsel %vm3049, %v3033, %v3057
  %v3066 = vsel %vm3050, %v3038, %v3058
  %v3067 = vsel %vm3051, %v3041, %v3059
  %v3068 = vsel %vm178, %v3060, 0.0
  %v3069 = vsel %vm178, %v3061, 0.0
  %v3070 = vadd.f32 %v3068, %v3069
  %v3071 = vsel %vm178, %v3062, 0.0
  %v3072 = vadd.f32 %v3070, %v3071
  %v3073 = vsel %vm178, %v3063, 0.0
  %v3074 = vadd.f32 %v3072, %v3073
  %v3075 = vsel %vm178, %v3064, 0.0
  %v3076 = vadd.f32 %v3074, %v3075
  %v3077 = vsel %vm178, %v3065, 0.0
  %v3078 = vadd.f32 %v3076, %v3077
  %v3079 = vsel %vm178, %v3066, 0.0
  %v3080 = vadd.f32 %v3078, %v3079
  %v3081 = vsel %vm178, %v3067, 0.0
  %v3082 = vadd.f32 %v3080, %v3081
  %v3083 = vrot.slane %v3082, 4
  %v3084 = vadd.f32 %v3082, %v3083
  %v3085 = vrot.slane %v3084, 2
  %v3086 = vadd.f32 %v3084, %v3085
  %v3087 = vrot.slane %v3086, 1
  %v3088 = vadd.f32 %v3086, %v3087
  %v3089 = vmul.f32 %v3088, %v200
  %v3090 = vmul.f32 %v3060, %v3060
  %v3091 = vmul.f32 %v3061, %v3061
  %v3092 = vmul.f32 %v3062, %v3062
  %v3093 = vmul.f32 %v3063, %v3063
  %v3094 = vmul.f32 %v3064, %v3064
  %v3095 = vmul.f32 %v3065, %v3065
  %v3096 = vmul.f32 %v3066, %v3066
  %v3097 = vmul.f32 %v3067, %v3067
  %v3098 = vsel %vm178, %v3090, 0.0
  %v3099 = vsel %vm178, %v3091, 0.0
  %v3100 = vadd.f32 %v3098, %v3099
  %v3101 = vsel %vm178, %v3092, 0.0
  %v3102 = vadd.f32 %v3100, %v3101
  %v3103 = vsel %vm178, %v3093, 0.0
  %v3104 = vadd.f32 %v3102, %v3103
  %v3105 = vsel %vm178, %v3094, 0.0
  %v3106 = vadd.f32 %v3104, %v3105
  %v3107 = vsel %vm178, %v3095, 0.0
  %v3108 = vadd.f32 %v3106, %v3107
  %v3109 = vsel %vm178, %v3096, 0.0
  %v3110 = vadd.f32 %v3108, %v3109
  %v3111 = vsel %vm178, %v3097, 0.0
  %v3112 = vadd.f32 %v3110, %v3111
  %v3113 = vrot.slane %v3112, 4
  %v3114 = vadd.f32 %v3112, %v3113
  %v3115 = vrot.slane %v3114, 2
  %v3116 = vadd.f32 %v3114, %v3115
  %v3117 = vrot.slane %v3116, 1
  %v3118 = vadd.f32 %v3116, %v3117
  %v3119 = vmul.f32 %v3118, %v200
  %v3120 = vmul.f32 %v3089, %v3089
  %v3121 = vsub.f32 %v3119, %v3120
  %v3122 = vmax.f32 %v3121, 0.0
  %v3123 = vsub.f32 %v3060, %v3089
  %v3124 = vsub.f32 %v3061, %v3089
  %v3125 = vsub.f32 %v3062, %v3089
  %v3126 = vsub.f32 %v3063, %v3089
  %v3127 = vsub.f32 %v3064, %v3089
  %v3128 = vsub.f32 %v3065, %v3089
  %v3129 = vsub.f32 %v3066, %v3089
  %v3130 = vsub.f32 %v3067, %v3089
  %v3131 = vadd.f32 %v3122, 1e-05
  %v3132 = vrsqrt.pop %v3131
  %v3133 = vmul.f32 %v3123, %v3132
  %v3134 = vmul.f32 %v3124, %v3132
  %v3135 = vmul.f32 %v3125, %v3132
  %v3136 = vmul.f32 %v3126, %v3132
  %v3137 = vmul.f32 %v3127, %v3132
  %v3138 = vmul.f32 %v3128, %v3132
  %v3139 = vmul.f32 %v3129, %v3132
  %v3140 = vmul.f32 %v3130, %v3132
  %v3141 = vpack.c.bf16 %v3134, %v3133
  %v3142 = vpack.c.bf16 %v3136, %v3135
  %v3143 = vpack.c.bf16 %v3138, %v3137
  %v3144 = vpack.c.bf16 %v3140, %v3139
  %v3146 = vsel %vm178, %v3141, 0
  %v3149 = vsel %vm178, %v3142, 0
  %v3152 = vsel %vm178, %v3143, 0
  %v3155 = vsel %vm178, %v3144, 0
  %v3158 = vsel %vm269, %v2953, 0
  %3160 = vmatprep.subr.bf16.mxu0 0
  %3161 = vmatpush1.bf16.msra.mxu0 %v3158
  %3162 = vmatprep.subr.bf16.mxu0 0
  %3163 = vmatpush1.bf16.msra.mxu0 0
  %3164 = vmatprep.subr.bf16.mxu0 0
  %3165 = vmatpush1.bf16.msra.mxu0 0
  %3166 = vmatprep.subr.bf16.mxu0 0
  %3167 = vmatpush1.bf16.msra.mxu0 0
  %3168 = vmatprep.subr.bf16.mxu0 0
  %3169 = vmatpush1.bf16.msra.mxu0 0
  %3170 = vmatprep.subr.bf16.mxu0 0
  %3171 = vmatpush1.bf16.msra.mxu0 0
  %3172 = vmatprep.subr.bf16.mxu0 0
  %3173 = vmatpush1.bf16.msra.mxu0 0
  %3174 = vmatprep.subr.bf16.mxu0 0
  %3175 = vmatpush1.bf16.msra.mxu0 0
  %3176 = vmatprep.subr.bf16.mxu0 0
  %3177 = vmatpush1.bf16.msra.mxu0 0
  %3178 = vmatprep.subr.bf16.mxu0 0
  %3179 = vmatpush1.bf16.msra.mxu0 0
  %3180 = vmatprep.subr.bf16.mxu0 0
  %3181 = vmatpush1.bf16.msra.mxu0 0
  %3182 = vmatprep.subr.bf16.mxu0 0
  %3183 = vmatpush1.bf16.msra.mxu0 0
  %3184 = vmatprep.subr.bf16.mxu0 0
  %3185 = vmatpush1.bf16.msra.mxu0 0
  %3186 = vmatprep.subr.bf16.mxu0 0
  %3187 = vmatpush1.bf16.msra.mxu0 0
  %3188 = vmatprep.subr.bf16.mxu0 0
  %3189 = vmatpush1.bf16.msra.mxu0 0
  %3190 = vmatprep.subr.bf16.mxu0 0
  %3191 = vmatpush1.bf16.msra.mxu0 0
  %3192 = vmatprep.mubr.bf16.mxu0 0
  %3193 = vmatmul.mubr.bf16.gmra.mrb[0].mxu0 %v3146
  %v3194 = vpop.f32.mrb[0].mxu0
  %v3195 = vadd.f32 0.0, %v3194
  %v3196 = vpop.f32.mrb[0].mxu0
  %v3197 = vpop.f32.mrb[0].mxu0
  %v3198 = vadd.f32 0.0, %v3197
  %v3199 = vpop.f32.mrb[0].mxu0
  %3200 = vmatprep.mubr.bf16.mxu0 0
  %3201 = vmatmul.mubr.bf16.gmra.mrb[0].mxu0 %v3149
  %v3202 = vpop.f32.mrb[0].mxu0
  %v3203 = vadd.f32 0.0, %v3202
  %v3204 = vpop.f32.mrb[0].mxu0
  %v3205 = vpop.f32.mrb[0].mxu0
  %v3206 = vadd.f32 0.0, %v3205
  %v3207 = vpop.f32.mrb[0].mxu0
  %3208 = vmatprep.mubr.bf16.mxu0 0
  %3209 = vmatmul.mubr.bf16.gmra.mrb[0].mxu0 %v3152
  %v3210 = vpop.f32.mrb[0].mxu0
  %v3211 = vadd.f32 0.0, %v3210
  %v3212 = vpop.f32.mrb[0].mxu0
  %v3213 = vpop.f32.mrb[0].mxu0
  %v3214 = vadd.f32 0.0, %v3213
  %v3215 = vpop.f32.mrb[0].mxu0
  %3216 = vmatprep.mubr.bf16.mxu0 0
  %3217 = vmatmul.mubr.bf16.gmra.mrb[0].mxu0 %v3155
  %v3218 = vpop.f32.mrb[0].mxu0
  %v3219 = vadd.f32 0.0, %v3218
  %v3220 = vpop.f32.mrb[0].mxu0
  %v3221 = vpop.f32.mrb[0].mxu0
  %v3222 = vadd.f32 0.0, %v3221
  %v3223 = vpop.f32.mrb[0].mxu0
  %3224 = vdwg.mxu0
  %vm3225 = vcmp.ge.f32.partialorder %v3195, 0.0
  %vm3226 = vcmp.ge.f32.partialorder %v3198, 0.0
  %vm3227 = vcmp.ge.f32.partialorder %v3203, 0.0
  %vm3228 = vcmp.ge.f32.partialorder %v3206, 0.0
  %vm3229 = vcmp.ge.f32.partialorder %v3211, 0.0
  %vm3230 = vcmp.ge.f32.partialorder %v3214, 0.0
  %vm3231 = vcmp.ge.f32.partialorder %v3219, 0.0
  %vm3232 = vcmp.ge.f32.partialorder %v3222, 0.0
  %v3233 = vmul.f32 %v3195, 0.01
  %v3234 = vmul.f32 %v3198, 0.01
  %v3235 = vmul.f32 %v3203, 0.01
  %v3236 = vmul.f32 %v3206, 0.01
  %v3237 = vmul.f32 %v3211, 0.01
  %v3238 = vmul.f32 %v3214, 0.01
  %v3239 = vmul.f32 %v3219, 0.01
  %v3240 = vmul.f32 %v3222, 0.01
  %v3241 = vsel %vm3225, %v3195, %v3233
  %v3242 = vsel %vm3226, %v3198, %v3234
  %v3243 = vsel %vm3227, %v3203, %v3235
  %v3244 = vsel %vm3228, %v3206, %v3236
  %v3245 = vsel %vm3229, %v3211, %v3237
  %v3246 = vsel %vm3230, %v3214, %v3238
  %v3247 = vsel %vm3231, %v3219, %v3239
  %v3248 = vsel %vm3232, %v3222, %v3240
  %v3249 = vsel %vm178, %v3241, 0.0
  %v3250 = vsel %vm178, %v3242, 0.0
  %v3251 = vadd.f32 %v3249, %v3250
  %v3252 = vsel %vm178, %v3243, 0.0
  %v3253 = vadd.f32 %v3251, %v3252
  %v3254 = vsel %vm178, %v3244, 0.0
  %v3255 = vadd.f32 %v3253, %v3254
  %v3256 = vsel %vm178, %v3245, 0.0
  %v3257 = vadd.f32 %v3255, %v3256
  %v3258 = vsel %vm178, %v3246, 0.0
  %v3259 = vadd.f32 %v3257, %v3258
  %v3260 = vsel %vm178, %v3247, 0.0
  %v3261 = vadd.f32 %v3259, %v3260
  %v3262 = vsel %vm178, %v3248, 0.0
  %v3263 = vadd.f32 %v3261, %v3262
  %v3264 = vrot.slane %v3263, 4
  %v3265 = vadd.f32 %v3263, %v3264
  %v3266 = vrot.slane %v3265, 2
  %v3267 = vadd.f32 %v3265, %v3266
  %v3268 = vrot.slane %v3267, 1
  %v3269 = vadd.f32 %v3267, %v3268
  %v3270 = vmul.f32 %v3269, %v200
  %v3271 = vmul.f32 %v3241, %v3241
  %v3272 = vmul.f32 %v3242, %v3242
  %v3273 = vmul.f32 %v3243, %v3243
  %v3274 = vmul.f32 %v3244, %v3244
  %v3275 = vmul.f32 %v3245, %v3245
  %v3276 = vmul.f32 %v3246, %v3246
  %v3277 = vmul.f32 %v3247, %v3247
  %v3278 = vmul.f32 %v3248, %v3248
  %v3279 = vsel %vm178, %v3271, 0.0
  %v3280 = vsel %vm178, %v3272, 0.0
  %v3281 = vadd.f32 %v3279, %v3280
  %v3282 = vsel %vm178, %v3273, 0.0
  %v3283 = vadd.f32 %v3281, %v3282
  %v3284 = vsel %vm178, %v3274, 0.0
  %v3285 = vadd.f32 %v3283, %v3284
  %v3286 = vsel %vm178, %v3275, 0.0
  %v3287 = vadd.f32 %v3285, %v3286
  %v3288 = vsel %vm178, %v3276, 0.0
  %v3289 = vadd.f32 %v3287, %v3288
  %v3290 = vsel %vm178, %v3277, 0.0
  %v3291 = vadd.f32 %v3289, %v3290
  %v3292 = vsel %vm178, %v3278, 0.0
  %v3293 = vadd.f32 %v3291, %v3292
  %v3294 = vrot.slane %v3293, 4
  %v3295 = vadd.f32 %v3293, %v3294
  %v3296 = vrot.slane %v3295, 2
  %v3297 = vadd.f32 %v3295, %v3296
  %v3298 = vrot.slane %v3297, 1
  %v3299 = vadd.f32 %v3297, %v3298
  %v3300 = vmul.f32 %v3299, %v200
  %v3301 = vmul.f32 %v3270, %v3270
  %v3302 = vsub.f32 %v3300, %v3301
  %v3303 = vmax.f32 %v3302, 0.0
  %v3304 = vsub.f32 %v3241, %v3270
  %v3305 = vsub.f32 %v3242, %v3270
  %v3306 = vsub.f32 %v3243, %v3270
  %v3307 = vsub.f32 %v3244, %v3270
  %v3308 = vsub.f32 %v3245, %v3270
  %v3309 = vsub.f32 %v3246, %v3270
  %v3310 = vsub.f32 %v3247, %v3270
  %v3311 = vsub.f32 %v3248, %v3270
  %v3312 = vadd.f32 %v3303, 1e-05
  %v3313 = vrsqrt.pop %v3312
  %v3314 = vmul.f32 %v3304, %v3313
  %v3315 = vmul.f32 %v3305, %v3313
  %v3316 = vmul.f32 %v3306, %v3313
  %v3317 = vmul.f32 %v3307, %v3313
  %v3318 = vmul.f32 %v3308, %v3313
  %v3319 = vmul.f32 %v3309, %v3313
  %v3320 = vmul.f32 %v3310, %v3313
  %v3321 = vmul.f32 %v3311, %v3313
  %v3322 = vpack.c.bf16 %v3315, %v3314
  %v3323 = vpack.c.bf16 %v3317, %v3316
  %v3324 = vpack.c.bf16 %v3319, %v3318
  %v3325 = vpack.c.bf16 %v3321, %v3320
  %v3327 = vsel %vm178, %v3322, 0
  %v3330 = vsel %vm178, %v3323, 0
  %v3333 = vsel %vm178, %v3324, 0
  %v3336 = vsel %vm178, %v3325, 0
  %v3338 = vpack.c.bf16 %v3017, %v3014
  %v3339 = vpack.c.bf16 %v3025, %v3022
  %v3340 = vpack.c.bf16 %v3033, %v3030
  %v3341 = vpack.c.bf16 %v3041, %v3038
  %v3343 = vsel %vm178, 0, %v3338
  %v3346 = vsel %vm178, 0, %v3339
  %v3349 = vsel %vm178, 0, %v3340
  %v3352 = vsel %vm178, 0, %v3341
  %3354 = vmatprep.subr.bf16.mxu0 0
  %3355 = vmatpush1.bf16.msra.mxu0 %v3327
  %3356 = vmatprep.subr.bf16.mxu0 0
  %3357 = vmatpush1.bf16.msra.mxu0 %v3330
  %3358 = vmatprep.subr.bf16.mxu0 0
  %3359 = vmatpush1.bf16.msra.mxu0 %v3333
  %3360 = vmatprep.subr.bf16.mxu0 0
  %3361 = vmatpush1.bf16.msra.mxu0 %v3336
  %3362 = vmatprep.subr.bf16.mxu0 0
  %3363 = vmatpush1.bf16.msra.mxu0 %v3343
  %3364 = vmatprep.subr.bf16.mxu0 0
  %3365 = vmatpush1.bf16.msra.mxu0 %v3346
  %3366 = vmatprep.subr.bf16.mxu0 0
  %3367 = vmatpush1.bf16.msra.mxu0 %v3349
  %3368 = vmatprep.subr.bf16.mxu0 0
  %3369 = vmatpush1.bf16.msra.mxu0 %v3352
  %3370 = vmatprep.subr.bf16.mxu0 0
  %3371 = vmatpush1.bf16.msra.mxu0 0
  %3372 = vmatprep.subr.bf16.mxu0 0
  %3373 = vmatpush1.bf16.msra.mxu0 0
  %3374 = vmatprep.subr.bf16.mxu0 0
  %3375 = vmatpush1.bf16.msra.mxu0 0
  %3376 = vmatprep.subr.bf16.mxu0 0
  %3377 = vmatpush1.bf16.msra.mxu0 0
  %3378 = vmatprep.subr.bf16.mxu0 0
  %3379 = vmatpush1.bf16.msra.mxu0 0
  %3380 = vmatprep.subr.bf16.mxu0 0
  %3381 = vmatpush1.bf16.msra.mxu0 0
  %3382 = vmatprep.subr.bf16.mxu0 0
  %3383 = vmatpush1.bf16.msra.mxu0 0
  %3384 = vmatprep.subr.bf16.mxu0 0
  %3385 = vmatpush1.bf16.msra.mxu0 0
  %3386 = vmatprep.mubr.bf16.mxu0 0
  %3387 = vmatmul.mubr.bf16.gmra.mrb[0].mxu0 %v484
  %v3388 = vpop.f32.mrb[0].mxu0
  %v3389 = vadd.f32 0.0, %v3388
  %v3390 = vpop.f32.mrb[0].mxu0
  %v3391 = vpop.f32.mrb[0].mxu0
  %v3392 = vadd.f32 0.0, %v3391
  %v3393 = vpop.f32.mrb[0].mxu0
  %3394 = vmatprep.mubr.bf16.mxu0 0
  %3395 = vmatmul.mubr.bf16.gmra.mrb[0].mxu0 %v485
  %v3396 = vpop.f32.mrb[0].mxu0
  %v3397 = vadd.f32 0.0, %v3396
  %v3398 = vpop.f32.mrb[0].mxu0
  %v3399 = vpop.f32.mrb[0].mxu0
  %v3400 = vadd.f32 0.0, %v3399
  %v3401 = vpop.f32.mrb[0].mxu0
  %3402 = vmatprep.mubr.bf16.mxu0 0
  %3403 = vmatmul.mubr.bf16.gmra.mrb[0].mxu0 %v486
  %v3404 = vpop.f32.mrb[0].mxu0
  %v3405 = vadd.f32 0.0, %v3404
  %v3406 = vpop.f32.mrb[0].mxu0
  %v3407 = vpop.f32.mrb[0].mxu0
  %v3408 = vadd.f32 0.0, %v3407
  %v3409 = vpop.f32.mrb[0].mxu0
  %3410 = vmatprep.mubr.bf16.mxu0 0
  %3411 = vmatmul.mubr.bf16.gmra.mrb[0].mxu0 %v487
  %v3412 = vpop.f32.mrb[0].mxu0
  %v3413 = vadd.f32 0.0, %v3412
  %v3414 = vpop.f32.mrb[0].mxu0
  %v3415 = vpop.f32.mrb[0].mxu0
  %v3416 = vadd.f32 0.0, %v3415
  %v3417 = vpop.f32.mrb[0].mxu0
  %3418 = vdwg.mxu0
  %v3419 = vlaneseq
  %v3420 = vshrl.u32 %v3419, 7
  %v3421 = vsub.s32 0, %v3420
  %v3422 = vrot.slane %v2966, %v3421
  %3424 = vrot.lane.b32.xlu0 %v3422, 8
  %v3425 = vpop.permute.xlu0 %3424
  %v3427 = vadd.f32 %v3389, %v3425
  %v3428 = vadd.f32 %v3392, %v3425
  %v3429 = vadd.f32 %v3397, %v3425
  %v3430 = vadd.f32 %v3400, %v3425
  %v3431 = vadd.f32 %v3405, %v3425
  %v3432 = vadd.f32 %v3408, %v3425
  %v3433 = vadd.f32 %v3413, %v3425
  %v3434 = vadd.f32 %v3416, %v3425
  %3436 = vset.pattern.permute.xlu0 0
  %3437 = vperm.xlu0 %3436, %v3133
  %v3438 = vpop.permute.xlu0 %3437
  %3441 = vset.pattern.permute.xlu0 0
  %3442 = vperm.xlu0 %3441, %v3134
  %v3443 = vpop.permute.xlu0 %3442
  %3446 = vset.pattern.permute.xlu0 0
  %3447 = vperm.xlu0 %3446, %v3135
  %v3448 = vpop.permute.xlu0 %3447
  %3451 = vset.pattern.permute.xlu0 0
  %3452 = vperm.xlu0 %3451, %v3136
  %v3453 = vpop.permute.xlu0 %3452
  %3456 = vset.pattern.permute.xlu0 0
  %3457 = vperm.xlu0 %3456, %v3137
  %v3458 = vpop.permute.xlu0 %3457
  %3461 = vset.pattern.permute.xlu0 0
  %3462 = vperm.xlu0 %3461, %v3138
  %v3463 = vpop.permute.xlu0 %3462
  %3466 = vset.pattern.permute.xlu0 0
  %3467 = vperm.xlu0 %3466, %v3139
  %v3468 = vpop.permute.xlu0 %3467
  %3471 = vset.pattern.permute.xlu0 0
  %3472 = vperm.xlu0 %3471, %v3140
  %v3473 = vpop.permute.xlu0 %3472
  %v3475 = vmul.f32 %v3438, %v3389
  %v3476 = vmul.f32 %v3443, %v3392
  %v3477 = vmul.f32 %v3448, %v3397
  %v3478 = vmul.f32 %v3453, %v3400
  %v3479 = vmul.f32 %v3458, %v3405
  %v3480 = vmul.f32 %v3463, %v3408
  %v3481 = vmul.f32 %v3468, %v3413
  %v3482 = vmul.f32 %v3473, %v3416
  %3483 = vset.pattern.permute.xlu0 1
  %3484 = vperm.xlu0 %3483, %v3133
  %v3485 = vpop.permute.xlu0 %3484
  %3487 = vset.pattern.permute.xlu0 1
  %3488 = vperm.xlu0 %3487, %v3134
  %v3489 = vpop.permute.xlu0 %3488
  %3491 = vset.pattern.permute.xlu0 1
  %3492 = vperm.xlu0 %3491, %v3135
  %v3493 = vpop.permute.xlu0 %3492
  %3495 = vset.pattern.permute.xlu0 1
  %3496 = vperm.xlu0 %3495, %v3136
  %v3497 = vpop.permute.xlu0 %3496
  %3499 = vset.pattern.permute.xlu0 1
  %3500 = vperm.xlu0 %3499, %v3137
  %v3501 = vpop.permute.xlu0 %3500
  %3503 = vset.pattern.permute.xlu0 1
  %3504 = vperm.xlu0 %3503, %v3138
  %v3505 = vpop.permute.xlu0 %3504
  %3507 = vset.pattern.permute.xlu0 1
  %3508 = vperm.xlu0 %3507, %v3139
  %v3509 = vpop.permute.xlu0 %3508
  %3511 = vset.pattern.permute.xlu0 1
  %3512 = vperm.xlu0 %3511, %v3140
  %v3513 = vpop.permute.xlu0 %3512
  %v3515 = vmul.f32 %v3485, %v3389
  %v3516 = vmul.f32 %v3489, %v3392
  %v3517 = vmul.f32 %v3493, %v3397
  %v3518 = vmul.f32 %v3497, %v3400
  %v3519 = vmul.f32 %v3501, %v3405
  %v3520 = vmul.f32 %v3505, %v3408
  %v3521 = vmul.f32 %v3509, %v3413
  %v3522 = vmul.f32 %v3513, %v3416
  %3523 = vset.pattern.permute.xlu0 2
  %3524 = vperm.xlu0 %3523, %v3133
  %v3525 = vpop.permute.xlu0 %3524
  %3527 = vset.pattern.permute.xlu0 2
  %3528 = vperm.xlu0 %3527, %v3134
  %v3529 = vpop.permute.xlu0 %3528
  %3531 = vset.pattern.permute.xlu0 2
  %3532 = vperm.xlu0 %3531, %v3135
  %v3533 = vpop.permute.xlu0 %3532
  %3535 = vset.pattern.permute.xlu0 2
  %3536 = vperm.xlu0 %3535, %v3136
  %v3537 = vpop.permute.xlu0 %3536
  %3539 = vset.pattern.permute.xlu0 2
  %3540 = vperm.xlu0 %3539, %v3137
  %v3541 = vpop.permute.xlu0 %3540
  %3543 = vset.pattern.permute.xlu0 2
  %3544 = vperm.xlu0 %3543, %v3138
  %v3545 = vpop.permute.xlu0 %3544
  %3547 = vset.pattern.permute.xlu0 2
  %3548 = vperm.xlu0 %3547, %v3139
  %v3549 = vpop.permute.xlu0 %3548
  %3551 = vset.pattern.permute.xlu0 2
  %3552 = vperm.xlu0 %3551, %v3140
  %v3553 = vpop.permute.xlu0 %3552
  %v3555 = vmul.f32 %v3525, %v3389
  %v3556 = vmul.f32 %v3529, %v3392
  %v3557 = vmul.f32 %v3533, %v3397
  %v3558 = vmul.f32 %v3537, %v3400
  %v3559 = vmul.f32 %v3541, %v3405
  %v3560 = vmul.f32 %v3545, %v3408
  %v3561 = vmul.f32 %v3549, %v3413
  %v3562 = vmul.f32 %v3553, %v3416
  %3563 = vset.pattern.permute.xlu0 3
  %3564 = vperm.xlu0 %3563, %v3133
  %v3565 = vpop.permute.xlu0 %3564
  %3567 = vset.pattern.permute.xlu0 3
  %3568 = vperm.xlu0 %3567, %v3134
  %v3569 = vpop.permute.xlu0 %3568
  %3571 = vset.pattern.permute.xlu0 3
  %3572 = vperm.xlu0 %3571, %v3135
  %v3573 = vpop.permute.xlu0 %3572
  %3575 = vset.pattern.permute.xlu0 3
  %3576 = vperm.xlu0 %3575, %v3136
  %v3577 = vpop.permute.xlu0 %3576
  %3579 = vset.pattern.permute.xlu0 3
  %3580 = vperm.xlu0 %3579, %v3137
  %v3581 = vpop.permute.xlu0 %3580
  %3583 = vset.pattern.permute.xlu0 3
  %3584 = vperm.xlu0 %3583, %v3138
  %v3585 = vpop.permute.xlu0 %3584
  %3587 = vset.pattern.permute.xlu0 3
  %3588 = vperm.xlu0 %3587, %v3139
  %v3589 = vpop.permute.xlu0 %3588
  %3591 = vset.pattern.permute.xlu0 3
  %3592 = vperm.xlu0 %3591, %v3140
  %v3593 = vpop.permute.xlu0 %3592
  %v3595 = vmul.f32 %v3565, %v3389
  %v3596 = vmul.f32 %v3569, %v3392
  %v3597 = vmul.f32 %v3573, %v3397
  %v3598 = vmul.f32 %v3577, %v3400
  %v3599 = vmul.f32 %v3581, %v3405
  %v3600 = vmul.f32 %v3585, %v3408
  %v3601 = vmul.f32 %v3589, %v3413
  %v3602 = vmul.f32 %v3593, %v3416
  %3603 = vset.pattern.permute.xlu0 4
  %3604 = vperm.xlu0 %3603, %v3133
  %v3605 = vpop.permute.xlu0 %3604
  %3607 = vset.pattern.permute.xlu0 4
  %3608 = vperm.xlu0 %3607, %v3134
  %v3609 = vpop.permute.xlu0 %3608
  %3611 = vset.pattern.permute.xlu0 4
  %3612 = vperm.xlu0 %3611, %v3135
  %v3613 = vpop.permute.xlu0 %3612
  %3615 = vset.pattern.permute.xlu0 4
  %3616 = vperm.xlu0 %3615, %v3136
  %v3617 = vpop.permute.xlu0 %3616
  %3619 = vset.pattern.permute.xlu0 4
  %3620 = vperm.xlu0 %3619, %v3137
  %v3621 = vpop.permute.xlu0 %3620
  %3623 = vset.pattern.permute.xlu0 4
  %3624 = vperm.xlu0 %3623, %v3138
  %v3625 = vpop.permute.xlu0 %3624
  %3627 = vset.pattern.permute.xlu0 4
  %3628 = vperm.xlu0 %3627, %v3139
  %v3629 = vpop.permute.xlu0 %3628
  %3631 = vset.pattern.permute.xlu0 4
  %3632 = vperm.xlu0 %3631, %v3140
  %v3633 = vpop.permute.xlu0 %3632
  %v3635 = vmul.f32 %v3605, %v3389
  %v3636 = vmul.f32 %v3609, %v3392
  %v3637 = vmul.f32 %v3613, %v3397
  %v3638 = vmul.f32 %v3617, %v3400
  %v3639 = vmul.f32 %v3621, %v3405
  %v3640 = vmul.f32 %v3625, %v3408
  %v3641 = vmul.f32 %v3629, %v3413
  %v3642 = vmul.f32 %v3633, %v3416
  %3643 = vset.pattern.permute.xlu0 5
  %3644 = vperm.xlu0 %3643, %v3133
  %v3645 = vpop.permute.xlu0 %3644
  %3647 = vset.pattern.permute.xlu0 5
  %3648 = vperm.xlu0 %3647, %v3134
  %v3649 = vpop.permute.xlu0 %3648
  %3651 = vset.pattern.permute.xlu0 5
  %3652 = vperm.xlu0 %3651, %v3135
  %v3653 = vpop.permute.xlu0 %3652
  %3655 = vset.pattern.permute.xlu0 5
  %3656 = vperm.xlu0 %3655, %v3136
  %v3657 = vpop.permute.xlu0 %3656
  %3659 = vset.pattern.permute.xlu0 5
  %3660 = vperm.xlu0 %3659, %v3137
  %v3661 = vpop.permute.xlu0 %3660
  %3663 = vset.pattern.permute.xlu0 5
  %3664 = vperm.xlu0 %3663, %v3138
  %v3665 = vpop.permute.xlu0 %3664
  %3667 = vset.pattern.permute.xlu0 5
  %3668 = vperm.xlu0 %3667, %v3139
  %v3669 = vpop.permute.xlu0 %3668
  %3671 = vset.pattern.permute.xlu0 5
  %3672 = vperm.xlu0 %3671, %v3140
  %v3673 = vpop.permute.xlu0 %3672
  %v3675 = vmul.f32 %v3645, %v3389
  %v3676 = vmul.f32 %v3649, %v3392
  %v3677 = vmul.f32 %v3653, %v3397
  %v3678 = vmul.f32 %v3657, %v3400
  %v3679 = vmul.f32 %v3661, %v3405
  %v3680 = vmul.f32 %v3665, %v3408
  %v3681 = vmul.f32 %v3669, %v3413
  %v3682 = vmul.f32 %v3673, %v3416
  %3683 = vset.pattern.permute.xlu0 6
  %3684 = vperm.xlu0 %3683, %v3133
  %v3685 = vpop.permute.xlu0 %3684
  %3687 = vset.pattern.permute.xlu0 6
  %3688 = vperm.xlu0 %3687, %v3134
  %v3689 = vpop.permute.xlu0 %3688
  %3691 = vset.pattern.permute.xlu0 6
  %3692 = vperm.xlu0 %3691, %v3135
  %v3693 = vpop.permute.xlu0 %3692
  %3695 = vset.pattern.permute.xlu0 6
  %3696 = vperm.xlu0 %3695, %v3136
  %v3697 = vpop.permute.xlu0 %3696
  %3699 = vset.pattern.permute.xlu0 6
  %3700 = vperm.xlu0 %3699, %v3137
  %v3701 = vpop.permute.xlu0 %3700
  %3703 = vset.pattern.permute.xlu0 6
  %3704 = vperm.xlu0 %3703, %v3138
  %v3705 = vpop.permute.xlu0 %3704
  %3707 = vset.pattern.permute.xlu0 6
  %3708 = vperm.xlu0 %3707, %v3139
  %v3709 = vpop.permute.xlu0 %3708
  %3711 = vset.pattern.permute.xlu0 6
  %3712 = vperm.xlu0 %3711, %v3140
  %v3713 = vpop.permute.xlu0 %3712
  %v3715 = vmul.f32 %v3685, %v3389
  %v3716 = vmul.f32 %v3689, %v3392
  %v3717 = vmul.f32 %v3693, %v3397
  %v3718 = vmul.f32 %v3697, %v3400
  %v3719 = vmul.f32 %v3701, %v3405
  %v3720 = vmul.f32 %v3705, %v3408
  %v3721 = vmul.f32 %v3709, %v3413
  %v3722 = vmul.f32 %v3713, %v3416
  %3723 = vset.pattern.permute.xlu0 7
  %3724 = vperm.xlu0 %3723, %v3133
  %v3725 = vpop.permute.xlu0 %3724
  %3727 = vset.pattern.permute.xlu0 7
  %3728 = vperm.xlu0 %3727, %v3134
  %v3729 = vpop.permute.xlu0 %3728
  %3731 = vset.pattern.permute.xlu0 7
  %3732 = vperm.xlu0 %3731, %v3135
  %v3733 = vpop.permute.xlu0 %3732
  %3735 = vset.pattern.permute.xlu0 7
  %3736 = vperm.xlu0 %3735, %v3136
  %v3737 = vpop.permute.xlu0 %3736
  %3739 = vset.pattern.permute.xlu0 7
  %3740 = vperm.xlu0 %3739, %v3137
  %v3741 = vpop.permute.xlu0 %3740
  %3743 = vset.pattern.permute.xlu0 7
  %3744 = vperm.xlu0 %3743, %v3138
  %v3745 = vpop.permute.xlu0 %3744
  %3747 = vset.pattern.permute.xlu0 7
  %3748 = vperm.xlu0 %3747, %v3139
  %v3749 = vpop.permute.xlu0 %3748
  %3751 = vset.pattern.permute.xlu0 7
  %3752 = vperm.xlu0 %3751, %v3140
  %v3753 = vpop.permute.xlu0 %3752
  %v3755 = vmul.f32 %v3725, %v3389
  %v3756 = vmul.f32 %v3729, %v3392
  %v3757 = vmul.f32 %v3733, %v3397
  %v3758 = vmul.f32 %v3737, %v3400
  %v3759 = vmul.f32 %v3741, %v3405
  %v3760 = vmul.f32 %v3745, %v3408
  %v3761 = vmul.f32 %v3749, %v3413
  %v3762 = vmul.f32 %v3753, %v3416
  %3771 = vrot.lane.b32.xlu0 %v3515, 8
  %v3772 = vpop.permute.xlu0 %3771
  %3773 = vrot.lane.b32.xlu0 %v3516, 8
  %v3774 = vpop.permute.xlu0 %3773
  %3775 = vrot.lane.b32.xlu0 %v3517, 8
  %v3776 = vpop.permute.xlu0 %3775
  %3777 = vrot.lane.b32.xlu0 %v3518, 8
  %v3778 = vpop.permute.xlu0 %3777
  %3779 = vrot.lane.b32.xlu0 %v3519, 8
  %v3780 = vpop.permute.xlu0 %3779
  %3781 = vrot.lane.b32.xlu0 %v3520, 8
  %v3782 = vpop.permute.xlu0 %3781
  %3783 = vrot.lane.b32.xlu0 %v3521, 8
  %v3784 = vpop.permute.xlu0 %3783
  %3785 = vrot.lane.b32.xlu0 %v3522, 8
  %v3786 = vpop.permute.xlu0 %3785
  %3803 = vrot.lane.b32.xlu0 %v3555, 16
  %v3804 = vpop.permute.xlu0 %3803
  %3805 = vrot.lane.b32.xlu0 %v3556, 16
  %v3806 = vpop.permute.xlu0 %3805
  %3807 = vrot.lane.b32.xlu0 %v3557, 16
  %v3808 = vpop.permute.xlu0 %3807
  %3809 = vrot.lane.b32.xlu0 %v3558, 16
  %v3810 = vpop.permute.xlu0 %3809
  %3811 = vrot.lane.b32.xlu0 %v3559, 16
  %v3812 = vpop.permute.xlu0 %3811
  %3813 = vrot.lane.b32.xlu0 %v3560, 16
  %v3814 = vpop.permute.xlu0 %3813
  %3815 = vrot.lane.b32.xlu0 %v3561, 16
  %v3816 = vpop.permute.xlu0 %3815
  %3817 = vrot.lane.b32.xlu0 %v3562, 16
  %v3818 = vpop.permute.xlu0 %3817
  %3835 = vrot.lane.b32.xlu0 %v3595, 24
  %v3836 = vpop.permute.xlu0 %3835
  %3837 = vrot.lane.b32.xlu0 %v3596, 24
  %v3838 = vpop.permute.xlu0 %3837
  %3839 = vrot.lane.b32.xlu0 %v3597, 24
  %v3840 = vpop.permute.xlu0 %3839
  %3841 = vrot.lane.b32.xlu0 %v3598, 24
  %v3842 = vpop.permute.xlu0 %3841
  %3843 = vrot.lane.b32.xlu0 %v3599, 24
  %v3844 = vpop.permute.xlu0 %3843
  %3845 = vrot.lane.b32.xlu0 %v3600, 24
  %v3846 = vpop.permute.xlu0 %3845
  %3847 = vrot.lane.b32.xlu0 %v3601, 24
  %v3848 = vpop.permute.xlu0 %3847
  %3849 = vrot.lane.b32.xlu0 %v3602, 24
  %v3850 = vpop.permute.xlu0 %3849
  %3867 = vrot.lane.b32.xlu0 %v3635, 32
  %v3868 = vpop.permute.xlu0 %3867
  %3869 = vrot.lane.b32.xlu0 %v3636, 32
  %v3870 = vpop.permute.xlu0 %3869
  %3871 = vrot.lane.b32.xlu0 %v3637, 32
  %v3872 = vpop.permute.xlu0 %3871
  %3873 = vrot.lane.b32.xlu0 %v3638, 32
  %v3874 = vpop.permute.xlu0 %3873
  %3875 = vrot.lane.b32.xlu0 %v3639, 32
  %v3876 = vpop.permute.xlu0 %3875
  %3877 = vrot.lane.b32.xlu0 %v3640, 32
  %v3878 = vpop.permute.xlu0 %3877
  %3879 = vrot.lane.b32.xlu0 %v3641, 32
  %v3880 = vpop.permute.xlu0 %3879
  %3881 = vrot.lane.b32.xlu0 %v3642, 32
  %v3882 = vpop.permute.xlu0 %3881
  %3899 = vrot.lane.b32.xlu0 %v3675, 40
  %v3900 = vpop.permute.xlu0 %3899
  %3901 = vrot.lane.b32.xlu0 %v3676, 40
  %v3902 = vpop.permute.xlu0 %3901
  %3903 = vrot.lane.b32.xlu0 %v3677, 40
  %v3904 = vpop.permute.xlu0 %3903
  %3905 = vrot.lane.b32.xlu0 %v3678, 40
  %v3906 = vpop.permute.xlu0 %3905
  %3907 = vrot.lane.b32.xlu0 %v3679, 40
  %v3908 = vpop.permute.xlu0 %3907
  %3909 = vrot.lane.b32.xlu0 %v3680, 40
  %v3910 = vpop.permute.xlu0 %3909
  %3911 = vrot.lane.b32.xlu0 %v3681, 40
  %v3912 = vpop.permute.xlu0 %3911
  %3913 = vrot.lane.b32.xlu0 %v3682, 40
  %v3914 = vpop.permute.xlu0 %3913
  %3931 = vrot.lane.b32.xlu0 %v3715, 48
  %v3932 = vpop.permute.xlu0 %3931
  %3933 = vrot.lane.b32.xlu0 %v3716, 48
  %v3934 = vpop.permute.xlu0 %3933
  %3935 = vrot.lane.b32.xlu0 %v3717, 48
  %v3936 = vpop.permute.xlu0 %3935
  %3937 = vrot.lane.b32.xlu0 %v3718, 48
  %v3938 = vpop.permute.xlu0 %3937
  %3939 = vrot.lane.b32.xlu0 %v3719, 48
  %v3940 = vpop.permute.xlu0 %3939
  %3941 = vrot.lane.b32.xlu0 %v3720, 48
  %v3942 = vpop.permute.xlu0 %3941
  %3943 = vrot.lane.b32.xlu0 %v3721, 48
  %v3944 = vpop.permute.xlu0 %3943
  %3945 = vrot.lane.b32.xlu0 %v3722, 48
  %v3946 = vpop.permute.xlu0 %3945
  %3963 = vrot.lane.b32.xlu0 %v3755, 56
  %v3964 = vpop.permute.xlu0 %3963
  %3965 = vrot.lane.b32.xlu0 %v3756, 56
  %v3966 = vpop.permute.xlu0 %3965
  %3967 = vrot.lane.b32.xlu0 %v3757, 56
  %v3968 = vpop.permute.xlu0 %3967
  %3969 = vrot.lane.b32.xlu0 %v3758, 56
  %v3970 = vpop.permute.xlu0 %3969
  %3971 = vrot.lane.b32.xlu0 %v3759, 56
  %v3972 = vpop.permute.xlu0 %3971
  %3973 = vrot.lane.b32.xlu0 %v3760, 56
  %v3974 = vpop.permute.xlu0 %3973
  %3975 = vrot.lane.b32.xlu0 %v3761, 56
  %v3976 = vpop.permute.xlu0 %3975
  %3977 = vrot.lane.b32.xlu0 %v3762, 56
  %v3978 = vpop.permute.xlu0 %3977
  %v3987 = vsel %vm178, %v3475, %v3772
  %v3988 = vsel %vm178, %v3476, %v3774
  %v3989 = vsel %vm178, %v3477, %v3776
  %v3990 = vsel %vm178, %v3478, %v3778
  %v3991 = vsel %vm178, %v3479, %v3780
  %v3992 = vsel %vm178, %v3480, %v3782
  %v3993 = vsel %vm178, %v3481, %v3784
  %v3994 = vsel %vm178, %v3482, %v3786
  %v3995 = vsel %vm76, %v3987, %v3804
  %v3996 = vsel %vm76, %v3988, %v3806
  %v3997 = vsel %vm76, %v3989, %v3808
  %v3998 = vsel %vm76, %v3990, %v3810
  %v3999 = vsel %vm76, %v3991, %v3812
  %v4000 = vsel %vm76, %v3992, %v3814
  %v4001 = vsel %vm76, %v3993, %v3816
  %v4002 = vsel %vm76, %v3994, %v3818
  %v4003 = vsel %vm1141, %v3995, %v3836
  %v4004 = vsel %vm1141, %v3996, %v3838
  %v4005 = vsel %vm1141, %v3997, %v3840
  %v4006 = vsel %vm1141, %v3998, %v3842
  %v4007 = vsel %vm1141, %v3999, %v3844
  %v4008 = vsel %vm1141, %v4000, %v3846
  %v4009 = vsel %vm1141, %v4001, %v3848
  %v4010 = vsel %vm1141, %v4002, %v3850
  %v4011 = vsel %vm1150, %v4003, %v3868
  %v4012 = vsel %vm1150, %v4004, %v3870
  %v4013 = vsel %vm1150, %v4005, %v3872
  %v4014 = vsel %vm1150, %v4006, %v3874
  %v4015 = vsel %vm1150, %v4007, %v3876
  %v4016 = vsel %vm1150, %v4008, %v3878
  %v4017 = vsel %vm1150, %v4009, %v3880
  %v4018 = vsel %vm1150, %v4010, %v3882
  %v4019 = vsel %vm1159, %v4011, %v3900
  %v4020 = vsel %vm1159, %v4012, %v3902
  %v4021 = vsel %vm1159, %v4013, %v3904
  %v4022 = vsel %vm1159, %v4014, %v3906
  %v4023 = vsel %vm1159, %v4015, %v3908
  %v4024 = vsel %vm1159, %v4016, %v3910
  %v4025 = vsel %vm1159, %v4017, %v3912
  %v4026 = vsel %vm1159, %v4018, %v3914
  %v4027 = vsel %vm1168, %v4019, %v3932
  %v4028 = vsel %vm1168, %v4020, %v3934
  %v4029 = vsel %vm1168, %v4021, %v3936
  %v4030 = vsel %vm1168, %v4022, %v3938
  %v4031 = vsel %vm1168, %v4023, %v3940
  %v4032 = vsel %vm1168, %v4024, %v3942
  %v4033 = vsel %vm1168, %v4025, %v3944
  %v4034 = vsel %vm1168, %v4026, %v3946
  %v4035 = vsel %vm1177, %v4027, %v3964
  %v4036 = vsel %vm1177, %v4028, %v3966
  %v4037 = vsel %vm1177, %v4029, %v3968
  %v4038 = vsel %vm1177, %v4030, %v3970
  %v4039 = vsel %vm1177, %v4031, %v3972
  %v4040 = vsel %vm1177, %v4032, %v3974
  %v4041 = vsel %vm1177, %v4033, %v3976
  %v4042 = vsel %vm1177, %v4034, %v3978
  %v4043 = vpack.c.bf16 %v4036, %v4035
  %v4044 = vpack.c.bf16 %v4038, %v4037
  %v4045 = vpack.c.bf16 %v4040, %v4039
  %v4046 = vpack.c.bf16 %v4042, %v4041
  %v4055 = vunpack.c.l.b16 %v2954
  %v4056 = vunpack.c.l.b16 %v2955
  %v4057 = vunpack.c.l.b16 %v2956
  %v4058 = vunpack.c.l.b16 %v2957
  %v4059 = vunpack.c.l.b16 %v2958
  %v4060 = vunpack.c.l.b16 %v2959
  %v4061 = vunpack.c.l.b16 %v2960
  %v4062 = vunpack.c.l.b16 %v2961
  %v4063 = vpack.c.b16 %v4056, %v4055
  %v4064 = vpack.c.b16 %v4058, %v4057
  %v4065 = vpack.c.b16 %v4060, %v4059
  %v4066 = vpack.c.b16 %v4062, %v4061
  %v4072 = vsel %vm1214, %v4043, 0
  %v4075 = vsel %vm1214, %v4044, 0
  %v4078 = vsel %vm1214, %v4045, 0
  %v4081 = vsel %vm1214, %v4046, 0
  %4083 = vmatprep.subr.bf16.mxu0 0
  %4084 = vmatpush1.bf16.msra.mxu0 %v4063
  %4085 = vmatprep.subr.bf16.mxu0 0
  %4086 = vmatpush1.bf16.msra.mxu0 %v4064
  %4087 = vmatprep.subr.bf16.mxu0 0
  %4088 = vmatpush1.bf16.msra.mxu0 %v4065
  %4089 = vmatprep.subr.bf16.mxu0 0
  %4090 = vmatpush1.bf16.msra.mxu0 %v4066
  %4091 = vmatprep.subr.bf16.mxu0 0
  %4092 = vmatpush1.bf16.msra.mxu0 0
  %4093 = vmatprep.subr.bf16.mxu0 0
  %4094 = vmatpush1.bf16.msra.mxu0 0
  %4095 = vmatprep.subr.bf16.mxu0 0
  %4096 = vmatpush1.bf16.msra.mxu0 0
  %4097 = vmatprep.subr.bf16.mxu0 0
  %4098 = vmatpush1.bf16.msra.mxu0 0
  %4099 = vmatprep.subr.bf16.mxu0 0
  %4100 = vmatpush1.bf16.msra.mxu0 0
  %4101 = vmatprep.subr.bf16.mxu0 0
  %4102 = vmatpush1.bf16.msra.mxu0 0
  %4103 = vmatprep.subr.bf16.mxu0 0
  %4104 = vmatpush1.bf16.msra.mxu0 0
  %4105 = vmatprep.subr.bf16.mxu0 0
  %4106 = vmatpush1.bf16.msra.mxu0 0
  %4107 = vmatprep.subr.bf16.mxu0 0
  %4108 = vmatpush1.bf16.msra.mxu0 0
  %4109 = vmatprep.subr.bf16.mxu0 0
  %4110 = vmatpush1.bf16.msra.mxu0 0
  %4111 = vmatprep.subr.bf16.mxu0 0
  %4112 = vmatpush1.bf16.msra.mxu0 0
  %4113 = vmatprep.subr.bf16.mxu0 0
  %4114 = vmatpush1.bf16.msra.mxu0 0
  %4115 = vmatprep.mubr.bf16.mxu0 0
  %4116 = vmatmul.mubr.bf16.gmra.mrb[0].mxu0 %v4072
  %v4117 = vpop.f32.mrb[0].mxu0
  %v4118 = vadd.f32 0.0, %v4117
  %v4119 = vpop.f32.mrb[0].mxu0
  %v4120 = vpop.f32.mrb[0].mxu0
  %v4121 = vadd.f32 0.0, %v4120
  %v4122 = vpop.f32.mrb[0].mxu0
  %4123 = vmatprep.mubr.bf16.mxu0 0
  %4124 = vmatmul.mubr.bf16.gmra.mrb[0].mxu0 %v4075
  %v4125 = vpop.f32.mrb[0].mxu0
  %v4126 = vadd.f32 0.0, %v4125
  %v4127 = vpop.f32.mrb[0].mxu0
  %v4128 = vpop.f32.mrb[0].mxu0
  %v4129 = vadd.f32 0.0, %v4128
  %v4130 = vpop.f32.mrb[0].mxu0
  %4131 = vmatprep.mubr.bf16.mxu0 0
  %4132 = vmatmul.mubr.bf16.gmra.mrb[0].mxu0 %v4078
  %v4133 = vpop.f32.mrb[0].mxu0
  %v4134 = vadd.f32 0.0, %v4133
  %v4135 = vpop.f32.mrb[0].mxu0
  %v4136 = vpop.f32.mrb[0].mxu0
  %v4137 = vadd.f32 0.0, %v4136
  %v4138 = vpop.f32.mrb[0].mxu0
  %4139 = vmatprep.mubr.bf16.mxu0 0
  %4140 = vmatmul.mubr.bf16.gmra.mrb[0].mxu0 %v4081
  %v4141 = vpop.f32.mrb[0].mxu0
  %v4142 = vadd.f32 0.0, %v4141
  %v4143 = vpop.f32.mrb[0].mxu0
  %v4144 = vpop.f32.mrb[0].mxu0
  %v4145 = vadd.f32 0.0, %v4144
  %v4146 = vpop.f32.mrb[0].mxu0
  %4147 = vdwg.mxu0
  %4156 = vrot.lane.b32.xlu0 %v3427, 8
  %v4157 = vpop.permute.xlu0 %4156
  %4158 = vrot.lane.b32.xlu0 %v3428, 8
  %v4159 = vpop.permute.xlu0 %4158
  %4160 = vrot.lane.b32.xlu0 %v3429, 8
  %v4161 = vpop.permute.xlu0 %4160
  %4162 = vrot.lane.b32.xlu0 %v3430, 8
  %v4163 = vpop.permute.xlu0 %4162
  %4164 = vrot.lane.b32.xlu0 %v3431, 8
  %v4165 = vpop.permute.xlu0 %4164
  %4166 = vrot.lane.b32.xlu0 %v3432, 8
  %v4167 = vpop.permute.xlu0 %4166
  %4168 = vrot.lane.b32.xlu0 %v3433, 8
  %v4169 = vpop.permute.xlu0 %4168
  %4170 = vrot.lane.b32.xlu0 %v3434, 8
  %v4171 = vpop.permute.xlu0 %4170
  %v4180 = vsel %vm76, %v4118, %v4157
  %v4181 = vsel %vm76, %v4121, %v4159
  %v4182 = vsel %vm76, %v4126, %v4161
  %v4183 = vsel %vm76, %v4129, %v4163
  %v4184 = vsel %vm76, %v4134, %v4165
  %v4185 = vsel %vm76, %v4137, %v4167
  %v4186 = vsel %vm76, %v4142, %v4169
  %v4187 = vsel %vm76, %v4145, %v4171
  %v4188 = vadd.f32 %v4180, %v2829
  %v4189 = vadd.f32 %v4181, %v2830
  %v4190 = vadd.f32 %v4182, %v2831
  %v4191 = vadd.f32 %v4183, %v2832
  %v4192 = vadd.f32 %v4184, %v2833
  %v4193 = vadd.f32 %v4185, %v2834
  %v4194 = vadd.f32 %v4186, %v2835
  %v4195 = vadd.f32 %v4187, %v2836
  %v4196 = vpack.c.bf16 %v4189, %v4188
  %v4197 = vpack.c.bf16 %v4191, %v4190
  %v4198 = vpack.c.bf16 %v4193, %v4192
  %v4199 = vpack.c.bf16 %v4195, %v4194
  %v4204 = vunpack.c.l.b16 %v2962
  %v4205 = vunpack.c.l.b16 %v2963
  %v4206 = vunpack.c.l.b16 %v2964
  %v4207 = vunpack.c.l.b16 %v2965
  %v4208 = vpack.c.b16 %v4205, %v4204
  %v4209 = vpack.c.b16 %v4207, %v4206
  %v4213 = vsel %vm1150, %v4196, 0
  %v4216 = vsel %vm1150, %v4197, 0
  %v4219 = vsel %vm1150, %v4198, 0
  %v4222 = vsel %vm1150, %v4199, 0
  %4224 = vmatprep.subr.bf16.mxu0 0
  %4225 = vmatpush1.bf16.msra.mxu0 %v4208
  %4226 = vmatprep.subr.bf16.mxu0 0
  %4227 = vmatpush1.bf16.msra.mxu0 %v4209
  %4228 = vmatprep.subr.bf16.mxu0 0
  %4229 = vmatpush1.bf16.msra.mxu0 0
  %4230 = vmatprep.subr.bf16.mxu0 0
  %4231 = vmatpush1.bf16.msra.mxu0 0
  %4232 = vmatprep.subr.bf16.mxu0 0
  %4233 = vmatpush1.bf16.msra.mxu0 0
  %4234 = vmatprep.subr.bf16.mxu0 0
  %4235 = vmatpush1.bf16.msra.mxu0 0
  %4236 = vmatprep.subr.bf16.mxu0 0
  %4237 = vmatpush1.bf16.msra.mxu0 0
  %4238 = vmatprep.subr.bf16.mxu0 0
  %4239 = vmatpush1.bf16.msra.mxu0 0
  %4240 = vmatprep.subr.bf16.mxu0 0
  %4241 = vmatpush1.bf16.msra.mxu0 0
  %4242 = vmatprep.subr.bf16.mxu0 0
  %4243 = vmatpush1.bf16.msra.mxu0 0
  %4244 = vmatprep.subr.bf16.mxu0 0
  %4245 = vmatpush1.bf16.msra.mxu0 0
  %4246 = vmatprep.subr.bf16.mxu0 0
  %4247 = vmatpush1.bf16.msra.mxu0 0
  %4248 = vmatprep.subr.bf16.mxu0 0
  %4249 = vmatpush1.bf16.msra.mxu0 0
  %4250 = vmatprep.subr.bf16.mxu0 0
  %4251 = vmatpush1.bf16.msra.mxu0 0
  %4252 = vmatprep.subr.bf16.mxu0 0
  %4253 = vmatpush1.bf16.msra.mxu0 0
  %4254 = vmatprep.subr.bf16.mxu0 0
  %4255 = vmatpush1.bf16.msra.mxu0 0
  %4256 = vmatprep.mubr.bf16.mxu0 0
  %4257 = vmatmul.mubr.bf16.gmra.mrb[0].mxu0 %v4213
  %v4258 = vpop.f32.mrb[0].mxu0
  %v4259 = vadd.f32 0.0, %v4258
  %v4260 = vpop.f32.mrb[0].mxu0
  %v4261 = vpop.f32.mrb[0].mxu0
  %v4262 = vadd.f32 0.0, %v4261
  %v4263 = vpop.f32.mrb[0].mxu0
  %4264 = vmatprep.mubr.bf16.mxu0 0
  %4265 = vmatmul.mubr.bf16.gmra.mrb[0].mxu0 %v4216
  %v4266 = vpop.f32.mrb[0].mxu0
  %v4267 = vadd.f32 0.0, %v4266
  %v4268 = vpop.f32.mrb[0].mxu0
  %v4269 = vpop.f32.mrb[0].mxu0
  %v4270 = vadd.f32 0.0, %v4269
  %v4271 = vpop.f32.mrb[0].mxu0
  %4272 = vmatprep.mubr.bf16.mxu0 0
  %4273 = vmatmul.mubr.bf16.gmra.mrb[0].mxu0 %v4219
  %v4274 = vpop.f32.mrb[0].mxu0
  %v4275 = vadd.f32 0.0, %v4274
  %v4276 = vpop.f32.mrb[0].mxu0
  %v4277 = vpop.f32.mrb[0].mxu0
  %v4278 = vadd.f32 0.0, %v4277
  %v4279 = vpop.f32.mrb[0].mxu0
  %4280 = vmatprep.mubr.bf16.mxu0 0
  %4281 = vmatmul.mubr.bf16.gmra.mrb[0].mxu0 %v4222
  %v4282 = vpop.f32.mrb[0].mxu0
  %v4283 = vadd.f32 0.0, %v4282
  %v4284 = vpop.f32.mrb[0].mxu0
  %v4285 = vpop.f32.mrb[0].mxu0
  %v4286 = vadd.f32 0.0, %v4285
  %v4287 = vpop.f32.mrb[0].mxu0
  %4288 = vdwg.mxu0
  %v4289 = vadd.f32 %v2941, %v4259
  %v4290 = vadd.f32 %v2942, %v4262
  %v4291 = vadd.f32 %v2943, %v4267
  %v4292 = vadd.f32 %v2944, %v4270
  %v4293 = vadd.f32 %v2945, %v4275
  %v4294 = vadd.f32 %v2946, %v4278
  %v4295 = vadd.f32 %v2947, %v4283
  %v4296 = vadd.f32 %v2948, %v4286
  %4297 = vrot.lane.b32.xlu0 %v3422, 112
  %v4298 = vpop.permute.xlu0 %4297
  %v4300 = vadd.f32 %v4289, %v4298
  %v4301 = vadd.f32 %v4290, %v4298
  %v4302 = vadd.f32 %v4291, %v4298
  %v4303 = vadd.f32 %v4292, %v4298
  %v4304 = vadd.f32 %v4293, %v4298
  %v4305 = vadd.f32 %v4294, %v4298
  %v4306 = vadd.f32 %v4295, %v4298
  %v4307 = vadd.f32 %v4296, %v4298
  %v4308 = vsel %vm178, %v4300, -inf
  %4309 = vmax.xlane.f32.xlu0 %v4308
  %v4310 = vpop.xlane.xlu0 %4309
  %v4311 = vsel %vm178, %v4301, -inf
  %4312 = vmax.xlane.f32.xlu0 %v4311
  %v4313 = vpop.xlane.xlu0 %4312
  %v4314 = vsel %vm178, %v4302, -inf
  %4315 = vmax.xlane.f32.xlu0 %v4314
  %v4316 = vpop.xlane.xlu0 %4315
  %v4317 = vsel %vm178, %v4303, -inf
  %4318 = vmax.xlane.f32.xlu0 %v4317
  %v4319 = vpop.xlane.xlu0 %4318
  %v4320 = vsel %vm178, %v4304, -inf
  %4321 = vmax.xlane.f32.xlu0 %v4320
  %v4322 = vpop.xlane.xlu0 %4321
  %v4323 = vsel %vm178, %v4305, -inf
  %4324 = vmax.xlane.f32.xlu0 %v4323
  %v4325 = vpop.xlane.xlu0 %4324
  %v4326 = vsel %vm178, %v4306, -inf
  %4327 = vmax.xlane.f32.xlu0 %v4326
  %v4328 = vpop.xlane.xlu0 %4327
  %v4329 = vsel %vm178, %v4307, -inf
  %4330 = vmax.xlane.f32.xlu0 %v4329
  %v4331 = vpop.xlane.xlu0 %4330
  %v4332 = vsub.f32 %v4300, %v4310
  %v4333 = vsub.f32 %v4301, %v4313
  %v4334 = vsub.f32 %v4302, %v4316
  %v4335 = vsub.f32 %v4303, %v4319
  %v4336 = vsub.f32 %v4304, %v4322
  %v4337 = vsub.f32 %v4305, %v4325
  %v4338 = vsub.f32 %v4306, %v4328
  %v4339 = vsub.f32 %v4307, %v4331
  %v4340 = vmul.f32 %v4332, 1.442695
  %v4341 = vpow.pop %v4340
  %v4342 = vmul.f32 %v4333, 1.442695
  %v4343 = vpow.pop %v4342
  %v4344 = vmul.f32 %v4334, 1.442695
  %v4345 = vpow.pop %v4344
  %v4346 = vmul.f32 %v4335, 1.442695
  %v4347 = vpow.pop %v4346
  %v4348 = vmul.f32 %v4336, 1.442695
  %v4349 = vpow.pop %v4348
  %v4350 = vmul.f32 %v4337, 1.442695
  %v4351 = vpow.pop %v4350
  %v4352 = vmul.f32 %v4338, 1.442695
  %v4353 = vpow.pop %v4352
  %v4354 = vmul.f32 %v4339, 1.442695
  %v4355 = vpow.pop %v4354
  %v4356 = vsel %vm178, %v4341, 0.0
  %4357 = vadd.xlane.f32.xlu0 %v4356
  %v4358 = vpop.xlane.xlu0 %4357
  %v4359 = vsel %vm178, %v4343, 0.0
  %4360 = vadd.xlane.f32.xlu0 %v4359
  %v4361 = vpop.xlane.xlu0 %4360
  %v4362 = vsel %vm178, %v4345, 0.0
  %4363 = vadd.xlane.f32.xlu0 %v4362
  %v4364 = vpop.xlane.xlu0 %4363
  %v4365 = vsel %vm178, %v4347, 0.0
  %4366 = vadd.xlane.f32.xlu0 %v4365
  %v4367 = vpop.xlane.xlu0 %4366
  %v4368 = vsel %vm178, %v4349, 0.0
  %4369 = vadd.xlane.f32.xlu0 %v4368
  %v4370 = vpop.xlane.xlu0 %4369
  %v4371 = vsel %vm178, %v4351, 0.0
  %4372 = vadd.xlane.f32.xlu0 %v4371
  %v4373 = vpop.xlane.xlu0 %4372
  %v4374 = vsel %vm178, %v4353, 0.0
  %4375 = vadd.xlane.f32.xlu0 %v4374
  %v4376 = vpop.xlane.xlu0 %4375
  %v4377 = vsel %vm178, %v4355, 0.0
  %4378 = vadd.xlane.f32.xlu0 %v4377
  %v4379 = vpop.xlane.xlu0 %4378
  %v4380 = vlog2.pop %v4358
  %v4381 = vmul.f32 %v4380, 0.6931472
  %v4382 = vlog2.pop %v4361
  %v4383 = vmul.f32 %v4382, 0.6931472
  %v4384 = vlog2.pop %v4364
  %v4385 = vmul.f32 %v4384, 0.6931472
  %v4386 = vlog2.pop %v4367
  %v4387 = vmul.f32 %v4386, 0.6931472
  %v4388 = vlog2.pop %v4370
  %v4389 = vmul.f32 %v4388, 0.6931472
  %v4390 = vlog2.pop %v4373
  %v4391 = vmul.f32 %v4390, 0.6931472
  %v4392 = vlog2.pop %v4376
  %v4393 = vmul.f32 %v4392, 0.6931472
  %v4394 = vlog2.pop %v4379
  %v4395 = vmul.f32 %v4394, 0.6931472
  %v4396 = vsub.f32 %v4332, %v4381
  %v4397 = vsub.f32 %v4333, %v4383
  %v4398 = vsub.f32 %v4334, %v4385
  %v4399 = vsub.f32 %v4335, %v4387
  %v4400 = vsub.f32 %v4336, %v4389
  %v4401 = vsub.f32 %v4337, %v4391
  %v4402 = vsub.f32 %v4338, %v4393
  %v4403 = vsub.f32 %v4339, %v4395
  %4404 = vst.msk [vmem:[%s4] sm:$0xff] %vm178, %v4396
  %4405 = vst.msk [vmem:[%s4 + $0x8] sm:$0xff] %vm178, %v4397
  %4406 = vst.msk [vmem:[%s4 + $0x10] sm:$0xff] %vm178, %v4398
  %4407 = vst.msk [vmem:[%s4 + $0x18] sm:$0xff] %vm178, %v4399
  %4408 = vst.msk [vmem:[%s4 + $0x20] sm:$0xff] %vm178, %v4400
  %4409 = vst.msk [vmem:[%s4 + $0x28] sm:$0xff] %vm178, %v4401
  %4410 = vst.msk [vmem:[%s4 + $0x30] sm:$0xff] %vm178, %v4402
  %4411 = vst.msk [vmem:[%s4 + $0x38] sm:$0xff] %vm178, %v4403
  // Predicated region
  $region18: #{foggnn_forward.1} parent=0 // pred_check
    _
  $region19: #{foggnn_forward.1} parent=0 // pred_check_branch
    %4413 = sbr.rel (0) target = $region21
  $region20: #{foggnn_forward.1} parent=0 // pred_region
    _
  $region21: #{foggnn_forward.1} parent=0 // pred_fallthru
    _
  // Predicated region
  $region22: #{foggnn_forward.1} parent=0 // pred_check
    _
  $region23: #{foggnn_forward.1} parent=0 // pred_check_branch
    %4415 = sbr.rel (0) target = $region25
  $region24: #{foggnn_forward.1} parent=0 // pred_region
    _
  $region25: #{foggnn_forward.1} parent=0 // pred_fallthru
    _

</llo_original>
